<compile_context>
chip_gen: v7x
topology: tpu7x:2x2x1
jax: 0.10.0
libtpu: 0.0.40
codegen_flags: <defaults>
</compile_context>

<pallas_src>
import jax
import jax.numpy as jnp
from jax.experimental import pallas as pl
from jax.experimental.pallas import tpu as pltpu


CONV_OUT = 8                 # conv1 output channels (module hard-codes 288 = 8*6*6)
IMG = 32                     # spatial size implied by 288 = 8*6*6
CONV_ROWS = IMG - 2          # 30 valid conv rows/cols
LANES = IMG * CONV_OUT       # 256 lanes: lane = conv_col*8 + out_channel
POOL = 5
POOLED = CONV_ROWS // POOL   # 6 pooled rows/cols
KPAD = POOLED * 64           # 384 = 3*128, lane-aligned fc1 contraction dim
HID_PAD = 1024               # fc1 hidden 1000 -> 1024


# ----------------------------------------------------------------------------
# Fused kernel: conv3x3(VALID) + ReLU + MaxPool(5,5) + fc1 + ReLU + fc2
# ----------------------------------------------------------------------------
def fused_cnn_kernel(xrep_ref, wtap_ref, bias_ref, w1_ref, b1_ref, w2_ref, b2_ref,
                     o_ref, conv_ref):
    # xrep_ref: (B, C, 32, 256) f32   lane = input_col*8 + k (columns replicated x8)
    # wtap_ref: (rows_pad, 256) f32   row t=(ci*3+di)*3+dj, lane c*8+co = conv_w[co,ci,di,dj]
    # bias_ref: (1, 256) f32          lane c*8+co = conv_b[co]
    # w1_ref:   (384, 1024) f32       rows in kernel feature order (band, pooled_col, co)
    # b1_ref:   (1, 1024) f32
    # w2_ref:   (1024, NCpad) f32
    # b2_ref:   (1, NCpad) f32
    # o_ref:    (Bpad, NCpad) f32
    # conv_ref: (B, 30, 256) f32 VMEM scratch for the ReLU'd conv output
    B, C, _, _ = xrep_ref.shape
    Bpad = o_ref.shape[0]

    # ---- 3x3 VALID conv, lane-dense: all 30 output rows & all 8 channels at once ----
    acc = jnp.zeros((B, CONV_ROWS, LANES), jnp.float32)
    for ci in range(C):
        for di in range(3):
            base = xrep_ref[:, ci, di:di + CONV_ROWS, :]              # (B, 30, 256)
            for dj in range(3):
                # lane L = c*8+co must read input col c+dj -> roll lanes left by 8*dj
                patch = base if dj == 0 else pltpu.roll(
                    base, shift=LANES - 8 * dj, axis=2)
                t = (ci * 3 + di) * 3 + dj
                acc = acc + patch * wtap_ref[t:t + 1, :]
    conv_ref[...] = jnp.maximum(acc + bias_ref[...], 0.0)             # bias + ReLU

    # ---- 5x5 / stride-5 max pool ----
    band_rows = []
    for i in range(POOLED):                                           # max over 5 conv rows
        rm = conv_ref[:, POOL * i, :]
        for r in range(1, POOL):
            rm = jnp.maximum(rm, conv_ref[:, POOL * i + r, :])
        band_rows.append(rm)
    p = jnp.stack(band_rows, axis=1)                                  # (B, 6, 256)
    q = p
    for k in range(1, POOL):                                          # max over 5 conv cols
        q = jnp.maximum(q, pltpu.roll(p, shift=LANES - 8 * k, axis=2))
    # pooled value for (band i, pooled col j, channel co) is at q[:, i, 40*j + co]
    f2 = jnp.concatenate(
        [q[:, :, 40 * j:40 * j + 8] for j in range(POOLED)]
        + [jnp.zeros((B, POOLED, 16), jnp.float32)], axis=-1)         # (B, 6, 64)
    feat = jnp.concatenate([f2[:, i, :] for i in range(POOLED)], axis=-1)  # (B, 384)
    if Bpad > B:
        feat = jnp.concatenate(
            [feat, jnp.zeros((Bpad - B, KPAD), jnp.float32)], axis=0)      # (Bpad, 384)

    # ---- fc1 + ReLU + fc2 on the MXU (f32, K padded to 384 = 3*128) ----
    h = jnp.dot(feat, w1_ref[...], preferred_element_type=jnp.float32) + b1_ref[...]
    h = jnp.maximum(h, 0.0)
    out = jnp.dot(h, w2_ref[...], preferred_element_type=jnp.float32) + b2_ref[...]
    o_ref[...] = out.astype(o_ref.dtype)


# ----------------------------------------------------------------------------
# Host-side parameter preparation (done once)
# ----------------------------------------------------------------------------
def prepare_params(conv_w, conv_b, w1, b1, w2, b2):
    # conv_w: (8, C, 3, 3); conv_b: (8,)
    # w1: (288, 1000), b1: (1000,)    (x @ W + b, i.e. torch weight transposed)
    # w2: (1000, num_classes), b2: (num_classes,)
    co_n, C, _, _ = conv_w.shape
    assert co_n == CONV_OUT
    num_classes = w2.shape[1]
    nc_pad = max(128, ((num_classes + 127) // 128) * 128)

    # conv taps -> (rows_pad, 256): row t = (ci*3+di)*3+dj, lane c*8+co = w[co,ci,di,dj]
    w_t = jnp.transpose(conv_w, (1, 2, 3, 0)).reshape(C * 9, CONV_OUT)   # (C*9, 8)
    wtap = jnp.tile(w_t, (1, IMG)).astype(jnp.float32)                   # (C*9, 256)
    rows_pad = ((C * 9 + 7) // 8) * 8
    if rows_pad > C * 9:
        wtap = jnp.concatenate(
            [wtap, jnp.zeros((rows_pad - C * 9, LANES), jnp.float32)], axis=0)
    bias = jnp.tile(conv_b, (IMG,)).reshape(1, LANES).astype(jnp.float32)

    # fc1 rows reordered to kernel feature order p = band*64 + pooled_col*8 + co
    # (kernel feature (i, j, co) <-> torch .view(-1, 288) index co*36 + i*6 + j),
    # K padded 288 -> 384, hidden padded 1000 -> 1024.
    pidx = jnp.arange(KPAD)
    band = pidx // 64
    m = pidx % 64
    jcol = m // 8
    co = m % 8
    valid = jcol < POOLED
    q = co * 36 + band * 6 + jcol
    w1_rows = jnp.where(valid[:, None], w1[jnp.where(valid, q, 0), :], 0.0)  # (384, 1000)
    w1p = jnp.zeros((KPAD, HID_PAD), jnp.float32).at[:, :w1.shape[1]].set(w1_rows)
    b1p = jnp.zeros((1, HID_PAD), jnp.float32).at[:, :b1.shape[0]].set(b1.reshape(1, -1))
    w2p = jnp.zeros((HID_PAD, nc_pad), jnp.float32).at[:w2.shape[0], :num_classes].set(w2)
    b2p = jnp.zeros((1, nc_pad), jnp.float32).at[:, :num_classes].set(b2.reshape(1, -1))

    return (wtap, bias, w1p, b1p, w2p, b2p, num_classes)


# ----------------------------------------------------------------------------
# Forward pass
# ----------------------------------------------------------------------------
def model_forward(x, prepared):
    wtap, bias, w1p, b1p, w2p, b2p, num_classes = prepared
    B, C, H, W = x.shape
    assert H == IMG and W == IMG, "module hard-codes 288 = 8*6*6, so the input must be 32x32"
    assert B <= 8, "single-shot kernel; add a 'parallel' batch grid for larger batches"
    b_pad = 8
    nc_pad = w2p.shape[1]

    # Layout plumbing only: replicate each input column 8x so the kernel's conv
    # accumulator is lane-dense (lane = conv_col*8 + out_channel).
    xrep = jnp.repeat(x.astype(jnp.float32), CONV_OUT, axis=3)          # (B, C, 32, 256)

    flops = (B * CONV_ROWS * CONV_ROWS * CONV_OUT * C * 9 * 2
             + b_pad * KPAD * HID_PAD * 2 + b_pad * HID_PAD * nc_pad * 2)
    bytes_accessed = 4 * (xrep.size + wtap.size + bias.size + w1p.size + b1p.size
                          + w2p.size + b2p.size + b_pad * nc_pad)

    out = pl.pallas_call(
        fused_cnn_kernel,
        out_shape=jax.ShapeDtypeStruct((b_pad, nc_pad), jnp.float32),
        in_specs=[pl.BlockSpec(memory_space=pltpu.MemorySpace.VMEM)] * 7,
        out_specs=pl.BlockSpec(memory_space=pltpu.MemorySpace.VMEM),
        scratch_shapes=[pltpu.VMEM((B, CONV_ROWS, LANES), jnp.float32)],
        cost_estimate=pl.CostEstimate(flops=flops, transcendentals=0,
                                      bytes_accessed=bytes_accessed),
    )(xrep, wtap, bias, w1p, b1p, w2p, b2p)

    return out[:B, :num_classes]


# Pure-JAX f32 reference for correctness checking.
def reference_forward(x, params):
    conv_w, conv_b, w1, b1, w2, b2 = params
    y = jax.lax.conv_general_dilated(
        x, conv_w, window_strides=(1, 1), padding="VALID",
        dimension_numbers=("NCHW", "OIHW", "NCHW"))
    y = jnp.maximum(y + conv_b[None, :, None, None], 0.0)
    y = jax.lax.reduce_window(y, -jnp.inf, jax.lax.max,
                              (1, 1, POOL, POOL), (1, 1, POOL, POOL), "VALID")
    y = y.reshape(y.shape[0], 288)
    y = jnp.maximum(y @ w1 + b1, 0.0)
    return y @ w2 + b2


if __name__ == "__main__":
    B, C, H, W = 2, 3, 32, 32
    num_classes = 10

    key = jax.random.PRNGKey(0)
    ks = jax.random.split(key, 7)
    x = jax.random.normal(ks[0], (B, C, H, W), jnp.float32)

    # Deterministic synthetic parameters (shapes follow the module's __init__;
    # fc weights stored (in_features, out_features), i.e. torch weight transposed).
    conv_w = jax.random.normal(ks[1], (8, C, 3, 3), jnp.float32) * 0.1
    conv_b = jax.random.normal(ks[2], (8,), jnp.float32) * 0.1
    w1 = jax.random.normal(ks[3], (288, 1000), jnp.float32) * 0.05
    b1 = jax.random.normal(ks[4], (1000,), jnp.float32) * 0.05
    w2 = jax.random.normal(ks[5], (1000, num_classes), jnp.float32) * 0.05
    b2 = jax.random.normal(ks[6], (num_classes,), jnp.float32) * 0.05

    params = (conv_w, conv_b, w1, b1, w2, b2)
    prepared = prepare_params(*params)

    out = jax.block_until_ready(model_forward(x, prepared))
    assert out.shape == (B, num_classes), out.shape

    ref = jax.block_until_ready(reference_forward(x, params))
    assert jnp.allclose(out, ref, rtol=2e-2, atol=2e-2), (
        float(jnp.max(jnp.abs(out - ref))))

    print("KERNEL_OK")
</pallas_src>

<mosaic_0001>
module attributes {stable_mosaic.version = 11 : i64} {
  func.func @fused_cnn_kernel(%arg0: memref<2x3x32x256xf32, #tpu.memory_space<vmem>>, %arg1: memref<32x256xf32, #tpu.memory_space<vmem>>, %arg2: memref<1x256xf32, #tpu.memory_space<vmem>>, %arg3: memref<384x1024xf32, #tpu.memory_space<vmem>>, %arg4: memref<1x1024xf32, #tpu.memory_space<vmem>>, %arg5: memref<1024x128xf32, #tpu.memory_space<vmem>>, %arg6: memref<1x128xf32, #tpu.memory_space<vmem>>, %arg7: memref<8x128xf32, #tpu.memory_space<vmem>>, %arg8: memref<2x30x256xf32, #tpu.memory_space<vmem>>) attributes {dimension_semantics = [], scalar_prefetch = 0 : i64, scratch_operands = 1 : i64, tpu.core_type = #tpu.core_type<tc>} {
    %cst = arith.constant 0.000000e+00 : f32
    %0 = vector.broadcast %cst : f32 to vector<2x30x256xf32>
    %c0 = arith.constant 0 : index
    %c0_0 = arith.constant 0 : index
    %c0_1 = arith.constant 0 : index
    %c0_2 = arith.constant 0 : index
    %1 = vector.load %arg0[%c0, %c0_0, %c0_1, %c0_2] : memref<2x3x32x256xf32, #tpu.memory_space<vmem>>, vector<2x1x30x256xf32>
    %2 = vector.shape_cast %1 : vector<2x1x30x256xf32> to vector<2x30x256xf32>
    %c0_3 = arith.constant 0 : index
    %c0_4 = arith.constant 0 : index
    %3 = vector.load %arg1[%c0_3, %c0_4] : memref<32x256xf32, #tpu.memory_space<vmem>>, vector<1x256xf32>
    %4 = vector.shape_cast %3 : vector<1x256xf32> to vector<1x1x256xf32>
    %5 = vector.broadcast %4 : vector<1x1x256xf32> to vector<2x30x256xf32>
    %6 = arith.mulf %2, %5 : vector<2x30x256xf32>
    %7 = arith.addf %0, %6 : vector<2x30x256xf32>
    %c248_i32 = arith.constant 248 : i32
    %8 = tpu.dynamic_rotate %2 by %c248_i32 dim 2 : vector<2x30x256xf32>, i32 -> vector<2x30x256xf32>
    %c1 = arith.constant 1 : index
    %c0_5 = arith.constant 0 : index
    %9 = vector.load %arg1[%c1, %c0_5] : memref<32x256xf32, #tpu.memory_space<vmem>>, vector<1x256xf32>
    %10 = vector.shape_cast %9 : vector<1x256xf32> to vector<1x1x256xf32>
    %11 = vector.broadcast %10 : vector<1x1x256xf32> to vector<2x30x256xf32>
    %12 = arith.mulf %8, %11 : vector<2x30x256xf32>
    %13 = arith.addf %7, %12 : vector<2x30x256xf32>
    %c240_i32 = arith.constant 240 : i32
    %14 = tpu.dynamic_rotate %2 by %c240_i32 dim 2 : vector<2x30x256xf32>, i32 -> vector<2x30x256xf32>
    %c2 = arith.constant 2 : index
    %c0_6 = arith.constant 0 : index
    %15 = vector.load %arg1[%c2, %c0_6] : memref<32x256xf32, #tpu.memory_space<vmem>>, vector<1x256xf32>
    %16 = vector.shape_cast %15 : vector<1x256xf32> to vector<1x1x256xf32>
    %17 = vector.broadcast %16 : vector<1x1x256xf32> to vector<2x30x256xf32>
    %18 = arith.mulf %14, %17 : vector<2x30x256xf32>
    %19 = arith.addf %13, %18 : vector<2x30x256xf32>
    %c0_7 = arith.constant 0 : index
    %c0_8 = arith.constant 0 : index
    %c1_9 = arith.constant 1 : index
    %c0_10 = arith.constant 0 : index
    %20 = vector.load %arg0[%c0_7, %c0_8, %c1_9, %c0_10] : memref<2x3x32x256xf32, #tpu.memory_space<vmem>>, vector<2x1x30x256xf32>
    %21 = vector.shape_cast %20 : vector<2x1x30x256xf32> to vector<2x30x256xf32>
    %c3 = arith.constant 3 : index
    %c0_11 = arith.constant 0 : index
    %22 = vector.load %arg1[%c3, %c0_11] : memref<32x256xf32, #tpu.memory_space<vmem>>, vector<1x256xf32>
    %23 = vector.shape_cast %22 : vector<1x256xf32> to vector<1x1x256xf32>
    %24 = vector.broadcast %23 : vector<1x1x256xf32> to vector<2x30x256xf32>
    %25 = arith.mulf %21, %24 : vector<2x30x256xf32>
    %26 = arith.addf %19, %25 : vector<2x30x256xf32>
    %c248_i32_12 = arith.constant 248 : i32
    %27 = tpu.dynamic_rotate %21 by %c248_i32_12 dim 2 : vector<2x30x256xf32>, i32 -> vector<2x30x256xf32>
    %c4 = arith.constant 4 : index
    %c0_13 = arith.constant 0 : index
    %28 = vector.load %arg1[%c4, %c0_13] : memref<32x256xf32, #tpu.memory_space<vmem>>, vector<1x256xf32>
    %29 = vector.shape_cast %28 : vector<1x256xf32> to vector<1x1x256xf32>
    %30 = vector.broadcast %29 : vector<1x1x256xf32> to vector<2x30x256xf32>
    %31 = arith.mulf %27, %30 : vector<2x30x256xf32>
    %32 = arith.addf %26, %31 : vector<2x30x256xf32>
    %c240_i32_14 = arith.constant 240 : i32
    %33 = tpu.dynamic_rotate %21 by %c240_i32_14 dim 2 : vector<2x30x256xf32>, i32 -> vector<2x30x256xf32>
    %c5 = arith.constant 5 : index
    %c0_15 = arith.constant 0 : index
    %34 = vector.load %arg1[%c5, %c0_15] : memref<32x256xf32, #tpu.memory_space<vmem>>, vector<1x256xf32>
    %35 = vector.shape_cast %34 : vector<1x256xf32> to vector<1x1x256xf32>
    %36 = vector.broadcast %35 : vector<1x1x256xf32> to vector<2x30x256xf32>
    %37 = arith.mulf %33, %36 : vector<2x30x256xf32>
    %38 = arith.addf %32, %37 : vector<2x30x256xf32>
    %c0_16 = arith.constant 0 : index
    %c0_17 = arith.constant 0 : index
    %c2_18 = arith.constant 2 : index
    %c0_19 = arith.constant 0 : index
    %39 = vector.load %arg0[%c0_16, %c0_17, %c2_18, %c0_19] : memref<2x3x32x256xf32, #tpu.memory_space<vmem>>, vector<2x1x30x256xf32>
    %40 = vector.shape_cast %39 : vector<2x1x30x256xf32> to vector<2x30x256xf32>
    %c6 = arith.constant 6 : index
    %c0_20 = arith.constant 0 : index
    %41 = vector.load %arg1[%c6, %c0_20] : memref<32x256xf32, #tpu.memory_space<vmem>>, vector<1x256xf32>
    %42 = vector.shape_cast %41 : vector<1x256xf32> to vector<1x1x256xf32>
    %43 = vector.broadcast %42 : vector<1x1x256xf32> to vector<2x30x256xf32>
    %44 = arith.mulf %40, %43 : vector<2x30x256xf32>
    %45 = arith.addf %38, %44 : vector<2x30x256xf32>
    %c248_i32_21 = arith.constant 248 : i32
    %46 = tpu.dynamic_rotate %40 by %c248_i32_21 dim 2 : vector<2x30x256xf32>, i32 -> vector<2x30x256xf32>
    %c7 = arith.constant 7 : index
    %c0_22 = arith.constant 0 : index
    %47 = vector.load %arg1[%c7, %c0_22] : memref<32x256xf32, #tpu.memory_space<vmem>>, vector<1x256xf32>
    %48 = vector.shape_cast %47 : vector<1x256xf32> to vector<1x1x256xf32>
    %49 = vector.broadcast %48 : vector<1x1x256xf32> to vector<2x30x256xf32>
    %50 = arith.mulf %46, %49 : vector<2x30x256xf32>
    %51 = arith.addf %45, %50 : vector<2x30x256xf32>
    %c240_i32_23 = arith.constant 240 : i32
    %52 = tpu.dynamic_rotate %40 by %c240_i32_23 dim 2 : vector<2x30x256xf32>, i32 -> vector<2x30x256xf32>
    %c8 = arith.constant 8 : index
    %c0_24 = arith.constant 0 : index
    %53 = vector.load %arg1[%c8, %c0_24] : memref<32x256xf32, #tpu.memory_space<vmem>>, vector<1x256xf32>
    %54 = vector.shape_cast %53 : vector<1x256xf32> to vector<1x1x256xf32>
    %55 = vector.broadcast %54 : vector<1x1x256xf32> to vector<2x30x256xf32>
    %56 = arith.mulf %52, %55 : vector<2x30x256xf32>
    %57 = arith.addf %51, %56 : vector<2x30x256xf32>
    %c0_25 = arith.constant 0 : index
    %c1_26 = arith.constant 1 : index
    %c0_27 = arith.constant 0 : index
    %c0_28 = arith.constant 0 : index
    %58 = vector.load %arg0[%c0_25, %c1_26, %c0_27, %c0_28] : memref<2x3x32x256xf32, #tpu.memory_space<vmem>>, vector<2x1x30x256xf32>
    %59 = vector.shape_cast %58 : vector<2x1x30x256xf32> to vector<2x30x256xf32>
    %c9 = arith.constant 9 : index
    %c0_29 = arith.constant 0 : index
    %60 = vector.load %arg1[%c9, %c0_29] : memref<32x256xf32, #tpu.memory_space<vmem>>, vector<1x256xf32>
    %61 = vector.shape_cast %60 : vector<1x256xf32> to vector<1x1x256xf32>
    %62 = vector.broadcast %61 : vector<1x1x256xf32> to vector<2x30x256xf32>
    %63 = arith.mulf %59, %62 : vector<2x30x256xf32>
    %64 = arith.addf %57, %63 : vector<2x30x256xf32>
    %c248_i32_30 = arith.constant 248 : i32
    %65 = tpu.dynamic_rotate %59 by %c248_i32_30 dim 2 : vector<2x30x256xf32>, i32 -> vector<2x30x256xf32>
    %c10 = arith.constant 10 : index
    %c0_31 = arith.constant 0 : index
    %66 = vector.load %arg1[%c10, %c0_31] : memref<32x256xf32, #tpu.memory_space<vmem>>, vector<1x256xf32>
    %67 = vector.shape_cast %66 : vector<1x256xf32> to vector<1x1x256xf32>
    %68 = vector.broadcast %67 : vector<1x1x256xf32> to vector<2x30x256xf32>
    %69 = arith.mulf %65, %68 : vector<2x30x256xf32>
    %70 = arith.addf %64, %69 : vector<2x30x256xf32>
    %c240_i32_32 = arith.constant 240 : i32
    %71 = tpu.dynamic_rotate %59 by %c240_i32_32 dim 2 : vector<2x30x256xf32>, i32 -> vector<2x30x256xf32>
    %c11 = arith.constant 11 : index
    %c0_33 = arith.constant 0 : index
    %72 = vector.load %arg1[%c11, %c0_33] : memref<32x256xf32, #tpu.memory_space<vmem>>, vector<1x256xf32>
    %73 = vector.shape_cast %72 : vector<1x256xf32> to vector<1x1x256xf32>
    %74 = vector.broadcast %73 : vector<1x1x256xf32> to vector<2x30x256xf32>
    %75 = arith.mulf %71, %74 : vector<2x30x256xf32>
    %76 = arith.addf %70, %75 : vector<2x30x256xf32>
    %c0_34 = arith.constant 0 : index
    %c1_35 = arith.constant 1 : index
    %c1_36 = arith.constant 1 : index
    %c0_37 = arith.constant 0 : index
    %77 = vector.load %arg0[%c0_34, %c1_35, %c1_36, %c0_37] : memref<2x3x32x256xf32, #tpu.memory_space<vmem>>, vector<2x1x30x256xf32>
    %78 = vector.shape_cast %77 : vector<2x1x30x256xf32> to vector<2x30x256xf32>
    %c12 = arith.constant 12 : index
    %c0_38 = arith.constant 0 : index
    %79 = vector.load %arg1[%c12, %c0_38] : memref<32x256xf32, #tpu.memory_space<vmem>>, vector<1x256xf32>
    %80 = vector.shape_cast %79 : vector<1x256xf32> to vector<1x1x256xf32>
    %81 = vector.broadcast %80 : vector<1x1x256xf32> to vector<2x30x256xf32>
    %82 = arith.mulf %78, %81 : vector<2x30x256xf32>
    %83 = arith.addf %76, %82 : vector<2x30x256xf32>
    %c248_i32_39 = arith.constant 248 : i32
    %84 = tpu.dynamic_rotate %78 by %c248_i32_39 dim 2 : vector<2x30x256xf32>, i32 -> vector<2x30x256xf32>
    %c13 = arith.constant 13 : index
    %c0_40 = arith.constant 0 : index
    %85 = vector.load %arg1[%c13, %c0_40] : memref<32x256xf32, #tpu.memory_space<vmem>>, vector<1x256xf32>
    %86 = vector.shape_cast %85 : vector<1x256xf32> to vector<1x1x256xf32>
    %87 = vector.broadcast %86 : vector<1x1x256xf32> to vector<2x30x256xf32>
    %88 = arith.mulf %84, %87 : vector<2x30x256xf32>
    %89 = arith.addf %83, %88 : vector<2x30x256xf32>
    %c240_i32_41 = arith.constant 240 : i32
    %90 = tpu.dynamic_rotate %78 by %c240_i32_41 dim 2 : vector<2x30x256xf32>, i32 -> vector<2x30x256xf32>
    %c14 = arith.constant 14 : index
    %c0_42 = arith.constant 0 : index
    %91 = vector.load %arg1[%c14, %c0_42] : memref<32x256xf32, #tpu.memory_space<vmem>>, vector<1x256xf32>
    %92 = vector.shape_cast %91 : vector<1x256xf32> to vector<1x1x256xf32>
    %93 = vector.broadcast %92 : vector<1x1x256xf32> to vector<2x30x256xf32>
    %94 = arith.mulf %90, %93 : vector<2x30x256xf32>
    %95 = arith.addf %89, %94 : vector<2x30x256xf32>
    %c0_43 = arith.constant 0 : index
    %c1_44 = arith.constant 1 : index
    %c2_45 = arith.constant 2 : index
    %c0_46 = arith.constant 0 : index
    %96 = vector.load %arg0[%c0_43, %c1_44, %c2_45, %c0_46] : memref<2x3x32x256xf32, #tpu.memory_space<vmem>>, vector<2x1x30x256xf32>
    %97 = vector.shape_cast %96 : vector<2x1x30x256xf32> to vector<2x30x256xf32>
    %c15 = arith.constant 15 : index
    %c0_47 = arith.constant 0 : index
    %98 = vector.load %arg1[%c15, %c0_47] : memref<32x256xf32, #tpu.memory_space<vmem>>, vector<1x256xf32>
    %99 = vector.shape_cast %98 : vector<1x256xf32> to vector<1x1x256xf32>
    %100 = vector.broadcast %99 : vector<1x1x256xf32> to vector<2x30x256xf32>
    %101 = arith.mulf %97, %100 : vector<2x30x256xf32>
    %102 = arith.addf %95, %101 : vector<2x30x256xf32>
    %c248_i32_48 = arith.constant 248 : i32
    %103 = tpu.dynamic_rotate %97 by %c248_i32_48 dim 2 : vector<2x30x256xf32>, i32 -> vector<2x30x256xf32>
    %c16 = arith.constant 16 : index
    %c0_49 = arith.constant 0 : index
    %104 = vector.load %arg1[%c16, %c0_49] : memref<32x256xf32, #tpu.memory_space<vmem>>, vector<1x256xf32>
    %105 = vector.shape_cast %104 : vector<1x256xf32> to vector<1x1x256xf32>
    %106 = vector.broadcast %105 : vector<1x1x256xf32> to vector<2x30x256xf32>
    %107 = arith.mulf %103, %106 : vector<2x30x256xf32>
    %108 = arith.addf %102, %107 : vector<2x30x256xf32>
    %c240_i32_50 = arith.constant 240 : i32
    %109 = tpu.dynamic_rotate %97 by %c240_i32_50 dim 2 : vector<2x30x256xf32>, i32 -> vector<2x30x256xf32>
    %c17 = arith.constant 17 : index
    %c0_51 = arith.constant 0 : index
    %110 = vector.load %arg1[%c17, %c0_51] : memref<32x256xf32, #tpu.memory_space<vmem>>, vector<1x256xf32>
    %111 = vector.shape_cast %110 : vector<1x256xf32> to vector<1x1x256xf32>
    %112 = vector.broadcast %111 : vector<1x1x256xf32> to vector<2x30x256xf32>
    %113 = arith.mulf %109, %112 : vector<2x30x256xf32>
    %114 = arith.addf %108, %113 : vector<2x30x256xf32>
    %c0_52 = arith.constant 0 : index
    %c2_53 = arith.constant 2 : index
    %c0_54 = arith.constant 0 : index
    %c0_55 = arith.constant 0 : index
    %115 = vector.load %arg0[%c0_52, %c2_53, %c0_54, %c0_55] : memref<2x3x32x256xf32, #tpu.memory_space<vmem>>, vector<2x1x30x256xf32>
    %116 = vector.shape_cast %115 : vector<2x1x30x256xf32> to vector<2x30x256xf32>
    %c18 = arith.constant 18 : index
    %c0_56 = arith.constant 0 : index
    %117 = vector.load %arg1[%c18, %c0_56] : memref<32x256xf32, #tpu.memory_space<vmem>>, vector<1x256xf32>
    %118 = vector.shape_cast %117 : vector<1x256xf32> to vector<1x1x256xf32>
    %119 = vector.broadcast %118 : vector<1x1x256xf32> to vector<2x30x256xf32>
    %120 = arith.mulf %116, %119 : vector<2x30x256xf32>
    %121 = arith.addf %114, %120 : vector<2x30x256xf32>
    %c248_i32_57 = arith.constant 248 : i32
    %122 = tpu.dynamic_rotate %116 by %c248_i32_57 dim 2 : vector<2x30x256xf32>, i32 -> vector<2x30x256xf32>
    %c19 = arith.constant 19 : index
    %c0_58 = arith.constant 0 : index
    %123 = vector.load %arg1[%c19, %c0_58] : memref<32x256xf32, #tpu.memory_space<vmem>>, vector<1x256xf32>
    %124 = vector.shape_cast %123 : vector<1x256xf32> to vector<1x1x256xf32>
    %125 = vector.broadcast %124 : vector<1x1x256xf32> to vector<2x30x256xf32>
    %126 = arith.mulf %122, %125 : vector<2x30x256xf32>
    %127 = arith.addf %121, %126 : vector<2x30x256xf32>
    %c240_i32_59 = arith.constant 240 : i32
    %128 = tpu.dynamic_rotate %116 by %c240_i32_59 dim 2 : vector<2x30x256xf32>, i32 -> vector<2x30x256xf32>
    %c20 = arith.constant 20 : index
    %c0_60 = arith.constant 0 : index
    %129 = vector.load %arg1[%c20, %c0_60] : memref<32x256xf32, #tpu.memory_space<vmem>>, vector<1x256xf32>
    %130 = vector.shape_cast %129 : vector<1x256xf32> to vector<1x1x256xf32>
    %131 = vector.broadcast %130 : vector<1x1x256xf32> to vector<2x30x256xf32>
    %132 = arith.mulf %128, %131 : vector<2x30x256xf32>
    %133 = arith.addf %127, %132 : vector<2x30x256xf32>
    %c0_61 = arith.constant 0 : index
    %c2_62 = arith.constant 2 : index
    %c1_63 = arith.constant 1 : index
    %c0_64 = arith.constant 0 : index
    %134 = vector.load %arg0[%c0_61, %c2_62, %c1_63, %c0_64] : memref<2x3x32x256xf32, #tpu.memory_space<vmem>>, vector<2x1x30x256xf32>
    %135 = vector.shape_cast %134 : vector<2x1x30x256xf32> to vector<2x30x256xf32>
    %c21 = arith.constant 21 : index
    %c0_65 = arith.constant 0 : index
    %136 = vector.load %arg1[%c21, %c0_65] : memref<32x256xf32, #tpu.memory_space<vmem>>, vector<1x256xf32>
    %137 = vector.shape_cast %136 : vector<1x256xf32> to vector<1x1x256xf32>
    %138 = vector.broadcast %137 : vector<1x1x256xf32> to vector<2x30x256xf32>
    %139 = arith.mulf %135, %138 : vector<2x30x256xf32>
    %140 = arith.addf %133, %139 : vector<2x30x256xf32>
    %c248_i32_66 = arith.constant 248 : i32
    %141 = tpu.dynamic_rotate %135 by %c248_i32_66 dim 2 : vector<2x30x256xf32>, i32 -> vector<2x30x256xf32>
    %c22 = arith.constant 22 : index
    %c0_67 = arith.constant 0 : index
    %142 = vector.load %arg1[%c22, %c0_67] : memref<32x256xf32, #tpu.memory_space<vmem>>, vector<1x256xf32>
    %143 = vector.shape_cast %142 : vector<1x256xf32> to vector<1x1x256xf32>
    %144 = vector.broadcast %143 : vector<1x1x256xf32> to vector<2x30x256xf32>
    %145 = arith.mulf %141, %144 : vector<2x30x256xf32>
    %146 = arith.addf %140, %145 : vector<2x30x256xf32>
    %c240_i32_68 = arith.constant 240 : i32
    %147 = tpu.dynamic_rotate %135 by %c240_i32_68 dim 2 : vector<2x30x256xf32>, i32 -> vector<2x30x256xf32>
    %c23 = arith.constant 23 : index
    %c0_69 = arith.constant 0 : index
    %148 = vector.load %arg1[%c23, %c0_69] : memref<32x256xf32, #tpu.memory_space<vmem>>, vector<1x256xf32>
    %149 = vector.shape_cast %148 : vector<1x256xf32> to vector<1x1x256xf32>
    %150 = vector.broadcast %149 : vector<1x1x256xf32> to vector<2x30x256xf32>
    %151 = arith.mulf %147, %150 : vector<2x30x256xf32>
    %152 = arith.addf %146, %151 : vector<2x30x256xf32>
    %c0_70 = arith.constant 0 : index
    %c2_71 = arith.constant 2 : index
    %c2_72 = arith.constant 2 : index
    %c0_73 = arith.constant 0 : index
    %153 = vector.load %arg0[%c0_70, %c2_71, %c2_72, %c0_73] : memref<2x3x32x256xf32, #tpu.memory_space<vmem>>, vector<2x1x30x256xf32>
    %154 = vector.shape_cast %153 : vector<2x1x30x256xf32> to vector<2x30x256xf32>
    %c24 = arith.constant 24 : index
    %c0_74 = arith.constant 0 : index
    %155 = vector.load %arg1[%c24, %c0_74] : memref<32x256xf32, #tpu.memory_space<vmem>>, vector<1x256xf32>
    %156 = vector.shape_cast %155 : vector<1x256xf32> to vector<1x1x256xf32>
    %157 = vector.broadcast %156 : vector<1x1x256xf32> to vector<2x30x256xf32>
    %158 = arith.mulf %154, %157 : vector<2x30x256xf32>
    %159 = arith.addf %152, %158 : vector<2x30x256xf32>
    %c248_i32_75 = arith.constant 248 : i32
    %160 = tpu.dynamic_rotate %154 by %c248_i32_75 dim 2 : vector<2x30x256xf32>, i32 -> vector<2x30x256xf32>
    %c25 = arith.constant 25 : index
    %c0_76 = arith.constant 0 : index
    %161 = vector.load %arg1[%c25, %c0_76] : memref<32x256xf32, #tpu.memory_space<vmem>>, vector<1x256xf32>
    %162 = vector.shape_cast %161 : vector<1x256xf32> to vector<1x1x256xf32>
    %163 = vector.broadcast %162 : vector<1x1x256xf32> to vector<2x30x256xf32>
    %164 = arith.mulf %160, %163 : vector<2x30x256xf32>
    %165 = arith.addf %159, %164 : vector<2x30x256xf32>
    %c240_i32_77 = arith.constant 240 : i32
    %166 = tpu.dynamic_rotate %154 by %c240_i32_77 dim 2 : vector<2x30x256xf32>, i32 -> vector<2x30x256xf32>
    %c26 = arith.constant 26 : index
    %c0_78 = arith.constant 0 : index
    %167 = vector.load %arg1[%c26, %c0_78] : memref<32x256xf32, #tpu.memory_space<vmem>>, vector<1x256xf32>
    %168 = vector.shape_cast %167 : vector<1x256xf32> to vector<1x1x256xf32>
    %169 = vector.broadcast %168 : vector<1x1x256xf32> to vector<2x30x256xf32>
    %170 = arith.mulf %166, %169 : vector<2x30x256xf32>
    %171 = arith.addf %165, %170 : vector<2x30x256xf32>
    %c0_79 = arith.constant 0 : index
    %c0_80 = arith.constant 0 : index
    %172 = vector.load %arg2[%c0_79, %c0_80] : memref<1x256xf32, #tpu.memory_space<vmem>>, vector<1x256xf32>
    %173 = vector.shape_cast %172 : vector<1x256xf32> to vector<1x1x256xf32>
    %174 = vector.broadcast %173 : vector<1x1x256xf32> to vector<2x30x256xf32>
    %175 = arith.addf %171, %174 : vector<2x30x256xf32>
    %cst_81 = arith.constant 0.000000e+00 : f32
    %176 = vector.broadcast %cst_81 : f32 to vector<2x30x256xf32>
    %177 = arith.maximumf %175, %176 : vector<2x30x256xf32>
    %c0_82 = arith.constant 0 : index
    %c0_83 = arith.constant 0 : index
    %c0_84 = arith.constant 0 : index
    %178 = vector.load %arg8[%c0_82, %c0_83, %c0_84] : memref<2x30x256xf32, #tpu.memory_space<vmem>>, vector<2x30x256xf32>
    tpu.vector_store %arg8[%c0_82, %c0_83, %c0_84], %177 {strides = array<i32>} : memref<2x30x256xf32, #tpu.memory_space<vmem>>, vector<2x30x256xf32>,
    %c0_85 = arith.constant 0 : index
    %c0_86 = arith.constant 0 : index
    %c0_87 = arith.constant 0 : index
    %179 = vector.load %arg8[%c0_85, %c0_86, %c0_87] : memref<2x30x256xf32, #tpu.memory_space<vmem>>, vector<2x1x256xf32>
    %180 = vector.shape_cast %179 : vector<2x1x256xf32> to vector<2x256xf32>
    %c0_88 = arith.constant 0 : index
    %c1_89 = arith.constant 1 : index
    %c0_90 = arith.constant 0 : index
    %181 = vector.load %arg8[%c0_88, %c1_89, %c0_90] : memref<2x30x256xf32, #tpu.memory_space<vmem>>, vector<2x1x256xf32>
    %182 = vector.shape_cast %181 : vector<2x1x256xf32> to vector<2x256xf32>
    %183 = arith.maximumf %180, %182 : vector<2x256xf32>
    %c0_91 = arith.constant 0 : index
    %c2_92 = arith.constant 2 : index
    %c0_93 = arith.constant 0 : index
    %184 = vector.load %arg8[%c0_91, %c2_92, %c0_93] : memref<2x30x256xf32, #tpu.memory_space<vmem>>, vector<2x1x256xf32>
    %185 = vector.shape_cast %184 : vector<2x1x256xf32> to vector<2x256xf32>
    %186 = arith.maximumf %183, %185 : vector<2x256xf32>
    %c0_94 = arith.constant 0 : index
    %c3_95 = arith.constant 3 : index
    %c0_96 = arith.constant 0 : index
    %187 = vector.load %arg8[%c0_94, %c3_95, %c0_96] : memref<2x30x256xf32, #tpu.memory_space<vmem>>, vector<2x1x256xf32>
    %188 = vector.shape_cast %187 : vector<2x1x256xf32> to vector<2x256xf32>
    %189 = arith.maximumf %186, %188 : vector<2x256xf32>
    %c0_97 = arith.constant 0 : index
    %c4_98 = arith.constant 4 : index
    %c0_99 = arith.constant 0 : index
    %190 = vector.load %arg8[%c0_97, %c4_98, %c0_99] : memref<2x30x256xf32, #tpu.memory_space<vmem>>, vector<2x1x256xf32>
    %191 = vector.shape_cast %190 : vector<2x1x256xf32> to vector<2x256xf32>
    %192 = arith.maximumf %189, %191 : vector<2x256xf32>
    %c0_100 = arith.constant 0 : index
    %c5_101 = arith.constant 5 : index
    %c0_102 = arith.constant 0 : index
    %193 = vector.load %arg8[%c0_100, %c5_101, %c0_102] : memref<2x30x256xf32, #tpu.memory_space<vmem>>, vector<2x1x256xf32>
    %194 = vector.shape_cast %193 : vector<2x1x256xf32> to vector<2x256xf32>
    %c0_103 = arith.constant 0 : index
    %c6_104 = arith.constant 6 : index
    %c0_105 = arith.constant 0 : index
    %195 = vector.load %arg8[%c0_103, %c6_104, %c0_105] : memref<2x30x256xf32, #tpu.memory_space<vmem>>, vector<2x1x256xf32>
    %196 = vector.shape_cast %195 : vector<2x1x256xf32> to vector<2x256xf32>
    %197 = arith.maximumf %194, %196 : vector<2x256xf32>
    %c0_106 = arith.constant 0 : index
    %c7_107 = arith.constant 7 : index
    %c0_108 = arith.constant 0 : index
    %198 = vector.load %arg8[%c0_106, %c7_107, %c0_108] : memref<2x30x256xf32, #tpu.memory_space<vmem>>, vector<2x1x256xf32>
    %199 = vector.shape_cast %198 : vector<2x1x256xf32> to vector<2x256xf32>
    %200 = arith.maximumf %197, %199 : vector<2x256xf32>
    %c0_109 = arith.constant 0 : index
    %c8_110 = arith.constant 8 : index
    %c0_111 = arith.constant 0 : index
    %201 = vector.load %arg8[%c0_109, %c8_110, %c0_111] : memref<2x30x256xf32, #tpu.memory_space<vmem>>, vector<2x1x256xf32>
    %202 = vector.shape_cast %201 : vector<2x1x256xf32> to vector<2x256xf32>
    %203 = arith.maximumf %200, %202 : vector<2x256xf32>
    %c0_112 = arith.constant 0 : index
    %c9_113 = arith.constant 9 : index
    %c0_114 = arith.constant 0 : index
    %204 = vector.load %arg8[%c0_112, %c9_113, %c0_114] : memref<2x30x256xf32, #tpu.memory_space<vmem>>, vector<2x1x256xf32>
    %205 = vector.shape_cast %204 : vector<2x1x256xf32> to vector<2x256xf32>
    %206 = arith.maximumf %203, %205 : vector<2x256xf32>
    %c0_115 = arith.constant 0 : index
    %c10_116 = arith.constant 10 : index
    %c0_117 = arith.constant 0 : index
    %207 = vector.load %arg8[%c0_115, %c10_116, %c0_117] : memref<2x30x256xf32, #tpu.memory_space<vmem>>, vector<2x1x256xf32>
    %208 = vector.shape_cast %207 : vector<2x1x256xf32> to vector<2x256xf32>
    %c0_118 = arith.constant 0 : index
    %c11_119 = arith.constant 11 : index
    %c0_120 = arith.constant 0 : index
    %209 = vector.load %arg8[%c0_118, %c11_119, %c0_120] : memref<2x30x256xf32, #tpu.memory_space<vmem>>, vector<2x1x256xf32>
    %210 = vector.shape_cast %209 : vector<2x1x256xf32> to vector<2x256xf32>
    %211 = arith.maximumf %208, %210 : vector<2x256xf32>
    %c0_121 = arith.constant 0 : index
    %c12_122 = arith.constant 12 : index
    %c0_123 = arith.constant 0 : index
    %212 = vector.load %arg8[%c0_121, %c12_122, %c0_123] : memref<2x30x256xf32, #tpu.memory_space<vmem>>, vector<2x1x256xf32>
    %213 = vector.shape_cast %212 : vector<2x1x256xf32> to vector<2x256xf32>
    %214 = arith.maximumf %211, %213 : vector<2x256xf32>
    %c0_124 = arith.constant 0 : index
    %c13_125 = arith.constant 13 : index
    %c0_126 = arith.constant 0 : index
    %215 = vector.load %arg8[%c0_124, %c13_125, %c0_126] : memref<2x30x256xf32, #tpu.memory_space<vmem>>, vector<2x1x256xf32>
    %216 = vector.shape_cast %215 : vector<2x1x256xf32> to vector<2x256xf32>
    %217 = arith.maximumf %214, %216 : vector<2x256xf32>
    %c0_127 = arith.constant 0 : index
    %c14_128 = arith.constant 14 : index
    %c0_129 = arith.constant 0 : index
    %218 = vector.load %arg8[%c0_127, %c14_128, %c0_129] : memref<2x30x256xf32, #tpu.memory_space<vmem>>, vector<2x1x256xf32>
    %219 = vector.shape_cast %218 : vector<2x1x256xf32> to vector<2x256xf32>
    %220 = arith.maximumf %217, %219 : vector<2x256xf32>
    %c0_130 = arith.constant 0 : index
    %c15_131 = arith.constant 15 : index
    %c0_132 = arith.constant 0 : index
    %221 = vector.load %arg8[%c0_130, %c15_131, %c0_132] : memref<2x30x256xf32, #tpu.memory_space<vmem>>, vector<2x1x256xf32>
    %222 = vector.shape_cast %221 : vector<2x1x256xf32> to vector<2x256xf32>
    %c0_133 = arith.constant 0 : index
    %c16_134 = arith.constant 16 : index
    %c0_135 = arith.constant 0 : index
    %223 = vector.load %arg8[%c0_133, %c16_134, %c0_135] : memref<2x30x256xf32, #tpu.memory_space<vmem>>, vector<2x1x256xf32>
    %224 = vector.shape_cast %223 : vector<2x1x256xf32> to vector<2x256xf32>
    %225 = arith.maximumf %222, %224 : vector<2x256xf32>
    %c0_136 = arith.constant 0 : index
    %c17_137 = arith.constant 17 : index
    %c0_138 = arith.constant 0 : index
    %226 = vector.load %arg8[%c0_136, %c17_137, %c0_138] : memref<2x30x256xf32, #tpu.memory_space<vmem>>, vector<2x1x256xf32>
    %227 = vector.shape_cast %226 : vector<2x1x256xf32> to vector<2x256xf32>
    %228 = arith.maximumf %225, %227 : vector<2x256xf32>
    %c0_139 = arith.constant 0 : index
    %c18_140 = arith.constant 18 : index
    %c0_141 = arith.constant 0 : index
    %229 = vector.load %arg8[%c0_139, %c18_140, %c0_141] : memref<2x30x256xf32, #tpu.memory_space<vmem>>, vector<2x1x256xf32>
    %230 = vector.shape_cast %229 : vector<2x1x256xf32> to vector<2x256xf32>
    %231 = arith.maximumf %228, %230 : vector<2x256xf32>
    %c0_142 = arith.constant 0 : index
    %c19_143 = arith.constant 19 : index
    %c0_144 = arith.constant 0 : index
    %232 = vector.load %arg8[%c0_142, %c19_143, %c0_144] : memref<2x30x256xf32, #tpu.memory_space<vmem>>, vector<2x1x256xf32>
    %233 = vector.shape_cast %232 : vector<2x1x256xf32> to vector<2x256xf32>
    %234 = arith.maximumf %231, %233 : vector<2x256xf32>
    %c0_145 = arith.constant 0 : index
    %c20_146 = arith.constant 20 : index
    %c0_147 = arith.constant 0 : index
    %235 = vector.load %arg8[%c0_145, %c20_146, %c0_147] : memref<2x30x256xf32, #tpu.memory_space<vmem>>, vector<2x1x256xf32>
    %236 = vector.shape_cast %235 : vector<2x1x256xf32> to vector<2x256xf32>
    %c0_148 = arith.constant 0 : index
    %c21_149 = arith.constant 21 : index
    %c0_150 = arith.constant 0 : index
    %237 = vector.load %arg8[%c0_148, %c21_149, %c0_150] : memref<2x30x256xf32, #tpu.memory_space<vmem>>, vector<2x1x256xf32>
    %238 = vector.shape_cast %237 : vector<2x1x256xf32> to vector<2x256xf32>
    %239 = arith.maximumf %236, %238 : vector<2x256xf32>
    %c0_151 = arith.constant 0 : index
    %c22_152 = arith.constant 22 : index
    %c0_153 = arith.constant 0 : index
    %240 = vector.load %arg8[%c0_151, %c22_152, %c0_153] : memref<2x30x256xf32, #tpu.memory_space<vmem>>, vector<2x1x256xf32>
    %241 = vector.shape_cast %240 : vector<2x1x256xf32> to vector<2x256xf32>
    %242 = arith.maximumf %239, %241 : vector<2x256xf32>
    %c0_154 = arith.constant 0 : index
    %c23_155 = arith.constant 23 : index
    %c0_156 = arith.constant 0 : index
    %243 = vector.load %arg8[%c0_154, %c23_155, %c0_156] : memref<2x30x256xf32, #tpu.memory_space<vmem>>, vector<2x1x256xf32>
    %244 = vector.shape_cast %243 : vector<2x1x256xf32> to vector<2x256xf32>
    %245 = arith.maximumf %242, %244 : vector<2x256xf32>
    %c0_157 = arith.constant 0 : index
    %c24_158 = arith.constant 24 : index
    %c0_159 = arith.constant 0 : index
    %246 = vector.load %arg8[%c0_157, %c24_158, %c0_159] : memref<2x30x256xf32, #tpu.memory_space<vmem>>, vector<2x1x256xf32>
    %247 = vector.shape_cast %246 : vector<2x1x256xf32> to vector<2x256xf32>
    %248 = arith.maximumf %245, %247 : vector<2x256xf32>
    %c0_160 = arith.constant 0 : index
    %c25_161 = arith.constant 25 : index
    %c0_162 = arith.constant 0 : index
    %249 = vector.load %arg8[%c0_160, %c25_161, %c0_162] : memref<2x30x256xf32, #tpu.memory_space<vmem>>, vector<2x1x256xf32>
    %250 = vector.shape_cast %249 : vector<2x1x256xf32> to vector<2x256xf32>
    %c0_163 = arith.constant 0 : index
    %c26_164 = arith.constant 26 : index
    %c0_165 = arith.constant 0 : index
    %251 = vector.load %arg8[%c0_163, %c26_164, %c0_165] : memref<2x30x256xf32, #tpu.memory_space<vmem>>, vector<2x1x256xf32>
    %252 = vector.shape_cast %251 : vector<2x1x256xf32> to vector<2x256xf32>
    %253 = arith.maximumf %250, %252 : vector<2x256xf32>
    %c0_166 = arith.constant 0 : index
    %c27 = arith.constant 27 : index
    %c0_167 = arith.constant 0 : index
    %254 = vector.load %arg8[%c0_166, %c27, %c0_167] : memref<2x30x256xf32, #tpu.memory_space<vmem>>, vector<2x1x256xf32>
    %255 = vector.shape_cast %254 : vector<2x1x256xf32> to vector<2x256xf32>
    %256 = arith.maximumf %253, %255 : vector<2x256xf32>
    %c0_168 = arith.constant 0 : index
    %c28 = arith.constant 28 : index
    %c0_169 = arith.constant 0 : index
    %257 = vector.load %arg8[%c0_168, %c28, %c0_169] : memref<2x30x256xf32, #tpu.memory_space<vmem>>, vector<2x1x256xf32>
    %258 = vector.shape_cast %257 : vector<2x1x256xf32> to vector<2x256xf32>
    %259 = arith.maximumf %256, %258 : vector<2x256xf32>
    %c0_170 = arith.constant 0 : index
    %c29 = arith.constant 29 : index
    %c0_171 = arith.constant 0 : index
    %260 = vector.load %arg8[%c0_170, %c29, %c0_171] : memref<2x30x256xf32, #tpu.memory_space<vmem>>, vector<2x1x256xf32>
    %261 = vector.shape_cast %260 : vector<2x1x256xf32> to vector<2x256xf32>
    %262 = arith.maximumf %259, %261 : vector<2x256xf32>
    %263 = vector.shape_cast %192 : vector<2x256xf32> to vector<2x1x256xf32>
    %264 = vector.shape_cast %206 : vector<2x256xf32> to vector<2x1x256xf32>
    %265 = vector.shape_cast %220 : vector<2x256xf32> to vector<2x1x256xf32>
    %266 = vector.shape_cast %234 : vector<2x256xf32> to vector<2x1x256xf32>
    %267 = vector.shape_cast %248 : vector<2x256xf32> to vector<2x1x256xf32>
    %268 = vector.shape_cast %262 : vector<2x256xf32> to vector<2x1x256xf32>
    %269 = tpu.concatenate %263, %264, %265, %266, %267, %268 in 1 : vector<2x1x256xf32>, vector<2x1x256xf32>, vector<2x1x256xf32>, vector<2x1x256xf32>, vector<2x1x256xf32>, vector<2x1x256xf32> -> vector<2x6x256xf32>
    %c248_i32_172 = arith.constant 248 : i32
    %270 = tpu.dynamic_rotate %269 by %c248_i32_172 dim 2 : vector<2x6x256xf32>, i32 -> vector<2x6x256xf32>
    %271 = arith.maximumf %269, %270 : vector<2x6x256xf32>
    %c240_i32_173 = arith.constant 240 : i32
    %272 = tpu.dynamic_rotate %269 by %c240_i32_173 dim 2 : vector<2x6x256xf32>, i32 -> vector<2x6x256xf32>
    %273 = arith.maximumf %271, %272 : vector<2x6x256xf32>
    %c232_i32 = arith.constant 232 : i32
    %274 = tpu.dynamic_rotate %269 by %c232_i32 dim 2 : vector<2x6x256xf32>, i32 -> vector<2x6x256xf32>
    %275 = arith.maximumf %273, %274 : vector<2x6x256xf32>
    %c224_i32 = arith.constant 224 : i32
    %276 = tpu.dynamic_rotate %269 by %c224_i32 dim 2 : vector<2x6x256xf32>, i32 -> vector<2x6x256xf32>
    %277 = arith.maximumf %275, %276 : vector<2x6x256xf32>
    %278 = vector.extract_strided_slice %277 {offsets = [0, 0, 0], sizes = [2, 6, 8], strides = [1, 1, 1]} : vector<2x6x256xf32> to vector<2x6x8xf32>
    %279 = vector.extract_strided_slice %277 {offsets = [0, 0, 40], sizes = [2, 6, 8], strides = [1, 1, 1]} : vector<2x6x256xf32> to vector<2x6x8xf32>
    %280 = vector.extract_strided_slice %277 {offsets = [0, 0, 80], sizes = [2, 6, 8], strides = [1, 1, 1]} : vector<2x6x256xf32> to vector<2x6x8xf32>
    %281 = vector.extract_strided_slice %277 {offsets = [0, 0, 120], sizes = [2, 6, 8], strides = [1, 1, 1]} : vector<2x6x256xf32> to vector<2x6x8xf32>
    %282 = vector.extract_strided_slice %277 {offsets = [0, 0, 160], sizes = [2, 6, 8], strides = [1, 1, 1]} : vector<2x6x256xf32> to vector<2x6x8xf32>
    %283 = vector.extract_strided_slice %277 {offsets = [0, 0, 200], sizes = [2, 6, 8], strides = [1, 1, 1]} : vector<2x6x256xf32> to vector<2x6x8xf32>
    %cst_174 = arith.constant 0.000000e+00 : f32
    %284 = vector.broadcast %cst_174 : f32 to vector<2x6x16xf32>
    %285 = tpu.concatenate %278, %279, %280, %281, %282, %283, %284 in 2 : vector<2x6x8xf32>, vector<2x6x8xf32>, vector<2x6x8xf32>, vector<2x6x8xf32>, vector<2x6x8xf32>, vector<2x6x8xf32>, vector<2x6x16xf32> -> vector<2x6x64xf32>
    %286 = vector.extract_strided_slice %285 {offsets = [0, 0, 0], sizes = [2, 1, 64], strides = [1, 1, 1]} : vector<2x6x64xf32> to vector<2x1x64xf32>
    %287 = vector.shape_cast %286 : vector<2x1x64xf32> to vector<2x64xf32>
    %288 = vector.extract_strided_slice %285 {offsets = [0, 1, 0], sizes = [2, 1, 64], strides = [1, 1, 1]} : vector<2x6x64xf32> to vector<2x1x64xf32>
    %289 = vector.shape_cast %288 : vector<2x1x64xf32> to vector<2x64xf32>
    %290 = vector.extract_strided_slice %285 {offsets = [0, 2, 0], sizes = [2, 1, 64], strides = [1, 1, 1]} : vector<2x6x64xf32> to vector<2x1x64xf32>
    %291 = vector.shape_cast %290 : vector<2x1x64xf32> to vector<2x64xf32>
    %292 = vector.extract_strided_slice %285 {offsets = [0, 3, 0], sizes = [2, 1, 64], strides = [1, 1, 1]} : vector<2x6x64xf32> to vector<2x1x64xf32>
    %293 = vector.shape_cast %292 : vector<2x1x64xf32> to vector<2x64xf32>
    %294 = vector.extract_strided_slice %285 {offsets = [0, 4, 0], sizes = [2, 1, 64], strides = [1, 1, 1]} : vector<2x6x64xf32> to vector<2x1x64xf32>
    %295 = vector.shape_cast %294 : vector<2x1x64xf32> to vector<2x64xf32>
    %296 = vector.extract_strided_slice %285 {offsets = [0, 5, 0], sizes = [2, 1, 64], strides = [1, 1, 1]} : vector<2x6x64xf32> to vector<2x1x64xf32>
    %297 = vector.shape_cast %296 : vector<2x1x64xf32> to vector<2x64xf32>
    %298 = tpu.concatenate %287, %289, %291, %293, %295, %297 in 1 : vector<2x64xf32>, vector<2x64xf32>, vector<2x64xf32>, vector<2x64xf32>, vector<2x64xf32>, vector<2x64xf32> -> vector<2x384xf32>
    %cst_175 = arith.constant 0.000000e+00 : f32
    %299 = vector.broadcast %cst_175 : f32 to vector<6x384xf32>
    %300 = tpu.concatenate %298, %299 in 0 : vector<2x384xf32>, vector<6x384xf32> -> vector<8x384xf32>
    %c0_176 = arith.constant 0 : index
    %c0_177 = arith.constant 0 : index
    %301 = vector.load %arg3[%c0_176, %c0_177] : memref<384x1024xf32, #tpu.memory_space<vmem>>, vector<384x1024xf32>
    %cst_178 = arith.constant dense<0.000000e+00> : vector<8x1024xf32>
    %302 = tpu.matmul %300, %301, %cst_178 {dimension_numbers = #tpu.dot_dimension_numbers<[1], [0], [0], [1], [0, 0, 1, 1], [], []>} : vector<8x384xf32>, vector<384x1024xf32>, vector<8x1024xf32> -> vector<8x1024xf32>
    %c0_179 = arith.constant 0 : index
    %c0_180 = arith.constant 0 : index
    %303 = vector.load %arg4[%c0_179, %c0_180] : memref<1x1024xf32, #tpu.memory_space<vmem>>, vector<1x1024xf32>
    %304 = vector.broadcast %303 : vector<1x1024xf32> to vector<8x1024xf32>
    %305 = arith.addf %302, %304 : vector<8x1024xf32>
    %cst_181 = arith.constant 0.000000e+00 : f32
    %306 = vector.broadcast %cst_181 : f32 to vector<8x1024xf32>
    %307 = arith.maximumf %305, %306 : vector<8x1024xf32>
    %c0_182 = arith.constant 0 : index
    %c0_183 = arith.constant 0 : index
    %308 = vector.load %arg5[%c0_182, %c0_183] : memref<1024x128xf32, #tpu.memory_space<vmem>>, vector<1024x128xf32>
    %cst_184 = arith.constant dense<0.000000e+00> : vector<8x128xf32>
    %309 = tpu.matmul %307, %308, %cst_184 {dimension_numbers = #tpu.dot_dimension_numbers<[1], [0], [0], [1], [0, 0, 1, 1], [], []>} : vector<8x1024xf32>, vector<1024x128xf32>, vector<8x128xf32> -> vector<8x128xf32>
    %c0_185 = arith.constant 0 : index
    %c0_186 = arith.constant 0 : index
    %310 = vector.load %arg6[%c0_185, %c0_186] : memref<1x128xf32, #tpu.memory_space<vmem>>, vector<1x128xf32>
    %311 = vector.broadcast %310 : vector<1x128xf32> to vector<8x128xf32>
    %312 = arith.addf %309, %311 : vector<8x128xf32>
    %c0_187 = arith.constant 0 : index
    %c0_188 = arith.constant 0 : index
    %313 = vector.load %arg7[%c0_187, %c0_188] : memref<8x128xf32, #tpu.memory_space<vmem>>, vector<8x128xf32>
    tpu.vector_store %arg7[%c0_187, %c0_188], %312 {strides = array<i32>} : memref<8x128xf32, #tpu.memory_space<vmem>>, vector<8x128xf32>,
    return
  }
}

</mosaic_0001>

<llo_original>
// kernel: tpu_custom_call.1
$region0: #{tpu_custom_call.1}
  #allocation0 [shape = 'u32[]', space=smem, size = 0x4, offset = 0x4, fixed_abs, tag = 'smem constant byte address 0x4 - core index']
  #allocation1 [shape = 'u32[144,128]{1,0:T(1,128)}', space=vmem, size = 0x12000, scoped, tag = 'internal scratch']
  #allocation2 [shape = 'f32[2,30,256]{2,1,0:T(8,128)}', space=vmem, size = 0x10000, scoped, tag = 'scratch operand']
  %s0 = inlined_call_operand.hbm [shape: f32[2,3,32,256], index: 0, kind: input, shape index: {}]
  %s1 = inlined_call_operand.hbm [shape: f32[32,256], index: 1, kind: input, shape index: {}]
  %s2 = inlined_call_operand.hbm [shape: f32[1,256], index: 2, kind: input, shape index: {}]
  %s3 = inlined_call_operand.hbm [shape: f32[384,1024], index: 3, kind: input, shape index: {}]
  %s4 = inlined_call_operand.hbm [shape: f32[1,1024], index: 4, kind: input, shape index: {}]
  %s5 = inlined_call_operand.hbm [shape: f32[1024,128], index: 5, kind: input, shape index: {}]
  %s6 = inlined_call_operand.hbm [shape: f32[1,128], index: 6, kind: input, shape index: {}]
  %s7 = inlined_call_operand.hbm [shape: f32[8,128], index: 7, kind: output, shape index: {}]
  %s8 = sld [smem:[#allocation0]]
  $region66: #{tpu_custom_call.1} parent=0
    _
  %s10 = ssub.s32 1, %s8
  %s11 = scalar_select 0, %s10, %s8
  $region1: #{tpu_custom_call.1} parent=0
    #allocation3 [shape = 'u8[196608]{0}', space=vmem, size = 0x30000, scoped, tag = 'input window, operand 0, single buffered']
    #allocation4 [shape = 's32[1]{0}', space=sflag, size = 0x4, scoped, tag = 'scoped memory for tpu_custom_call.1']
    #allocation5 [shape = 's32[1]{0}', space=sflag, size = 0x4, scoped, tag = 'scoped memory for tpu_custom_call.1']
    #allocation6 [shape = 'u8[32768]{0}', space=vmem, size = 0x8000, scoped, tag = 'input window, operand 1, single buffered']
    #allocation7 [shape = 's32[1]{0}', space=sflag, size = 0x4, scoped, tag = 'scoped memory for tpu_custom_call.1']
    #allocation8 [shape = 'u8[1024]{0}', space=vmem, size = 0x400, scoped, tag = 'input window, operand 2, single buffered']
    #allocation9 [shape = 'u8[1572864]{0}', space=vmem, size = 0x180000, scoped, tag = 'input window, operand 3, single buffered']
    #allocation10 [shape = 's32[1]{0}', space=sflag, size = 0x4, scoped, tag = 'scoped memory for tpu_custom_call.1']
    #allocation11 [shape = 'u8[4096]{0}', space=vmem, size = 0x1000, scoped, tag = 'input window, operand 4, single buffered']
    #allocation12 [shape = 'u8[524288]{0}', space=vmem, size = 0x80000, scoped, tag = 'input window, operand 5, single buffered']
    #allocation13 [shape = 's32[1]{0}', space=sflag, size = 0x4, scoped, tag = 'scoped memory for tpu_custom_call.1']
    #allocation14 [shape = 'u8[512]{0}', space=vmem, size = 0x400, scoped, tag = 'input window, operand 6, single buffered']
    #allocation15 [shape = 'u8[4096]{0}', space=vmem, size = 0x1000, scoped, tag = 'output window, operand 0, single buffered']
    %12 = vsyncpa [#allocation4], 0
    %13 = vsyncpa [#allocation7], 0
    %14 = vsyncpa [#allocation10], 0
    %15 = vsyncpa [#allocation13], 0
    %16 = vsyncpa [#allocation5], 0
    // Predicated region
    $region2: #{tpu_custom_call.1} parent=1 // pred_check
      _
    $region3: #{tpu_custom_call.1} parent=1 // pred_check_branch
      %18 = sbr.rel (0) target = $region5
    $region4: #{tpu_custom_call.1} parent=1 // pred_region
      %s20 = ssub.s32 6144, 6144
      %21 = vsyncadd [#allocation4], %s20
      %s22 = sshll.u32 [#allocation3], 4
      %s23 = int_to_ptr.vmem [resolvable:$true] %s22
      %28 = dma.hbm_to_vmem [thread:$0]  %s0, 6144, %s23, [#allocation4], 256, 256, 16
    $region5: #{tpu_custom_call.1} parent=1 // pred_fallthru
      _
    // Predicated region
    $region6: #{tpu_custom_call.1} parent=1 // pred_check
      _
    $region7: #{tpu_custom_call.1} parent=1 // pred_check_branch
      %30 = sbr.rel (0) target = $region9
    $region8: #{tpu_custom_call.1} parent=1 // pred_region
      %s32 = ssub.s32 1024, 1024
      %33 = vsyncadd [#allocation7], %s32
      %s34 = sshll.u32 [#allocation6], 4
      %s35 = int_to_ptr.vmem [resolvable:$true] %s34
      %40 = dma.hbm_to_vmem [thread:$0]  %s1, 1024, %s35, [#allocation7], 256, 256, 16
    $region9: #{tpu_custom_call.1} parent=1 // pred_fallthru
      _
    // Predicated region
    $region10: #{tpu_custom_call.1} parent=1 // pred_check
      _
    $region11: #{tpu_custom_call.1} parent=1 // pred_check_branch
      %42 = sbr.rel (0) target = $region13
    $region12: #{tpu_custom_call.1} parent=1 // pred_region
      %s44 = ssub.s32 32, 32
      %45 = vsyncadd [#allocation7], %s44
      %s47 = sshll.u32 [#allocation8], 4
      %s48 = int_to_ptr.vmem [resolvable:$true] %s47
      %50 = dma.hbm_to_vmem [thread:$0]  %s2, 32, %s48, [#allocation7]
    $region13: #{tpu_custom_call.1} parent=1 // pred_fallthru
      _
    // Predicated region
    $region14: #{tpu_custom_call.1} parent=1 // pred_check
      _
    $region15: #{tpu_custom_call.1} parent=1 // pred_check_branch
      %52 = sbr.rel (0) target = $region17
    $region16: #{tpu_custom_call.1} parent=1 // pred_region
      %s54 = ssub.s32 49152, 49152
      %55 = vsyncadd [#allocation10], %s54
      %s56 = sshll.u32 [#allocation9], 4
      %s57 = int_to_ptr.vmem [resolvable:$true] %s56
      %62 = dma.hbm_to_vmem [thread:$0]  %s3, 49152, %s57, [#allocation10], 1024, 1024, 64
    $region17: #{tpu_custom_call.1} parent=1 // pred_fallthru
      _
    // Predicated region
    $region18: #{tpu_custom_call.1} parent=1 // pred_check
      _
    $region19: #{tpu_custom_call.1} parent=1 // pred_check_branch
      %64 = sbr.rel (0) target = $region21
    $region20: #{tpu_custom_call.1} parent=1 // pred_region
      %s66 = ssub.s32 128, 128
      %67 = vsyncadd [#allocation10], %s66
      %s69 = sshll.u32 [#allocation11], 4
      %s70 = int_to_ptr.vmem [resolvable:$true] %s69
      %72 = dma.hbm_to_vmem [thread:$0]  %s4, 128, %s70, [#allocation10]
    $region21: #{tpu_custom_call.1} parent=1 // pred_fallthru
      _
    // Predicated region
    $region22: #{tpu_custom_call.1} parent=1 // pred_check
      _
    $region23: #{tpu_custom_call.1} parent=1 // pred_check_branch
      %74 = sbr.rel (0) target = $region25
    $region24: #{tpu_custom_call.1} parent=1 // pred_region
      %s76 = ssub.s32 16384, 16384
      %77 = vsyncadd [#allocation13], %s76
      %s78 = sshll.u32 [#allocation12], 4
      %s79 = int_to_ptr.vmem [resolvable:$true] %s78
      %84 = dma.hbm_to_vmem [thread:$0]  %s5, 16384, %s79, [#allocation13], 128, 128, 8
    $region25: #{tpu_custom_call.1} parent=1 // pred_fallthru
      _
    // Predicated region
    $region26: #{tpu_custom_call.1} parent=1 // pred_check
      _
    $region27: #{tpu_custom_call.1} parent=1 // pred_check_branch
      %86 = sbr.rel (0) target = $region29
    $region28: #{tpu_custom_call.1} parent=1 // pred_region
      %s88 = ssub.s32 16, 16
      %89 = vsyncadd [#allocation13], %s88
      %s91 = sshll.u32 [#allocation14], 4
      %s92 = int_to_ptr.vmem [resolvable:$true] %s91
      %94 = dma.hbm_to_vmem [thread:$0]  %s6, 16, %s92, [#allocation13]
    $region29: #{tpu_custom_call.1} parent=1 // pred_fallthru
      _
    // Predicated region
    $region30: #{tpu_custom_call.1} parent=1 // pred_check
      _
    $region31: #{tpu_custom_call.1} parent=1 // pred_check_branch
      %96 = sbr.rel (0) target = $region33
    $region32: #{tpu_custom_call.1} parent=1 // pred_region
      %97 = dma.done [#allocation4], 6144
    $region33: #{tpu_custom_call.1} parent=1 // pred_fallthru
      _
    // Predicated region
    $region34: #{tpu_custom_call.1} parent=1 // pred_check
      _
    $region35: #{tpu_custom_call.1} parent=1 // pred_check_branch
      %99 = sbr.rel (0) target = $region37
    $region36: #{tpu_custom_call.1} parent=1 // pred_region
      %100 = dma.done [#allocation7], 1024
    $region37: #{tpu_custom_call.1} parent=1 // pred_fallthru
      _
    // Predicated region
    $region38: #{tpu_custom_call.1} parent=1 // pred_check
      _
    $region39: #{tpu_custom_call.1} parent=1 // pred_check_branch
      %102 = sbr.rel (0) target = $region41
    $region40: #{tpu_custom_call.1} parent=1 // pred_region
      %103 = dma.done [#allocation7], 32
    $region41: #{tpu_custom_call.1} parent=1 // pred_fallthru
      _
    // Predicated region
    $region42: #{tpu_custom_call.1} parent=1 // pred_check
      _
    $region43: #{tpu_custom_call.1} parent=1 // pred_check_branch
      %105 = sbr.rel (0) target = $region45
    $region44: #{tpu_custom_call.1} parent=1 // pred_region
      %106 = dma.done [#allocation10], 49152
    $region45: #{tpu_custom_call.1} parent=1 // pred_fallthru
      _
    // Predicated region
    $region46: #{tpu_custom_call.1} parent=1 // pred_check
      _
    $region47: #{tpu_custom_call.1} parent=1 // pred_check_branch
      %108 = sbr.rel (0) target = $region49
    $region48: #{tpu_custom_call.1} parent=1 // pred_region
      %109 = dma.done [#allocation10], 128
    $region49: #{tpu_custom_call.1} parent=1 // pred_fallthru
      _
    // Predicated region
    $region50: #{tpu_custom_call.1} parent=1 // pred_check
      _
    $region51: #{tpu_custom_call.1} parent=1 // pred_check_branch
      %111 = sbr.rel (0) target = $region53
    $region52: #{tpu_custom_call.1} parent=1 // pred_region
      %112 = dma.done [#allocation13], 16384
    $region53: #{tpu_custom_call.1} parent=1 // pred_fallthru
      _
    // Predicated region
    $region54: #{tpu_custom_call.1} parent=1 // pred_check
      _
    $region55: #{tpu_custom_call.1} parent=1 // pred_check_branch
      %114 = sbr.rel (0) target = $region57
    $region56: #{tpu_custom_call.1} parent=1 // pred_region
      %115 = dma.done [#allocation13], 16
    $region57: #{tpu_custom_call.1} parent=1 // pred_fallthru
      _
    %v116 = vld [vmem:[#allocation3] sm:$0xff]
    %v117 = vld [vmem:[#allocation3 + $0x8] sm:$0xff]
    %v118 = vld [vmem:[#allocation3 + $0x10] sm:$0xff]
    %v119 = vld [vmem:[#allocation3 + $0x18] sm:$0xff]
    %v120 = vld [vmem:[#allocation3 + $0x20] sm:$0xff]
    %v121 = vld [vmem:[#allocation3 + $0x28] sm:$0xff]
    %v122 = vld [vmem:[#allocation3 + $0x30] sm:$0x3f]
    %v123 = vld [vmem:[#allocation3 + $0x38] sm:$0x3f]
    %v124 = vld [vmem:[#allocation3 + $0xc0] sm:$0xff]
    %v125 = vld [vmem:[#allocation3 + $0xc8] sm:$0xff]
    %v126 = vld [vmem:[#allocation3 + $0xd0] sm:$0xff]
    %v127 = vld [vmem:[#allocation3 + $0xd8] sm:$0xff]
    %v128 = vld [vmem:[#allocation3 + $0xe0] sm:$0xff]
    %v129 = vld [vmem:[#allocation3 + $0xe8] sm:$0xff]
    %v130 = vld [vmem:[#allocation3 + $0xf0] sm:$0x3f]
    %v131 = vld [vmem:[#allocation3 + $0xf8] sm:$0x3f]
    %v132 = vld [vmem:[#allocation6] ss:$8 sm:$0x3]
    %v134 = vlaneseq
    %v135 = vshrl.u32 %v134, 7
    %v136 = vsub.s32 0, %v135
    %v137 = vrot.slane %v132, %v136
    %v138 = vlaneseq
    %v139 = vshrl.u32 %v138, 7
    %v140 = vsub.s32 1, %v139
    %v141 = vrot.slane %v132, %v140
    %v144 = vmul.f32 %v116, %v137
    %v145 = vmul.f32 %v117, %v141
    %v146 = vmul.f32 %v118, %v137
    %v147 = vmul.f32 %v119, %v141
    %v148 = vmul.f32 %v120, %v137
    %v149 = vmul.f32 %v121, %v141
    %v150 = vmul.f32 %v122, %v137
    %v151 = vmul.f32 %v123, %v141
    %v152 = vmul.f32 %v124, %v137
    %v153 = vmul.f32 %v125, %v141
    %v154 = vmul.f32 %v126, %v137
    %v155 = vmul.f32 %v127, %v141
    %v156 = vmul.f32 %v128, %v137
    %v157 = vmul.f32 %v129, %v141
    %v158 = vmul.f32 %v130, %v137
    %v159 = vmul.f32 %v131, %v141
    %v160 = vadd.f32 %v144, 0.0
    %v161 = vadd.f32 %v145, 0.0
    %v162 = vadd.f32 %v146, 0.0
    %v163 = vadd.f32 %v147, 0.0
    %v164 = vadd.f32 %v148, 0.0
    %v165 = vadd.f32 %v149, 0.0
    %v166 = vadd.f32 %v150, 0.0
    %v167 = vadd.f32 %v151, 0.0
    %v168 = vadd.f32 %v152, 0.0
    %v169 = vadd.f32 %v153, 0.0
    %v170 = vadd.f32 %v154, 0.0
    %v171 = vadd.f32 %v155, 0.0
    %v172 = vadd.f32 %v156, 0.0
    %v173 = vadd.f32 %v157, 0.0
    %v174 = vadd.f32 %v158, 0.0
    %v175 = vadd.f32 %v159, 0.0
    %176 = vrot.lane.b32.xlu0 %v116, 120
    %v177 = vpop.permute.xlu0 %176
    %178 = vrot.lane.b32.xlu0 %v118, 120
    %v179 = vpop.permute.xlu0 %178
    %180 = vrot.lane.b32.xlu0 %v120, 120
    %v181 = vpop.permute.xlu0 %180
    %182 = vrot.lane.b32.xlu0 %v122, 120
    %v183 = vpop.permute.xlu0 %182
    %184 = vrot.lane.b32.xlu0 %v124, 120
    %v185 = vpop.permute.xlu0 %184
    %186 = vrot.lane.b32.xlu0 %v126, 120
    %v187 = vpop.permute.xlu0 %186
    %188 = vrot.lane.b32.xlu0 %v128, 120
    %v189 = vpop.permute.xlu0 %188
    %190 = vrot.lane.b32.xlu0 %v130, 120
    %v191 = vpop.permute.xlu0 %190
    %192 = vrot.lane.b32.xlu0 %v117, 120
    %v193 = vpop.permute.xlu0 %192
    %194 = vrot.lane.b32.xlu0 %v119, 120
    %v195 = vpop.permute.xlu0 %194
    %196 = vrot.lane.b32.xlu0 %v121, 120
    %v197 = vpop.permute.xlu0 %196
    %198 = vrot.lane.b32.xlu0 %v123, 120
    %v199 = vpop.permute.xlu0 %198
    %200 = vrot.lane.b32.xlu0 %v125, 120
    %v201 = vpop.permute.xlu0 %200
    %202 = vrot.lane.b32.xlu0 %v127, 120
    %v203 = vpop.permute.xlu0 %202
    %204 = vrot.lane.b32.xlu0 %v129, 120
    %v205 = vpop.permute.xlu0 %204
    %206 = vrot.lane.b32.xlu0 %v131, 120
    %v207 = vpop.permute.xlu0 %206
    %v208 = vlaneseq
    %v209 = vand.u32 %v208, 127
    %vm210 = vcmp.lt.s32.totalorder %v209, 120
    %v211 = vsel %vm210, %v177, %v193
    %v212 = vsel %vm210, %v179, %v195
    %v213 = vsel %vm210, %v181, %v197
    %v214 = vsel %vm210, %v183, %v199
    %v215 = vsel %vm210, %v185, %v201
    %v216 = vsel %vm210, %v187, %v203
    %v217 = vsel %vm210, %v189, %v205
    %v218 = vsel %vm210, %v191, %v207
    %v219 = vsel %vm210, %v193, %v177
    %v220 = vsel %vm210, %v195, %v179
    %v221 = vsel %vm210, %v197, %v181
    %v222 = vsel %vm210, %v199, %v183
    %v223 = vsel %vm210, %v201, %v185
    %v224 = vsel %vm210, %v203, %v187
    %v225 = vsel %vm210, %v205, %v189
    %v226 = vsel %vm210, %v207, %v191
    %s227 = scalar_lea.vmem [#allocation6], 1
    %v228 = vld [vmem:[%s227] ss:$8 sm:$0x3]
    %v230 = vlaneseq
    %v231 = vshrl.u32 %v230, 7
    %v232 = vsub.s32 0, %v231
    %v233 = vrot.slane %v228, %v232
    %v234 = vlaneseq
    %v235 = vshrl.u32 %v234, 7
    %v236 = vsub.s32 1, %v235
    %v237 = vrot.slane %v228, %v236
    %v240 = vmul.f32 %v211, %v233
    %v241 = vmul.f32 %v219, %v237
    %v242 = vmul.f32 %v212, %v233
    %v243 = vmul.f32 %v220, %v237
    %v244 = vmul.f32 %v213, %v233
    %v245 = vmul.f32 %v221, %v237
    %v246 = vmul.f32 %v214, %v233
    %v247 = vmul.f32 %v222, %v237
    %v248 = vmul.f32 %v215, %v233
    %v249 = vmul.f32 %v223, %v237
    %v250 = vmul.f32 %v216, %v233
    %v251 = vmul.f32 %v224, %v237
    %v252 = vmul.f32 %v217, %v233
    %v253 = vmul.f32 %v225, %v237
    %v254 = vmul.f32 %v218, %v233
    %v255 = vmul.f32 %v226, %v237
    %v256 = vadd.f32 %v160, %v240
    %v257 = vadd.f32 %v161, %v241
    %v258 = vadd.f32 %v162, %v242
    %v259 = vadd.f32 %v163, %v243
    %v260 = vadd.f32 %v164, %v244
    %v261 = vadd.f32 %v165, %v245
    %v262 = vadd.f32 %v166, %v246
    %v263 = vadd.f32 %v167, %v247
    %v264 = vadd.f32 %v168, %v248
    %v265 = vadd.f32 %v169, %v249
    %v266 = vadd.f32 %v170, %v250
    %v267 = vadd.f32 %v171, %v251
    %v268 = vadd.f32 %v172, %v252
    %v269 = vadd.f32 %v173, %v253
    %v270 = vadd.f32 %v174, %v254
    %v271 = vadd.f32 %v175, %v255
    %272 = vrot.lane.b32.xlu0 %v116, 112
    %v273 = vpop.permute.xlu0 %272
    %274 = vrot.lane.b32.xlu0 %v118, 112
    %v275 = vpop.permute.xlu0 %274
    %276 = vrot.lane.b32.xlu0 %v120, 112
    %v277 = vpop.permute.xlu0 %276
    %278 = vrot.lane.b32.xlu0 %v122, 112
    %v279 = vpop.permute.xlu0 %278
    %280 = vrot.lane.b32.xlu0 %v124, 112
    %v281 = vpop.permute.xlu0 %280
    %282 = vrot.lane.b32.xlu0 %v126, 112
    %v283 = vpop.permute.xlu0 %282
    %284 = vrot.lane.b32.xlu0 %v128, 112
    %v285 = vpop.permute.xlu0 %284
    %286 = vrot.lane.b32.xlu0 %v130, 112
    %v287 = vpop.permute.xlu0 %286
    %288 = vrot.lane.b32.xlu0 %v117, 112
    %v289 = vpop.permute.xlu0 %288
    %290 = vrot.lane.b32.xlu0 %v119, 112
    %v291 = vpop.permute.xlu0 %290
    %292 = vrot.lane.b32.xlu0 %v121, 112
    %v293 = vpop.permute.xlu0 %292
    %294 = vrot.lane.b32.xlu0 %v123, 112
    %v295 = vpop.permute.xlu0 %294
    %296 = vrot.lane.b32.xlu0 %v125, 112
    %v297 = vpop.permute.xlu0 %296
    %298 = vrot.lane.b32.xlu0 %v127, 112
    %v299 = vpop.permute.xlu0 %298
    %300 = vrot.lane.b32.xlu0 %v129, 112
    %v301 = vpop.permute.xlu0 %300
    %302 = vrot.lane.b32.xlu0 %v131, 112
    %v303 = vpop.permute.xlu0 %302
    %vm304 = vcmp.lt.s32.totalorder %v209, 112
    %v305 = vsel %vm304, %v273, %v289
    %v306 = vsel %vm304, %v275, %v291
    %v307 = vsel %vm304, %v277, %v293
    %v308 = vsel %vm304, %v279, %v295
    %v309 = vsel %vm304, %v281, %v297
    %v310 = vsel %vm304, %v283, %v299
    %v311 = vsel %vm304, %v285, %v301
    %v312 = vsel %vm304, %v287, %v303
    %v313 = vsel %vm304, %v289, %v273
    %v314 = vsel %vm304, %v291, %v275
    %v315 = vsel %vm304, %v293, %v277
    %v316 = vsel %vm304, %v295, %v279
    %v317 = vsel %vm304, %v297, %v281
    %v318 = vsel %vm304, %v299, %v283
    %v319 = vsel %vm304, %v301, %v285
    %v320 = vsel %vm304, %v303, %v287
    %s321 = scalar_lea.vmem [#allocation6], 2
    %v322 = vld [vmem:[%s321] ss:$8 sm:$0x3]
    %v324 = vlaneseq
    %v325 = vshrl.u32 %v324, 7
    %v326 = vsub.s32 0, %v325
    %v327 = vrot.slane %v322, %v326
    %v328 = vlaneseq
    %v329 = vshrl.u32 %v328, 7
    %v330 = vsub.s32 1, %v329
    %v331 = vrot.slane %v322, %v330
    %v334 = vmul.f32 %v305, %v327
    %v335 = vmul.f32 %v313, %v331
    %v336 = vmul.f32 %v306, %v327
    %v337 = vmul.f32 %v314, %v331
    %v338 = vmul.f32 %v307, %v327
    %v339 = vmul.f32 %v315, %v331
    %v340 = vmul.f32 %v308, %v327
    %v341 = vmul.f32 %v316, %v331
    %v342 = vmul.f32 %v309, %v327
    %v343 = vmul.f32 %v317, %v331
    %v344 = vmul.f32 %v310, %v327
    %v345 = vmul.f32 %v318, %v331
    %v346 = vmul.f32 %v311, %v327
    %v347 = vmul.f32 %v319, %v331
    %v348 = vmul.f32 %v312, %v327
    %v349 = vmul.f32 %v320, %v331
    %v350 = vadd.f32 %v256, %v334
    %v351 = vadd.f32 %v257, %v335
    %v352 = vadd.f32 %v258, %v336
    %v353 = vadd.f32 %v259, %v337
    %v354 = vadd.f32 %v260, %v338
    %v355 = vadd.f32 %v261, %v339
    %v356 = vadd.f32 %v262, %v340
    %v357 = vadd.f32 %v263, %v341
    %v358 = vadd.f32 %v264, %v342
    %v359 = vadd.f32 %v265, %v343
    %v360 = vadd.f32 %v266, %v344
    %v361 = vadd.f32 %v267, %v345
    %v362 = vadd.f32 %v268, %v346
    %v363 = vadd.f32 %v269, %v347
    %v364 = vadd.f32 %v270, %v348
    %v365 = vadd.f32 %v271, %v349
    %v366 = vld [vmem:[#allocation3] sm:$0xfe]
    %v367 = vld [vmem:[#allocation3 + $0x8] sm:$0xfe]
    %v368 = vld [vmem:[#allocation3 + $0x30] sm:$0x7f]
    %v369 = vld [vmem:[#allocation3 + $0x38] sm:$0x7f]
    %v370 = vld [vmem:[#allocation3 + $0xc0] sm:$0xfe]
    %v371 = vld [vmem:[#allocation3 + $0xc8] sm:$0xfe]
    %v372 = vld [vmem:[#allocation3 + $0xf0] sm:$0x7f]
    %v373 = vld [vmem:[#allocation3 + $0xf8] sm:$0x7f]
    %s374 = scalar_lea.vmem [#allocation6], 3
    %v375 = vld [vmem:[%s374] ss:$8 sm:$0x3]
    %v377 = vlaneseq
    %v378 = vshrl.u32 %v377, 7
    %v379 = vsub.s32 0, %v378
    %v380 = vrot.slane %v375, %v379
    %v381 = vlaneseq
    %v382 = vshrl.u32 %v381, 7
    %v383 = vsub.s32 1, %v382
    %v384 = vrot.slane %v375, %v383
    %v387 = vmul.f32 %v366, %v380
    %v388 = vmul.f32 %v367, %v384
    %v389 = vmul.f32 %v118, %v380
    %v390 = vmul.f32 %v119, %v384
    %v391 = vmul.f32 %v120, %v380
    %v392 = vmul.f32 %v121, %v384
    %v393 = vmul.f32 %v368, %v380
    %v394 = vmul.f32 %v369, %v384
    %v395 = vmul.f32 %v370, %v380
    %v396 = vmul.f32 %v371, %v384
    %v397 = vmul.f32 %v126, %v380
    %v398 = vmul.f32 %v127, %v384
    %v399 = vmul.f32 %v128, %v380
    %v400 = vmul.f32 %v129, %v384
    %v401 = vmul.f32 %v372, %v380
    %v402 = vmul.f32 %v373, %v384
    %vm419 = vcmask 1046528
    %v420 = vrot.slane %v387, 1
    %v421 = vrot.slane %v389, 1
    %v422 = vsel %vm419, %v420, %v421
    %v423 = vrot.slane %v388, 1
    %v424 = vrot.slane %v390, 1
    %v425 = vsel %vm419, %v423, %v424
    %v426 = vrot.slane %v391, 1
    %v427 = vsel %vm419, %v421, %v426
    %v428 = vrot.slane %v392, 1
    %v429 = vsel %vm419, %v424, %v428
    %v430 = vrot.slane %v393, 1
    %v431 = vsel %vm419, %v426, %v430
    %v432 = vrot.slane %v394, 1
    %v433 = vsel %vm419, %v428, %v432
    %v434 = vrot.slane %v395, 1
    %v435 = vrot.slane %v397, 1
    %v436 = vsel %vm419, %v434, %v435
    %v437 = vrot.slane %v396, 1
    %v438 = vrot.slane %v398, 1
    %v439 = vsel %vm419, %v437, %v438
    %v440 = vrot.slane %v399, 1
    %v441 = vsel %vm419, %v435, %v440
    %v442 = vrot.slane %v400, 1
    %v443 = vsel %vm419, %v438, %v442
    %v444 = vrot.slane %v401, 1
    %v445 = vsel %vm419, %v440, %v444
    %v446 = vrot.slane %v402, 1
    %v447 = vsel %vm419, %v442, %v446
    %v464 = vadd.f32 %v350, %v422
    %v465 = vadd.f32 %v351, %v425
    %v466 = vadd.f32 %v352, %v427
    %v467 = vadd.f32 %v353, %v429
    %v468 = vadd.f32 %v354, %v431
    %v469 = vadd.f32 %v355, %v433
    %v470 = vadd.f32 %v356, %v430
    %v471 = vadd.f32 %v357, %v432
    %v472 = vadd.f32 %v358, %v436
    %v473 = vadd.f32 %v359, %v439
    %v474 = vadd.f32 %v360, %v441
    %v475 = vadd.f32 %v361, %v443
    %v476 = vadd.f32 %v362, %v445
    %v477 = vadd.f32 %v363, %v447
    %v478 = vadd.f32 %v364, %v444
    %v479 = vadd.f32 %v365, %v446
    %v496 = vrot.slane %v366, 1
    %v497 = vrot.slane %v118, 1
    %v498 = vsel %vm419, %v496, %v497
    %v499 = vrot.slane %v367, 1
    %v500 = vrot.slane %v119, 1
    %v501 = vsel %vm419, %v499, %v500
    %v502 = vrot.slane %v120, 1
    %v503 = vsel %vm419, %v497, %v502
    %v504 = vrot.slane %v121, 1
    %v505 = vsel %vm419, %v500, %v504
    %v506 = vrot.slane %v368, 1
    %v507 = vsel %vm419, %v502, %v506
    %v508 = vrot.slane %v369, 1
    %v509 = vsel %vm419, %v504, %v508
    %v510 = vrot.slane %v370, 1
    %v511 = vrot.slane %v126, 1
    %v512 = vsel %vm419, %v510, %v511
    %v513 = vrot.slane %v371, 1
    %v514 = vrot.slane %v127, 1
    %v515 = vsel %vm419, %v513, %v514
    %v516 = vrot.slane %v128, 1
    %v517 = vsel %vm419, %v511, %v516
    %v518 = vrot.slane %v129, 1
    %v519 = vsel %vm419, %v514, %v518
    %v520 = vrot.slane %v372, 1
    %v521 = vsel %vm419, %v516, %v520
    %v522 = vrot.slane %v373, 1
    %v523 = vsel %vm419, %v518, %v522
    %540 = vrot.lane.b32.xlu0 %v498, 120
    %v541 = vpop.permute.xlu0 %540
    %542 = vrot.lane.b32.xlu0 %v503, 120
    %v543 = vpop.permute.xlu0 %542
    %544 = vrot.lane.b32.xlu0 %v507, 120
    %v545 = vpop.permute.xlu0 %544
    %546 = vrot.lane.b32.xlu0 %v506, 120
    %v547 = vpop.permute.xlu0 %546
    %548 = vrot.lane.b32.xlu0 %v512, 120
    %v549 = vpop.permute.xlu0 %548
    %550 = vrot.lane.b32.xlu0 %v517, 120
    %v551 = vpop.permute.xlu0 %550
    %552 = vrot.lane.b32.xlu0 %v521, 120
    %v553 = vpop.permute.xlu0 %552
    %554 = vrot.lane.b32.xlu0 %v520, 120
    %v555 = vpop.permute.xlu0 %554
    %556 = vrot.lane.b32.xlu0 %v501, 120
    %v557 = vpop.permute.xlu0 %556
    %558 = vrot.lane.b32.xlu0 %v505, 120
    %v559 = vpop.permute.xlu0 %558
    %560 = vrot.lane.b32.xlu0 %v509, 120
    %v561 = vpop.permute.xlu0 %560
    %562 = vrot.lane.b32.xlu0 %v508, 120
    %v563 = vpop.permute.xlu0 %562
    %564 = vrot.lane.b32.xlu0 %v515, 120
    %v565 = vpop.permute.xlu0 %564
    %566 = vrot.lane.b32.xlu0 %v519, 120
    %v567 = vpop.permute.xlu0 %566
    %568 = vrot.lane.b32.xlu0 %v523, 120
    %v569 = vpop.permute.xlu0 %568
    %570 = vrot.lane.b32.xlu0 %v522, 120
    %v571 = vpop.permute.xlu0 %570
    %v572 = vsel %vm210, %v541, %v557
    %v573 = vsel %vm210, %v543, %v559
    %v574 = vsel %vm210, %v545, %v561
    %v575 = vsel %vm210, %v547, %v563
    %v576 = vsel %vm210, %v549, %v565
    %v577 = vsel %vm210, %v551, %v567
    %v578 = vsel %vm210, %v553, %v569
    %v579 = vsel %vm210, %v555, %v571
    %v580 = vsel %vm210, %v557, %v541
    %v581 = vsel %vm210, %v559, %v543
    %v582 = vsel %vm210, %v561, %v545
    %v583 = vsel %vm210, %v563, %v547
    %v584 = vsel %vm210, %v565, %v549
    %v585 = vsel %vm210, %v567, %v551
    %v586 = vsel %vm210, %v569, %v553
    %v587 = vsel %vm210, %v571, %v555
    %s588 = scalar_lea.vmem [#allocation6], 4
    %v589 = vld [vmem:[%s588] ss:$8 sm:$0x3]
    %v591 = vlaneseq
    %v592 = vshrl.u32 %v591, 7
    %v593 = vsub.s32 0, %v592
    %v594 = vrot.slane %v589, %v593
    %v595 = vlaneseq
    %v596 = vshrl.u32 %v595, 7
    %v597 = vsub.s32 1, %v596
    %v598 = vrot.slane %v589, %v597
    %v601 = vmul.f32 %v572, %v594
    %v602 = vmul.f32 %v580, %v598
    %v603 = vmul.f32 %v573, %v594
    %v604 = vmul.f32 %v581, %v598
    %v605 = vmul.f32 %v574, %v594
    %v606 = vmul.f32 %v582, %v598
    %v607 = vmul.f32 %v575, %v594
    %v608 = vmul.f32 %v583, %v598
    %v609 = vmul.f32 %v576, %v594
    %v610 = vmul.f32 %v584, %v598
    %v611 = vmul.f32 %v577, %v594
    %v612 = vmul.f32 %v585, %v598
    %v613 = vmul.f32 %v578, %v594
    %v614 = vmul.f32 %v586, %v598
    %v615 = vmul.f32 %v579, %v594
    %v616 = vmul.f32 %v587, %v598
    %v617 = vadd.f32 %v464, %v601
    %v618 = vadd.f32 %v465, %v602
    %v619 = vadd.f32 %v466, %v603
    %v620 = vadd.f32 %v467, %v604
    %v621 = vadd.f32 %v468, %v605
    %v622 = vadd.f32 %v469, %v606
    %v623 = vadd.f32 %v470, %v607
    %v624 = vadd.f32 %v471, %v608
    %v625 = vadd.f32 %v472, %v609
    %v626 = vadd.f32 %v473, %v610
    %v627 = vadd.f32 %v474, %v611
    %v628 = vadd.f32 %v475, %v612
    %v629 = vadd.f32 %v476, %v613
    %v630 = vadd.f32 %v477, %v614
    %v631 = vadd.f32 %v478, %v615
    %v632 = vadd.f32 %v479, %v616
    %633 = vrot.lane.b32.xlu0 %v498, 112
    %v634 = vpop.permute.xlu0 %633
    %635 = vrot.lane.b32.xlu0 %v503, 112
    %v636 = vpop.permute.xlu0 %635
    %637 = vrot.lane.b32.xlu0 %v507, 112
    %v638 = vpop.permute.xlu0 %637
    %639 = vrot.lane.b32.xlu0 %v506, 112
    %v640 = vpop.permute.xlu0 %639
    %641 = vrot.lane.b32.xlu0 %v512, 112
    %v642 = vpop.permute.xlu0 %641
    %643 = vrot.lane.b32.xlu0 %v517, 112
    %v644 = vpop.permute.xlu0 %643
    %645 = vrot.lane.b32.xlu0 %v521, 112
    %v646 = vpop.permute.xlu0 %645
    %647 = vrot.lane.b32.xlu0 %v520, 112
    %v648 = vpop.permute.xlu0 %647
    %649 = vrot.lane.b32.xlu0 %v501, 112
    %v650 = vpop.permute.xlu0 %649
    %651 = vrot.lane.b32.xlu0 %v505, 112
    %v652 = vpop.permute.xlu0 %651
    %653 = vrot.lane.b32.xlu0 %v509, 112
    %v654 = vpop.permute.xlu0 %653
    %655 = vrot.lane.b32.xlu0 %v508, 112
    %v656 = vpop.permute.xlu0 %655
    %657 = vrot.lane.b32.xlu0 %v515, 112
    %v658 = vpop.permute.xlu0 %657
    %659 = vrot.lane.b32.xlu0 %v519, 112
    %v660 = vpop.permute.xlu0 %659
    %661 = vrot.lane.b32.xlu0 %v523, 112
    %v662 = vpop.permute.xlu0 %661
    %663 = vrot.lane.b32.xlu0 %v522, 112
    %v664 = vpop.permute.xlu0 %663
    %v665 = vsel %vm304, %v634, %v650
    %v666 = vsel %vm304, %v636, %v652
    %v667 = vsel %vm304, %v638, %v654
    %v668 = vsel %vm304, %v640, %v656
    %v669 = vsel %vm304, %v642, %v658
    %v670 = vsel %vm304, %v644, %v660
    %v671 = vsel %vm304, %v646, %v662
    %v672 = vsel %vm304, %v648, %v664
    %v673 = vsel %vm304, %v650, %v634
    %v674 = vsel %vm304, %v652, %v636
    %v675 = vsel %vm304, %v654, %v638
    %v676 = vsel %vm304, %v656, %v640
    %v677 = vsel %vm304, %v658, %v642
    %v678 = vsel %vm304, %v660, %v644
    %v679 = vsel %vm304, %v662, %v646
    %v680 = vsel %vm304, %v664, %v648
    %s681 = scalar_lea.vmem [#allocation6], 5
    %v682 = vld [vmem:[%s681] ss:$8 sm:$0x3]
    %v684 = vlaneseq
    %v685 = vshrl.u32 %v684, 7
    %v686 = vsub.s32 0, %v685
    %v687 = vrot.slane %v682, %v686
    %v688 = vlaneseq
    %v689 = vshrl.u32 %v688, 7
    %v690 = vsub.s32 1, %v689
    %v691 = vrot.slane %v682, %v690
    %v694 = vmul.f32 %v665, %v687
    %v695 = vmul.f32 %v673, %v691
    %v696 = vmul.f32 %v666, %v687
    %v697 = vmul.f32 %v674, %v691
    %v698 = vmul.f32 %v667, %v687
    %v699 = vmul.f32 %v675, %v691
    %v700 = vmul.f32 %v668, %v687
    %v701 = vmul.f32 %v676, %v691
    %v702 = vmul.f32 %v669, %v687
    %v703 = vmul.f32 %v677, %v691
    %v704 = vmul.f32 %v670, %v687
    %v705 = vmul.f32 %v678, %v691
    %v706 = vmul.f32 %v671, %v687
    %v707 = vmul.f32 %v679, %v691
    %v708 = vmul.f32 %v672, %v687
    %v709 = vmul.f32 %v680, %v691
    %v710 = vadd.f32 %v617, %v694
    %v711 = vadd.f32 %v618, %v695
    %v712 = vadd.f32 %v619, %v696
    %v713 = vadd.f32 %v620, %v697
    %v714 = vadd.f32 %v621, %v698
    %v715 = vadd.f32 %v622, %v699
    %v716 = vadd.f32 %v623, %v700
    %v717 = vadd.f32 %v624, %v701
    %v718 = vadd.f32 %v625, %v702
    %v719 = vadd.f32 %v626, %v703
    %v720 = vadd.f32 %v627, %v704
    %v721 = vadd.f32 %v628, %v705
    %v722 = vadd.f32 %v629, %v706
    %v723 = vadd.f32 %v630, %v707
    %v724 = vadd.f32 %v631, %v708
    %v725 = vadd.f32 %v632, %v709
    %v726 = vld [vmem:[#allocation3] sm:$0xfc]
    %v727 = vld [vmem:[#allocation3 + $0x8] sm:$0xfc]
    %v728 = vld [vmem:[#allocation3 + $0x30] sm:$0xff]
    %v729 = vld [vmem:[#allocation3 + $0x38] sm:$0xff]
    %v730 = vld [vmem:[#allocation3 + $0xc0] sm:$0xfc]
    %v731 = vld [vmem:[#allocation3 + $0xc8] sm:$0xfc]
    %v732 = vld [vmem:[#allocation3 + $0xf0] sm:$0xff]
    %v733 = vld [vmem:[#allocation3 + $0xf8] sm:$0xff]
    %s734 = scalar_lea.vmem [#allocation6], 6
    %v735 = vld [vmem:[%s734] ss:$8 sm:$0x3]
    %v737 = vlaneseq
    %v738 = vshrl.u32 %v737, 7
    %v739 = vsub.s32 0, %v738
    %v740 = vrot.slane %v735, %v739
    %v741 = vlaneseq
    %v742 = vshrl.u32 %v741, 7
    %v743 = vsub.s32 1, %v742
    %v744 = vrot.slane %v735, %v743
    %v747 = vmul.f32 %v726, %v740
    %v748 = vmul.f32 %v727, %v744
    %v749 = vmul.f32 %v118, %v740
    %v750 = vmul.f32 %v119, %v744
    %v751 = vmul.f32 %v120, %v740
    %v752 = vmul.f32 %v121, %v744
    %v753 = vmul.f32 %v728, %v740
    %v754 = vmul.f32 %v729, %v744
    %v755 = vmul.f32 %v730, %v740
    %v756 = vmul.f32 %v731, %v744
    %v757 = vmul.f32 %v126, %v740
    %v758 = vmul.f32 %v127, %v744
    %v759 = vmul.f32 %v128, %v740
    %v760 = vmul.f32 %v129, %v744
    %v761 = vmul.f32 %v732, %v740
    %v762 = vmul.f32 %v733, %v744
    %vm779 = vcmask 1045504
    %v780 = vrot.slane %v747, 2
    %v781 = vrot.slane %v749, 2
    %v782 = vsel %vm779, %v780, %v781
    %v783 = vrot.slane %v748, 2
    %v784 = vrot.slane %v750, 2
    %v785 = vsel %vm779, %v783, %v784
    %v786 = vrot.slane %v751, 2
    %v787 = vsel %vm779, %v781, %v786
    %v788 = vrot.slane %v752, 2
    %v789 = vsel %vm779, %v784, %v788
    %v790 = vrot.slane %v753, 2
    %v791 = vsel %vm779, %v786, %v790
    %v792 = vrot.slane %v754, 2
    %v793 = vsel %vm779, %v788, %v792
    %v794 = vrot.slane %v755, 2
    %v795 = vrot.slane %v757, 2
    %v796 = vsel %vm779, %v794, %v795
    %v797 = vrot.slane %v756, 2
    %v798 = vrot.slane %v758, 2
    %v799 = vsel %vm779, %v797, %v798
    %v800 = vrot.slane %v759, 2
    %v801 = vsel %vm779, %v795, %v800
    %v802 = vrot.slane %v760, 2
    %v803 = vsel %vm779, %v798, %v802
    %v804 = vrot.slane %v761, 2
    %v805 = vsel %vm779, %v800, %v804
    %v806 = vrot.slane %v762, 2
    %v807 = vsel %vm779, %v802, %v806
    %v824 = vadd.f32 %v710, %v782
    %v825 = vadd.f32 %v711, %v785
    %v826 = vadd.f32 %v712, %v787
    %v827 = vadd.f32 %v713, %v789
    %v828 = vadd.f32 %v714, %v791
    %v829 = vadd.f32 %v715, %v793
    %v830 = vadd.f32 %v716, %v790
    %v831 = vadd.f32 %v717, %v792
    %v832 = vadd.f32 %v718, %v796
    %v833 = vadd.f32 %v719, %v799
    %v834 = vadd.f32 %v720, %v801
    %v835 = vadd.f32 %v721, %v803
    %v836 = vadd.f32 %v722, %v805
    %v837 = vadd.f32 %v723, %v807
    %v838 = vadd.f32 %v724, %v804
    %v839 = vadd.f32 %v725, %v806
    %v848 = vrot.slane %v726, 2
    %v849 = vrot.slane %v118, 2
    %v850 = vsel %vm779, %v848, %v849
    %v851 = vrot.slane %v727, 2
    %v852 = vrot.slane %v119, 2
    %v853 = vsel %vm779, %v851, %v852
    %v854 = vrot.slane %v120, 2
    %v855 = vsel %vm779, %v849, %v854
    %v856 = vrot.slane %v121, 2
    %v857 = vsel %vm779, %v852, %v856
    %v858 = vrot.slane %v728, 2
    %v859 = vsel %vm779, %v854, %v858
    %v860 = vrot.slane %v729, 2
    %v861 = vsel %vm779, %v856, %v860
    %v862 = vrot.slane %v730, 2
    %v863 = vrot.slane %v126, 2
    %v864 = vsel %vm779, %v862, %v863
    %v865 = vrot.slane %v731, 2
    %v866 = vrot.slane %v127, 2
    %v867 = vsel %vm779, %v865, %v866
    %v868 = vrot.slane %v128, 2
    %v869 = vsel %vm779, %v863, %v868
    %v870 = vrot.slane %v129, 2
    %v871 = vsel %vm779, %v866, %v870
    %v872 = vrot.slane %v732, 2
    %v873 = vsel %vm779, %v868, %v872
    %v874 = vrot.slane %v733, 2
    %v875 = vsel %vm779, %v870, %v874
    %892 = vrot.lane.b32.xlu0 %v850, 120
    %v893 = vpop.permute.xlu0 %892
    %894 = vrot.lane.b32.xlu0 %v855, 120
    %v895 = vpop.permute.xlu0 %894
    %896 = vrot.lane.b32.xlu0 %v859, 120
    %v897 = vpop.permute.xlu0 %896
    %898 = vrot.lane.b32.xlu0 %v858, 120
    %v899 = vpop.permute.xlu0 %898
    %900 = vrot.lane.b32.xlu0 %v864, 120
    %v901 = vpop.permute.xlu0 %900
    %902 = vrot.lane.b32.xlu0 %v869, 120
    %v903 = vpop.permute.xlu0 %902
    %904 = vrot.lane.b32.xlu0 %v873, 120
    %v905 = vpop.permute.xlu0 %904
    %906 = vrot.lane.b32.xlu0 %v872, 120
    %v907 = vpop.permute.xlu0 %906
    %908 = vrot.lane.b32.xlu0 %v853, 120
    %v909 = vpop.permute.xlu0 %908
    %910 = vrot.lane.b32.xlu0 %v857, 120
    %v911 = vpop.permute.xlu0 %910
    %912 = vrot.lane.b32.xlu0 %v861, 120
    %v913 = vpop.permute.xlu0 %912
    %914 = vrot.lane.b32.xlu0 %v860, 120
    %v915 = vpop.permute.xlu0 %914
    %916 = vrot.lane.b32.xlu0 %v867, 120
    %v917 = vpop.permute.xlu0 %916
    %918 = vrot.lane.b32.xlu0 %v871, 120
    %v919 = vpop.permute.xlu0 %918
    %920 = vrot.lane.b32.xlu0 %v875, 120
    %v921 = vpop.permute.xlu0 %920
    %922 = vrot.lane.b32.xlu0 %v874, 120
    %v923 = vpop.permute.xlu0 %922
    %v924 = vsel %vm210, %v893, %v909
    %v925 = vsel %vm210, %v895, %v911
    %v926 = vsel %vm210, %v897, %v913
    %v927 = vsel %vm210, %v899, %v915
    %v928 = vsel %vm210, %v901, %v917
    %v929 = vsel %vm210, %v903, %v919
    %v930 = vsel %vm210, %v905, %v921
    %v931 = vsel %vm210, %v907, %v923
    %v932 = vsel %vm210, %v909, %v893
    %v933 = vsel %vm210, %v911, %v895
    %v934 = vsel %vm210, %v913, %v897
    %v935 = vsel %vm210, %v915, %v899
    %v936 = vsel %vm210, %v917, %v901
    %v937 = vsel %vm210, %v919, %v903
    %v938 = vsel %vm210, %v921, %v905
    %v939 = vsel %vm210, %v923, %v907
    %s940 = scalar_lea.vmem [#allocation6], 7
    %v941 = vld [vmem:[%s940] ss:$8 sm:$0x3]
    %v943 = vlaneseq
    %v944 = vshrl.u32 %v943, 7
    %v945 = vsub.s32 0, %v944
    %v946 = vrot.slane %v941, %v945
    %v947 = vlaneseq
    %v948 = vshrl.u32 %v947, 7
    %v949 = vsub.s32 1, %v948
    %v950 = vrot.slane %v941, %v949
    %v953 = vmul.f32 %v924, %v946
    %v954 = vmul.f32 %v932, %v950
    %v955 = vmul.f32 %v925, %v946
    %v956 = vmul.f32 %v933, %v950
    %v957 = vmul.f32 %v926, %v946
    %v958 = vmul.f32 %v934, %v950
    %v959 = vmul.f32 %v927, %v946
    %v960 = vmul.f32 %v935, %v950
    %v961 = vmul.f32 %v928, %v946
    %v962 = vmul.f32 %v936, %v950
    %v963 = vmul.f32 %v929, %v946
    %v964 = vmul.f32 %v937, %v950
    %v965 = vmul.f32 %v930, %v946
    %v966 = vmul.f32 %v938, %v950
    %v967 = vmul.f32 %v931, %v946
    %v968 = vmul.f32 %v939, %v950
    %v969 = vadd.f32 %v824, %v953
    %v970 = vadd.f32 %v825, %v954
    %v971 = vadd.f32 %v826, %v955
    %v972 = vadd.f32 %v827, %v956
    %v973 = vadd.f32 %v828, %v957
    %v974 = vadd.f32 %v829, %v958
    %v975 = vadd.f32 %v830, %v959
    %v976 = vadd.f32 %v831, %v960
    %v977 = vadd.f32 %v832, %v961
    %v978 = vadd.f32 %v833, %v962
    %v979 = vadd.f32 %v834, %v963
    %v980 = vadd.f32 %v835, %v964
    %v981 = vadd.f32 %v836, %v965
    %v982 = vadd.f32 %v837, %v966
    %v983 = vadd.f32 %v838, %v967
    %v984 = vadd.f32 %v839, %v968
    %985 = vrot.lane.b32.xlu0 %v850, 112
    %v986 = vpop.permute.xlu0 %985
    %987 = vrot.lane.b32.xlu0 %v855, 112
    %v988 = vpop.permute.xlu0 %987
    %989 = vrot.lane.b32.xlu0 %v859, 112
    %v990 = vpop.permute.xlu0 %989
    %991 = vrot.lane.b32.xlu0 %v858, 112
    %v992 = vpop.permute.xlu0 %991
    %993 = vrot.lane.b32.xlu0 %v864, 112
    %v994 = vpop.permute.xlu0 %993
    %995 = vrot.lane.b32.xlu0 %v869, 112
    %v996 = vpop.permute.xlu0 %995
    %997 = vrot.lane.b32.xlu0 %v873, 112
    %v998 = vpop.permute.xlu0 %997
    %999 = vrot.lane.b32.xlu0 %v872, 112
    %v1000 = vpop.permute.xlu0 %999
    %1001 = vrot.lane.b32.xlu0 %v853, 112
    %v1002 = vpop.permute.xlu0 %1001
    %1003 = vrot.lane.b32.xlu0 %v857, 112
    %v1004 = vpop.permute.xlu0 %1003
    %1005 = vrot.lane.b32.xlu0 %v861, 112
    %v1006 = vpop.permute.xlu0 %1005
    %1007 = vrot.lane.b32.xlu0 %v860, 112
    %v1008 = vpop.permute.xlu0 %1007
    %1009 = vrot.lane.b32.xlu0 %v867, 112
    %v1010 = vpop.permute.xlu0 %1009
    %1011 = vrot.lane.b32.xlu0 %v871, 112
    %v1012 = vpop.permute.xlu0 %1011
    %1013 = vrot.lane.b32.xlu0 %v875, 112
    %v1014 = vpop.permute.xlu0 %1013
    %1015 = vrot.lane.b32.xlu0 %v874, 112
    %v1016 = vpop.permute.xlu0 %1015
    %v1017 = vsel %vm304, %v986, %v1002
    %v1018 = vsel %vm304, %v988, %v1004
    %v1019 = vsel %vm304, %v990, %v1006
    %v1020 = vsel %vm304, %v992, %v1008
    %v1021 = vsel %vm304, %v994, %v1010
    %v1022 = vsel %vm304, %v996, %v1012
    %v1023 = vsel %vm304, %v998, %v1014
    %v1024 = vsel %vm304, %v1000, %v1016
    %v1025 = vsel %vm304, %v1002, %v986
    %v1026 = vsel %vm304, %v1004, %v988
    %v1027 = vsel %vm304, %v1006, %v990
    %v1028 = vsel %vm304, %v1008, %v992
    %v1029 = vsel %vm304, %v1010, %v994
    %v1030 = vsel %vm304, %v1012, %v996
    %v1031 = vsel %vm304, %v1014, %v998
    %v1032 = vsel %vm304, %v1016, %v1000
    %s1033 = scalar_lea.vmem [#allocation6], 16
    %v1034 = vld [vmem:[%s1033] ss:$8 sm:$0x3]
    %v1036 = vlaneseq
    %v1037 = vshrl.u32 %v1036, 7
    %v1038 = vsub.s32 0, %v1037
    %v1039 = vrot.slane %v1034, %v1038
    %v1040 = vlaneseq
    %v1041 = vshrl.u32 %v1040, 7
    %v1042 = vsub.s32 1, %v1041
    %v1043 = vrot.slane %v1034, %v1042
    %v1046 = vmul.f32 %v1017, %v1039
    %v1047 = vmul.f32 %v1025, %v1043
    %v1048 = vmul.f32 %v1018, %v1039
    %v1049 = vmul.f32 %v1026, %v1043
    %v1050 = vmul.f32 %v1019, %v1039
    %v1051 = vmul.f32 %v1027, %v1043
    %v1052 = vmul.f32 %v1020, %v1039
    %v1053 = vmul.f32 %v1028, %v1043
    %v1054 = vmul.f32 %v1021, %v1039
    %v1055 = vmul.f32 %v1029, %v1043
    %v1056 = vmul.f32 %v1022, %v1039
    %v1057 = vmul.f32 %v1030, %v1043
    %v1058 = vmul.f32 %v1023, %v1039
    %v1059 = vmul.f32 %v1031, %v1043
    %v1060 = vmul.f32 %v1024, %v1039
    %v1061 = vmul.f32 %v1032, %v1043
    %v1062 = vadd.f32 %v969, %v1046
    %v1063 = vadd.f32 %v970, %v1047
    %v1064 = vadd.f32 %v971, %v1048
    %v1065 = vadd.f32 %v972, %v1049
    %v1066 = vadd.f32 %v973, %v1050
    %v1067 = vadd.f32 %v974, %v1051
    %v1068 = vadd.f32 %v975, %v1052
    %v1069 = vadd.f32 %v976, %v1053
    %v1070 = vadd.f32 %v977, %v1054
    %v1071 = vadd.f32 %v978, %v1055
    %v1072 = vadd.f32 %v979, %v1056
    %v1073 = vadd.f32 %v980, %v1057
    %v1074 = vadd.f32 %v981, %v1058
    %v1075 = vadd.f32 %v982, %v1059
    %v1076 = vadd.f32 %v983, %v1060
    %v1077 = vadd.f32 %v984, %v1061
    %s1078 = scalar_lea.vmem [#allocation3], 64
    %v1079 = vld [vmem:[%s1078] sm:$0xff]
    %v1080 = vld [vmem:[%s1078 + $0x8] sm:$0xff]
    %v1081 = vld [vmem:[%s1078 + $0x10] sm:$0xff]
    %v1082 = vld [vmem:[%s1078 + $0x18] sm:$0xff]
    %v1083 = vld [vmem:[%s1078 + $0x20] sm:$0xff]
    %v1084 = vld [vmem:[%s1078 + $0x28] sm:$0xff]
    %v1085 = vld [vmem:[%s1078 + $0x30] sm:$0x3f]
    %v1086 = vld [vmem:[%s1078 + $0x38] sm:$0x3f]
    %v1087 = vld [vmem:[%s1078 + $0xc0] sm:$0xff]
    %v1088 = vld [vmem:[%s1078 + $0xc8] sm:$0xff]
    %v1089 = vld [vmem:[%s1078 + $0xd0] sm:$0xff]
    %v1090 = vld [vmem:[%s1078 + $0xd8] sm:$0xff]
    %v1091 = vld [vmem:[%s1078 + $0xe0] sm:$0xff]
    %v1092 = vld [vmem:[%s1078 + $0xe8] sm:$0xff]
    %v1093 = vld [vmem:[%s1078 + $0xf0] sm:$0x3f]
    %v1094 = vld [vmem:[%s1078 + $0xf8] sm:$0x3f]
    %s1095 = scalar_lea.vmem [#allocation6], 17
    %v1096 = vld [vmem:[%s1095] ss:$8 sm:$0x3]
    %v1098 = vlaneseq
    %v1099 = vshrl.u32 %v1098, 7
    %v1100 = vsub.s32 0, %v1099
    %v1101 = vrot.slane %v1096, %v1100
    %v1102 = vlaneseq
    %v1103 = vshrl.u32 %v1102, 7
    %v1104 = vsub.s32 1, %v1103
    %v1105 = vrot.slane %v1096, %v1104
    %v1108 = vmul.f32 %v1079, %v1101
    %v1109 = vmul.f32 %v1080, %v1105
    %v1110 = vmul.f32 %v1081, %v1101
    %v1111 = vmul.f32 %v1082, %v1105
    %v1112 = vmul.f32 %v1083, %v1101
    %v1113 = vmul.f32 %v1084, %v1105
    %v1114 = vmul.f32 %v1085, %v1101
    %v1115 = vmul.f32 %v1086, %v1105
    %v1116 = vmul.f32 %v1087, %v1101
    %v1117 = vmul.f32 %v1088, %v1105
    %v1118 = vmul.f32 %v1089, %v1101
    %v1119 = vmul.f32 %v1090, %v1105
    %v1120 = vmul.f32 %v1091, %v1101
    %v1121 = vmul.f32 %v1092, %v1105
    %v1122 = vmul.f32 %v1093, %v1101
    %v1123 = vmul.f32 %v1094, %v1105
    %v1124 = vadd.f32 %v1062, %v1108
    %v1125 = vadd.f32 %v1063, %v1109
    %v1126 = vadd.f32 %v1064, %v1110
    %v1127 = vadd.f32 %v1065, %v1111
    %v1128 = vadd.f32 %v1066, %v1112
    %v1129 = vadd.f32 %v1067, %v1113
    %v1130 = vadd.f32 %v1068, %v1114
    %v1131 = vadd.f32 %v1069, %v1115
    %v1132 = vadd.f32 %v1070, %v1116
    %v1133 = vadd.f32 %v1071, %v1117
    %v1134 = vadd.f32 %v1072, %v1118
    %v1135 = vadd.f32 %v1073, %v1119
    %v1136 = vadd.f32 %v1074, %v1120
    %v1137 = vadd.f32 %v1075, %v1121
    %v1138 = vadd.f32 %v1076, %v1122
    %v1139 = vadd.f32 %v1077, %v1123
    %1140 = vrot.lane.b32.xlu0 %v1079, 120
    %v1141 = vpop.permute.xlu0 %1140
    %1142 = vrot.lane.b32.xlu0 %v1081, 120
    %v1143 = vpop.permute.xlu0 %1142
    %1144 = vrot.lane.b32.xlu0 %v1083, 120
    %v1145 = vpop.permute.xlu0 %1144
    %1146 = vrot.lane.b32.xlu0 %v1085, 120
    %v1147 = vpop.permute.xlu0 %1146
    %1148 = vrot.lane.b32.xlu0 %v1087, 120
    %v1149 = vpop.permute.xlu0 %1148
    %1150 = vrot.lane.b32.xlu0 %v1089, 120
    %v1151 = vpop.permute.xlu0 %1150
    %1152 = vrot.lane.b32.xlu0 %v1091, 120
    %v1153 = vpop.permute.xlu0 %1152
    %1154 = vrot.lane.b32.xlu0 %v1093, 120
    %v1155 = vpop.permute.xlu0 %1154
    %1156 = vrot.lane.b32.xlu0 %v1080, 120
    %v1157 = vpop.permute.xlu0 %1156
    %1158 = vrot.lane.b32.xlu0 %v1082, 120
    %v1159 = vpop.permute.xlu0 %1158
    %1160 = vrot.lane.b32.xlu0 %v1084, 120
    %v1161 = vpop.permute.xlu0 %1160
    %1162 = vrot.lane.b32.xlu0 %v1086, 120
    %v1163 = vpop.permute.xlu0 %1162
    %1164 = vrot.lane.b32.xlu0 %v1088, 120
    %v1165 = vpop.permute.xlu0 %1164
    %1166 = vrot.lane.b32.xlu0 %v1090, 120
    %v1167 = vpop.permute.xlu0 %1166
    %1168 = vrot.lane.b32.xlu0 %v1092, 120
    %v1169 = vpop.permute.xlu0 %1168
    %1170 = vrot.lane.b32.xlu0 %v1094, 120
    %v1171 = vpop.permute.xlu0 %1170
    %v1172 = vsel %vm210, %v1141, %v1157
    %v1173 = vsel %vm210, %v1143, %v1159
    %v1174 = vsel %vm210, %v1145, %v1161
    %v1175 = vsel %vm210, %v1147, %v1163
    %v1176 = vsel %vm210, %v1149, %v1165
    %v1177 = vsel %vm210, %v1151, %v1167
    %v1178 = vsel %vm210, %v1153, %v1169
    %v1179 = vsel %vm210, %v1155, %v1171
    %v1180 = vsel %vm210, %v1157, %v1141
    %v1181 = vsel %vm210, %v1159, %v1143
    %v1182 = vsel %vm210, %v1161, %v1145
    %v1183 = vsel %vm210, %v1163, %v1147
    %v1184 = vsel %vm210, %v1165, %v1149
    %v1185 = vsel %vm210, %v1167, %v1151
    %v1186 = vsel %vm210, %v1169, %v1153
    %v1187 = vsel %vm210, %v1171, %v1155
    %s1188 = scalar_lea.vmem [#allocation6], 18
    %v1189 = vld [vmem:[%s1188] ss:$8 sm:$0x3]
    %v1191 = vlaneseq
    %v1192 = vshrl.u32 %v1191, 7
    %v1193 = vsub.s32 0, %v1192
    %v1194 = vrot.slane %v1189, %v1193
    %v1195 = vlaneseq
    %v1196 = vshrl.u32 %v1195, 7
    %v1197 = vsub.s32 1, %v1196
    %v1198 = vrot.slane %v1189, %v1197
    %v1201 = vmul.f32 %v1172, %v1194
    %v1202 = vmul.f32 %v1180, %v1198
    %v1203 = vmul.f32 %v1173, %v1194
    %v1204 = vmul.f32 %v1181, %v1198
    %v1205 = vmul.f32 %v1174, %v1194
    %v1206 = vmul.f32 %v1182, %v1198
    %v1207 = vmul.f32 %v1175, %v1194
    %v1208 = vmul.f32 %v1183, %v1198
    %v1209 = vmul.f32 %v1176, %v1194
    %v1210 = vmul.f32 %v1184, %v1198
    %v1211 = vmul.f32 %v1177, %v1194
    %v1212 = vmul.f32 %v1185, %v1198
    %v1213 = vmul.f32 %v1178, %v1194
    %v1214 = vmul.f32 %v1186, %v1198
    %v1215 = vmul.f32 %v1179, %v1194
    %v1216 = vmul.f32 %v1187, %v1198
    %v1217 = vadd.f32 %v1124, %v1201
    %v1218 = vadd.f32 %v1125, %v1202
    %v1219 = vadd.f32 %v1126, %v1203
    %v1220 = vadd.f32 %v1127, %v1204
    %v1221 = vadd.f32 %v1128, %v1205
    %v1222 = vadd.f32 %v1129, %v1206
    %v1223 = vadd.f32 %v1130, %v1207
    %v1224 = vadd.f32 %v1131, %v1208
    %v1225 = vadd.f32 %v1132, %v1209
    %v1226 = vadd.f32 %v1133, %v1210
    %v1227 = vadd.f32 %v1134, %v1211
    %v1228 = vadd.f32 %v1135, %v1212
    %v1229 = vadd.f32 %v1136, %v1213
    %v1230 = vadd.f32 %v1137, %v1214
    %v1231 = vadd.f32 %v1138, %v1215
    %v1232 = vadd.f32 %v1139, %v1216
    %1233 = vrot.lane.b32.xlu0 %v1079, 112
    %v1234 = vpop.permute.xlu0 %1233
    %1235 = vrot.lane.b32.xlu0 %v1081, 112
    %v1236 = vpop.permute.xlu0 %1235
    %1237 = vrot.lane.b32.xlu0 %v1083, 112
    %v1238 = vpop.permute.xlu0 %1237
    %1239 = vrot.lane.b32.xlu0 %v1085, 112
    %v1240 = vpop.permute.xlu0 %1239
    %1241 = vrot.lane.b32.xlu0 %v1087, 112
    %v1242 = vpop.permute.xlu0 %1241
    %1243 = vrot.lane.b32.xlu0 %v1089, 112
    %v1244 = vpop.permute.xlu0 %1243
    %1245 = vrot.lane.b32.xlu0 %v1091, 112
    %v1246 = vpop.permute.xlu0 %1245
    %1247 = vrot.lane.b32.xlu0 %v1093, 112
    %v1248 = vpop.permute.xlu0 %1247
    %1249 = vrot.lane.b32.xlu0 %v1080, 112
    %v1250 = vpop.permute.xlu0 %1249
    %1251 = vrot.lane.b32.xlu0 %v1082, 112
    %v1252 = vpop.permute.xlu0 %1251
    %1253 = vrot.lane.b32.xlu0 %v1084, 112
    %v1254 = vpop.permute.xlu0 %1253
    %1255 = vrot.lane.b32.xlu0 %v1086, 112
    %v1256 = vpop.permute.xlu0 %1255
    %1257 = vrot.lane.b32.xlu0 %v1088, 112
    %v1258 = vpop.permute.xlu0 %1257
    %1259 = vrot.lane.b32.xlu0 %v1090, 112
    %v1260 = vpop.permute.xlu0 %1259
    %1261 = vrot.lane.b32.xlu0 %v1092, 112
    %v1262 = vpop.permute.xlu0 %1261
    %1263 = vrot.lane.b32.xlu0 %v1094, 112
    %v1264 = vpop.permute.xlu0 %1263
    %v1265 = vsel %vm304, %v1234, %v1250
    %v1266 = vsel %vm304, %v1236, %v1252
    %v1267 = vsel %vm304, %v1238, %v1254
    %v1268 = vsel %vm304, %v1240, %v1256
    %v1269 = vsel %vm304, %v1242, %v1258
    %v1270 = vsel %vm304, %v1244, %v1260
    %v1271 = vsel %vm304, %v1246, %v1262
    %v1272 = vsel %vm304, %v1248, %v1264
    %v1273 = vsel %vm304, %v1250, %v1234
    %v1274 = vsel %vm304, %v1252, %v1236
    %v1275 = vsel %vm304, %v1254, %v1238
    %v1276 = vsel %vm304, %v1256, %v1240
    %v1277 = vsel %vm304, %v1258, %v1242
    %v1278 = vsel %vm304, %v1260, %v1244
    %v1279 = vsel %vm304, %v1262, %v1246
    %v1280 = vsel %vm304, %v1264, %v1248
    %s1281 = scalar_lea.vmem [#allocation6], 19
    %v1282 = vld [vmem:[%s1281] ss:$8 sm:$0x3]
    %v1284 = vlaneseq
    %v1285 = vshrl.u32 %v1284, 7
    %v1286 = vsub.s32 0, %v1285
    %v1287 = vrot.slane %v1282, %v1286
    %v1288 = vlaneseq
    %v1289 = vshrl.u32 %v1288, 7
    %v1290 = vsub.s32 1, %v1289
    %v1291 = vrot.slane %v1282, %v1290
    %v1294 = vmul.f32 %v1265, %v1287
    %v1295 = vmul.f32 %v1273, %v1291
    %v1296 = vmul.f32 %v1266, %v1287
    %v1297 = vmul.f32 %v1274, %v1291
    %v1298 = vmul.f32 %v1267, %v1287
    %v1299 = vmul.f32 %v1275, %v1291
    %v1300 = vmul.f32 %v1268, %v1287
    %v1301 = vmul.f32 %v1276, %v1291
    %v1302 = vmul.f32 %v1269, %v1287
    %v1303 = vmul.f32 %v1277, %v1291
    %v1304 = vmul.f32 %v1270, %v1287
    %v1305 = vmul.f32 %v1278, %v1291
    %v1306 = vmul.f32 %v1271, %v1287
    %v1307 = vmul.f32 %v1279, %v1291
    %v1308 = vmul.f32 %v1272, %v1287
    %v1309 = vmul.f32 %v1280, %v1291
    %v1310 = vadd.f32 %v1217, %v1294
    %v1311 = vadd.f32 %v1218, %v1295
    %v1312 = vadd.f32 %v1219, %v1296
    %v1313 = vadd.f32 %v1220, %v1297
    %v1314 = vadd.f32 %v1221, %v1298
    %v1315 = vadd.f32 %v1222, %v1299
    %v1316 = vadd.f32 %v1223, %v1300
    %v1317 = vadd.f32 %v1224, %v1301
    %v1318 = vadd.f32 %v1225, %v1302
    %v1319 = vadd.f32 %v1226, %v1303
    %v1320 = vadd.f32 %v1227, %v1304
    %v1321 = vadd.f32 %v1228, %v1305
    %v1322 = vadd.f32 %v1229, %v1306
    %v1323 = vadd.f32 %v1230, %v1307
    %v1324 = vadd.f32 %v1231, %v1308
    %v1325 = vadd.f32 %v1232, %v1309
    %v1326 = vld [vmem:[%s1078] sm:$0xfe]
    %v1327 = vld [vmem:[%s1078 + $0x8] sm:$0xfe]
    %v1328 = vld [vmem:[%s1078 + $0x30] sm:$0x7f]
    %v1329 = vld [vmem:[%s1078 + $0x38] sm:$0x7f]
    %v1330 = vld [vmem:[%s1078 + $0xc0] sm:$0xfe]
    %v1331 = vld [vmem:[%s1078 + $0xc8] sm:$0xfe]
    %v1332 = vld [vmem:[%s1078 + $0xf0] sm:$0x7f]
    %v1333 = vld [vmem:[%s1078 + $0xf8] sm:$0x7f]
    %s1334 = scalar_lea.vmem [#allocation6], 20
    %v1335 = vld [vmem:[%s1334] ss:$8 sm:$0x3]
    %v1337 = vlaneseq
    %v1338 = vshrl.u32 %v1337, 7
    %v1339 = vsub.s32 0, %v1338
    %v1340 = vrot.slane %v1335, %v1339
    %v1341 = vlaneseq
    %v1342 = vshrl.u32 %v1341, 7
    %v1343 = vsub.s32 1, %v1342
    %v1344 = vrot.slane %v1335, %v1343
    %v1347 = vmul.f32 %v1326, %v1340
    %v1348 = vmul.f32 %v1327, %v1344
    %v1349 = vmul.f32 %v1081, %v1340
    %v1350 = vmul.f32 %v1082, %v1344
    %v1351 = vmul.f32 %v1083, %v1340
    %v1352 = vmul.f32 %v1084, %v1344
    %v1353 = vmul.f32 %v1328, %v1340
    %v1354 = vmul.f32 %v1329, %v1344
    %v1355 = vmul.f32 %v1330, %v1340
    %v1356 = vmul.f32 %v1331, %v1344
    %v1357 = vmul.f32 %v1089, %v1340
    %v1358 = vmul.f32 %v1090, %v1344
    %v1359 = vmul.f32 %v1091, %v1340
    %v1360 = vmul.f32 %v1092, %v1344
    %v1361 = vmul.f32 %v1332, %v1340
    %v1362 = vmul.f32 %v1333, %v1344
    %v1379 = vrot.slane %v1347, 1
    %v1380 = vrot.slane %v1349, 1
    %v1381 = vsel %vm419, %v1379, %v1380
    %v1382 = vrot.slane %v1348, 1
    %v1383 = vrot.slane %v1350, 1
    %v1384 = vsel %vm419, %v1382, %v1383
    %v1385 = vrot.slane %v1351, 1
    %v1386 = vsel %vm419, %v1380, %v1385
    %v1387 = vrot.slane %v1352, 1
    %v1388 = vsel %vm419, %v1383, %v1387
    %v1389 = vrot.slane %v1353, 1
    %v1390 = vsel %vm419, %v1385, %v1389
    %v1391 = vrot.slane %v1354, 1
    %v1392 = vsel %vm419, %v1387, %v1391
    %v1393 = vrot.slane %v1355, 1
    %v1394 = vrot.slane %v1357, 1
    %v1395 = vsel %vm419, %v1393, %v1394
    %v1396 = vrot.slane %v1356, 1
    %v1397 = vrot.slane %v1358, 1
    %v1398 = vsel %vm419, %v1396, %v1397
    %v1399 = vrot.slane %v1359, 1
    %v1400 = vsel %vm419, %v1394, %v1399
    %v1401 = vrot.slane %v1360, 1
    %v1402 = vsel %vm419, %v1397, %v1401
    %v1403 = vrot.slane %v1361, 1
    %v1404 = vsel %vm419, %v1399, %v1403
    %v1405 = vrot.slane %v1362, 1
    %v1406 = vsel %vm419, %v1401, %v1405
    %v1423 = vadd.f32 %v1310, %v1381
    %v1424 = vadd.f32 %v1311, %v1384
    %v1425 = vadd.f32 %v1312, %v1386
    %v1426 = vadd.f32 %v1313, %v1388
    %v1427 = vadd.f32 %v1314, %v1390
    %v1428 = vadd.f32 %v1315, %v1392
    %v1429 = vadd.f32 %v1316, %v1389
    %v1430 = vadd.f32 %v1317, %v1391
    %v1431 = vadd.f32 %v1318, %v1395
    %v1432 = vadd.f32 %v1319, %v1398
    %v1433 = vadd.f32 %v1320, %v1400
    %v1434 = vadd.f32 %v1321, %v1402
    %v1435 = vadd.f32 %v1322, %v1404
    %v1436 = vadd.f32 %v1323, %v1406
    %v1437 = vadd.f32 %v1324, %v1403
    %v1438 = vadd.f32 %v1325, %v1405
    %v1455 = vrot.slane %v1326, 1
    %v1456 = vrot.slane %v1081, 1
    %v1457 = vsel %vm419, %v1455, %v1456
    %v1458 = vrot.slane %v1327, 1
    %v1459 = vrot.slane %v1082, 1
    %v1460 = vsel %vm419, %v1458, %v1459
    %v1461 = vrot.slane %v1083, 1
    %v1462 = vsel %vm419, %v1456, %v1461
    %v1463 = vrot.slane %v1084, 1
    %v1464 = vsel %vm419, %v1459, %v1463
    %v1465 = vrot.slane %v1328, 1
    %v1466 = vsel %vm419, %v1461, %v1465
    %v1467 = vrot.slane %v1329, 1
    %v1468 = vsel %vm419, %v1463, %v1467
    %v1469 = vrot.slane %v1330, 1
    %v1470 = vrot.slane %v1089, 1
    %v1471 = vsel %vm419, %v1469, %v1470
    %v1472 = vrot.slane %v1331, 1
    %v1473 = vrot.slane %v1090, 1
    %v1474 = vsel %vm419, %v1472, %v1473
    %v1475 = vrot.slane %v1091, 1
    %v1476 = vsel %vm419, %v1470, %v1475
    %v1477 = vrot.slane %v1092, 1
    %v1478 = vsel %vm419, %v1473, %v1477
    %v1479 = vrot.slane %v1332, 1
    %v1480 = vsel %vm419, %v1475, %v1479
    %v1481 = vrot.slane %v1333, 1
    %v1482 = vsel %vm419, %v1477, %v1481
    %1499 = vrot.lane.b32.xlu0 %v1457, 120
    %v1500 = vpop.permute.xlu0 %1499
    %1501 = vrot.lane.b32.xlu0 %v1462, 120
    %v1502 = vpop.permute.xlu0 %1501
    %1503 = vrot.lane.b32.xlu0 %v1466, 120
    %v1504 = vpop.permute.xlu0 %1503
    %1505 = vrot.lane.b32.xlu0 %v1465, 120
    %v1506 = vpop.permute.xlu0 %1505
    %1507 = vrot.lane.b32.xlu0 %v1471, 120
    %v1508 = vpop.permute.xlu0 %1507
    %1509 = vrot.lane.b32.xlu0 %v1476, 120
    %v1510 = vpop.permute.xlu0 %1509
    %1511 = vrot.lane.b32.xlu0 %v1480, 120
    %v1512 = vpop.permute.xlu0 %1511
    %1513 = vrot.lane.b32.xlu0 %v1479, 120
    %v1514 = vpop.permute.xlu0 %1513
    %1515 = vrot.lane.b32.xlu0 %v1460, 120
    %v1516 = vpop.permute.xlu0 %1515
    %1517 = vrot.lane.b32.xlu0 %v1464, 120
    %v1518 = vpop.permute.xlu0 %1517
    %1519 = vrot.lane.b32.xlu0 %v1468, 120
    %v1520 = vpop.permute.xlu0 %1519
    %1521 = vrot.lane.b32.xlu0 %v1467, 120
    %v1522 = vpop.permute.xlu0 %1521
    %1523 = vrot.lane.b32.xlu0 %v1474, 120
    %v1524 = vpop.permute.xlu0 %1523
    %1525 = vrot.lane.b32.xlu0 %v1478, 120
    %v1526 = vpop.permute.xlu0 %1525
    %1527 = vrot.lane.b32.xlu0 %v1482, 120
    %v1528 = vpop.permute.xlu0 %1527
    %1529 = vrot.lane.b32.xlu0 %v1481, 120
    %v1530 = vpop.permute.xlu0 %1529
    %v1531 = vsel %vm210, %v1500, %v1516
    %v1532 = vsel %vm210, %v1502, %v1518
    %v1533 = vsel %vm210, %v1504, %v1520
    %v1534 = vsel %vm210, %v1506, %v1522
    %v1535 = vsel %vm210, %v1508, %v1524
    %v1536 = vsel %vm210, %v1510, %v1526
    %v1537 = vsel %vm210, %v1512, %v1528
    %v1538 = vsel %vm210, %v1514, %v1530
    %v1539 = vsel %vm210, %v1516, %v1500
    %v1540 = vsel %vm210, %v1518, %v1502
    %v1541 = vsel %vm210, %v1520, %v1504
    %v1542 = vsel %vm210, %v1522, %v1506
    %v1543 = vsel %vm210, %v1524, %v1508
    %v1544 = vsel %vm210, %v1526, %v1510
    %v1545 = vsel %vm210, %v1528, %v1512
    %v1546 = vsel %vm210, %v1530, %v1514
    %s1547 = scalar_lea.vmem [#allocation6], 21
    %v1548 = vld [vmem:[%s1547] ss:$8 sm:$0x3]
    %v1550 = vlaneseq
    %v1551 = vshrl.u32 %v1550, 7
    %v1552 = vsub.s32 0, %v1551
    %v1553 = vrot.slane %v1548, %v1552
    %v1554 = vlaneseq
    %v1555 = vshrl.u32 %v1554, 7
    %v1556 = vsub.s32 1, %v1555
    %v1557 = vrot.slane %v1548, %v1556
    %v1560 = vmul.f32 %v1531, %v1553
    %v1561 = vmul.f32 %v1539, %v1557
    %v1562 = vmul.f32 %v1532, %v1553
    %v1563 = vmul.f32 %v1540, %v1557
    %v1564 = vmul.f32 %v1533, %v1553
    %v1565 = vmul.f32 %v1541, %v1557
    %v1566 = vmul.f32 %v1534, %v1553
    %v1567 = vmul.f32 %v1542, %v1557
    %v1568 = vmul.f32 %v1535, %v1553
    %v1569 = vmul.f32 %v1543, %v1557
    %v1570 = vmul.f32 %v1536, %v1553
    %v1571 = vmul.f32 %v1544, %v1557
    %v1572 = vmul.f32 %v1537, %v1553
    %v1573 = vmul.f32 %v1545, %v1557
    %v1574 = vmul.f32 %v1538, %v1553
    %v1575 = vmul.f32 %v1546, %v1557
    %v1576 = vadd.f32 %v1423, %v1560
    %v1577 = vadd.f32 %v1424, %v1561
    %v1578 = vadd.f32 %v1425, %v1562
    %v1579 = vadd.f32 %v1426, %v1563
    %v1580 = vadd.f32 %v1427, %v1564
    %v1581 = vadd.f32 %v1428, %v1565
    %v1582 = vadd.f32 %v1429, %v1566
    %v1583 = vadd.f32 %v1430, %v1567
    %v1584 = vadd.f32 %v1431, %v1568
    %v1585 = vadd.f32 %v1432, %v1569
    %v1586 = vadd.f32 %v1433, %v1570
    %v1587 = vadd.f32 %v1434, %v1571
    %v1588 = vadd.f32 %v1435, %v1572
    %v1589 = vadd.f32 %v1436, %v1573
    %v1590 = vadd.f32 %v1437, %v1574
    %v1591 = vadd.f32 %v1438, %v1575
    %1592 = vrot.lane.b32.xlu0 %v1457, 112
    %v1593 = vpop.permute.xlu0 %1592
    %1594 = vrot.lane.b32.xlu0 %v1462, 112
    %v1595 = vpop.permute.xlu0 %1594
    %1596 = vrot.lane.b32.xlu0 %v1466, 112
    %v1597 = vpop.permute.xlu0 %1596
    %1598 = vrot.lane.b32.xlu0 %v1465, 112
    %v1599 = vpop.permute.xlu0 %1598
    %1600 = vrot.lane.b32.xlu0 %v1471, 112
    %v1601 = vpop.permute.xlu0 %1600
    %1602 = vrot.lane.b32.xlu0 %v1476, 112
    %v1603 = vpop.permute.xlu0 %1602
    %1604 = vrot.lane.b32.xlu0 %v1480, 112
    %v1605 = vpop.permute.xlu0 %1604
    %1606 = vrot.lane.b32.xlu0 %v1479, 112
    %v1607 = vpop.permute.xlu0 %1606
    %1608 = vrot.lane.b32.xlu0 %v1460, 112
    %v1609 = vpop.permute.xlu0 %1608
    %1610 = vrot.lane.b32.xlu0 %v1464, 112
    %v1611 = vpop.permute.xlu0 %1610
    %1612 = vrot.lane.b32.xlu0 %v1468, 112
    %v1613 = vpop.permute.xlu0 %1612
    %1614 = vrot.lane.b32.xlu0 %v1467, 112
    %v1615 = vpop.permute.xlu0 %1614
    %1616 = vrot.lane.b32.xlu0 %v1474, 112
    %v1617 = vpop.permute.xlu0 %1616
    %1618 = vrot.lane.b32.xlu0 %v1478, 112
    %v1619 = vpop.permute.xlu0 %1618
    %1620 = vrot.lane.b32.xlu0 %v1482, 112
    %v1621 = vpop.permute.xlu0 %1620
    %1622 = vrot.lane.b32.xlu0 %v1481, 112
    %v1623 = vpop.permute.xlu0 %1622
    %v1624 = vsel %vm304, %v1593, %v1609
    %v1625 = vsel %vm304, %v1595, %v1611
    %v1626 = vsel %vm304, %v1597, %v1613
    %v1627 = vsel %vm304, %v1599, %v1615
    %v1628 = vsel %vm304, %v1601, %v1617
    %v1629 = vsel %vm304, %v1603, %v1619
    %v1630 = vsel %vm304, %v1605, %v1621
    %v1631 = vsel %vm304, %v1607, %v1623
    %v1632 = vsel %vm304, %v1609, %v1593
    %v1633 = vsel %vm304, %v1611, %v1595
    %v1634 = vsel %vm304, %v1613, %v1597
    %v1635 = vsel %vm304, %v1615, %v1599
    %v1636 = vsel %vm304, %v1617, %v1601
    %v1637 = vsel %vm304, %v1619, %v1603
    %v1638 = vsel %vm304, %v1621, %v1605
    %v1639 = vsel %vm304, %v1623, %v1607
    %s1640 = scalar_lea.vmem [#allocation6], 22
    %v1641 = vld [vmem:[%s1640] ss:$8 sm:$0x3]
    %v1643 = vlaneseq
    %v1644 = vshrl.u32 %v1643, 7
    %v1645 = vsub.s32 0, %v1644
    %v1646 = vrot.slane %v1641, %v1645
    %v1647 = vlaneseq
    %v1648 = vshrl.u32 %v1647, 7
    %v1649 = vsub.s32 1, %v1648
    %v1650 = vrot.slane %v1641, %v1649
    %v1653 = vmul.f32 %v1624, %v1646
    %v1654 = vmul.f32 %v1632, %v1650
    %v1655 = vmul.f32 %v1625, %v1646
    %v1656 = vmul.f32 %v1633, %v1650
    %v1657 = vmul.f32 %v1626, %v1646
    %v1658 = vmul.f32 %v1634, %v1650
    %v1659 = vmul.f32 %v1627, %v1646
    %v1660 = vmul.f32 %v1635, %v1650
    %v1661 = vmul.f32 %v1628, %v1646
    %v1662 = vmul.f32 %v1636, %v1650
    %v1663 = vmul.f32 %v1629, %v1646
    %v1664 = vmul.f32 %v1637, %v1650
    %v1665 = vmul.f32 %v1630, %v1646
    %v1666 = vmul.f32 %v1638, %v1650
    %v1667 = vmul.f32 %v1631, %v1646
    %v1668 = vmul.f32 %v1639, %v1650
    %v1669 = vadd.f32 %v1576, %v1653
    %v1670 = vadd.f32 %v1577, %v1654
    %v1671 = vadd.f32 %v1578, %v1655
    %v1672 = vadd.f32 %v1579, %v1656
    %v1673 = vadd.f32 %v1580, %v1657
    %v1674 = vadd.f32 %v1581, %v1658
    %v1675 = vadd.f32 %v1582, %v1659
    %v1676 = vadd.f32 %v1583, %v1660
    %v1677 = vadd.f32 %v1584, %v1661
    %v1678 = vadd.f32 %v1585, %v1662
    %v1679 = vadd.f32 %v1586, %v1663
    %v1680 = vadd.f32 %v1587, %v1664
    %v1681 = vadd.f32 %v1588, %v1665
    %v1682 = vadd.f32 %v1589, %v1666
    %v1683 = vadd.f32 %v1590, %v1667
    %v1684 = vadd.f32 %v1591, %v1668
    %v1685 = vld [vmem:[%s1078] sm:$0xfc]
    %v1686 = vld [vmem:[%s1078 + $0x8] sm:$0xfc]
    %v1687 = vld [vmem:[%s1078 + $0x30] sm:$0xff]
    %v1688 = vld [vmem:[%s1078 + $0x38] sm:$0xff]
    %v1689 = vld [vmem:[%s1078 + $0xc0] sm:$0xfc]
    %v1690 = vld [vmem:[%s1078 + $0xc8] sm:$0xfc]
    %v1691 = vld [vmem:[%s1078 + $0xf0] sm:$0xff]
    %v1692 = vld [vmem:[%s1078 + $0xf8] sm:$0xff]
    %s1693 = scalar_lea.vmem [#allocation6], 23
    %v1694 = vld [vmem:[%s1693] ss:$8 sm:$0x3]
    %v1696 = vlaneseq
    %v1697 = vshrl.u32 %v1696, 7
    %v1698 = vsub.s32 0, %v1697
    %v1699 = vrot.slane %v1694, %v1698
    %v1700 = vlaneseq
    %v1701 = vshrl.u32 %v1700, 7
    %v1702 = vsub.s32 1, %v1701
    %v1703 = vrot.slane %v1694, %v1702
    %v1706 = vmul.f32 %v1685, %v1699
    %v1707 = vmul.f32 %v1686, %v1703
    %v1708 = vmul.f32 %v1081, %v1699
    %v1709 = vmul.f32 %v1082, %v1703
    %v1710 = vmul.f32 %v1083, %v1699
    %v1711 = vmul.f32 %v1084, %v1703
    %v1712 = vmul.f32 %v1687, %v1699
    %v1713 = vmul.f32 %v1688, %v1703
    %v1714 = vmul.f32 %v1689, %v1699
    %v1715 = vmul.f32 %v1690, %v1703
    %v1716 = vmul.f32 %v1089, %v1699
    %v1717 = vmul.f32 %v1090, %v1703
    %v1718 = vmul.f32 %v1091, %v1699
    %v1719 = vmul.f32 %v1092, %v1703
    %v1720 = vmul.f32 %v1691, %v1699
    %v1721 = vmul.f32 %v1692, %v1703
    %v1738 = vrot.slane %v1706, 2
    %v1739 = vrot.slane %v1708, 2
    %v1740 = vsel %vm779, %v1738, %v1739
    %v1741 = vrot.slane %v1707, 2
    %v1742 = vrot.slane %v1709, 2
    %v1743 = vsel %vm779, %v1741, %v1742
    %v1744 = vrot.slane %v1710, 2
    %v1745 = vsel %vm779, %v1739, %v1744
    %v1746 = vrot.slane %v1711, 2
    %v1747 = vsel %vm779, %v1742, %v1746
    %v1748 = vrot.slane %v1712, 2
    %v1749 = vsel %vm779, %v1744, %v1748
    %v1750 = vrot.slane %v1713, 2
    %v1751 = vsel %vm779, %v1746, %v1750
    %v1752 = vrot.slane %v1714, 2
    %v1753 = vrot.slane %v1716, 2
    %v1754 = vsel %vm779, %v1752, %v1753
    %v1755 = vrot.slane %v1715, 2
    %v1756 = vrot.slane %v1717, 2
    %v1757 = vsel %vm779, %v1755, %v1756
    %v1758 = vrot.slane %v1718, 2
    %v1759 = vsel %vm779, %v1753, %v1758
    %v1760 = vrot.slane %v1719, 2
    %v1761 = vsel %vm779, %v1756, %v1760
    %v1762 = vrot.slane %v1720, 2
    %v1763 = vsel %vm779, %v1758, %v1762
    %v1764 = vrot.slane %v1721, 2
    %v1765 = vsel %vm779, %v1760, %v1764
    %v1782 = vadd.f32 %v1669, %v1740
    %v1783 = vadd.f32 %v1670, %v1743
    %v1784 = vadd.f32 %v1671, %v1745
    %v1785 = vadd.f32 %v1672, %v1747
    %v1786 = vadd.f32 %v1673, %v1749
    %v1787 = vadd.f32 %v1674, %v1751
    %v1788 = vadd.f32 %v1675, %v1748
    %v1789 = vadd.f32 %v1676, %v1750
    %v1790 = vadd.f32 %v1677, %v1754
    %v1791 = vadd.f32 %v1678, %v1757
    %v1792 = vadd.f32 %v1679, %v1759
    %v1793 = vadd.f32 %v1680, %v1761
    %v1794 = vadd.f32 %v1681, %v1763
    %v1795 = vadd.f32 %v1682, %v1765
    %v1796 = vadd.f32 %v1683, %v1762
    %v1797 = vadd.f32 %v1684, %v1764
    %v1806 = vrot.slane %v1685, 2
    %v1807 = vrot.slane %v1081, 2
    %v1808 = vsel %vm779, %v1806, %v1807
    %v1809 = vrot.slane %v1686, 2
    %v1810 = vrot.slane %v1082, 2
    %v1811 = vsel %vm779, %v1809, %v1810
    %v1812 = vrot.slane %v1083, 2
    %v1813 = vsel %vm779, %v1807, %v1812
    %v1814 = vrot.slane %v1084, 2
    %v1815 = vsel %vm779, %v1810, %v1814
    %v1816 = vrot.slane %v1687, 2
    %v1817 = vsel %vm779, %v1812, %v1816
    %v1818 = vrot.slane %v1688, 2
    %v1819 = vsel %vm779, %v1814, %v1818
    %v1820 = vrot.slane %v1689, 2
    %v1821 = vrot.slane %v1089, 2
    %v1822 = vsel %vm779, %v1820, %v1821
    %v1823 = vrot.slane %v1690, 2
    %v1824 = vrot.slane %v1090, 2
    %v1825 = vsel %vm779, %v1823, %v1824
    %v1826 = vrot.slane %v1091, 2
    %v1827 = vsel %vm779, %v1821, %v1826
    %v1828 = vrot.slane %v1092, 2
    %v1829 = vsel %vm779, %v1824, %v1828
    %v1830 = vrot.slane %v1691, 2
    %v1831 = vsel %vm779, %v1826, %v1830
    %v1832 = vrot.slane %v1692, 2
    %v1833 = vsel %vm779, %v1828, %v1832
    %1850 = vrot.lane.b32.xlu0 %v1808, 120
    %v1851 = vpop.permute.xlu0 %1850
    %1852 = vrot.lane.b32.xlu0 %v1813, 120
    %v1853 = vpop.permute.xlu0 %1852
    %1854 = vrot.lane.b32.xlu0 %v1817, 120
    %v1855 = vpop.permute.xlu0 %1854
    %1856 = vrot.lane.b32.xlu0 %v1816, 120
    %v1857 = vpop.permute.xlu0 %1856
    %1858 = vrot.lane.b32.xlu0 %v1822, 120
    %v1859 = vpop.permute.xlu0 %1858
    %1860 = vrot.lane.b32.xlu0 %v1827, 120
    %v1861 = vpop.permute.xlu0 %1860
    %1862 = vrot.lane.b32.xlu0 %v1831, 120
    %v1863 = vpop.permute.xlu0 %1862
    %1864 = vrot.lane.b32.xlu0 %v1830, 120
    %v1865 = vpop.permute.xlu0 %1864
    %1866 = vrot.lane.b32.xlu0 %v1811, 120
    %v1867 = vpop.permute.xlu0 %1866
    %1868 = vrot.lane.b32.xlu0 %v1815, 120
    %v1869 = vpop.permute.xlu0 %1868
    %1870 = vrot.lane.b32.xlu0 %v1819, 120
    %v1871 = vpop.permute.xlu0 %1870
    %1872 = vrot.lane.b32.xlu0 %v1818, 120
    %v1873 = vpop.permute.xlu0 %1872
    %1874 = vrot.lane.b32.xlu0 %v1825, 120
    %v1875 = vpop.permute.xlu0 %1874
    %1876 = vrot.lane.b32.xlu0 %v1829, 120
    %v1877 = vpop.permute.xlu0 %1876
    %1878 = vrot.lane.b32.xlu0 %v1833, 120
    %v1879 = vpop.permute.xlu0 %1878
    %1880 = vrot.lane.b32.xlu0 %v1832, 120
    %v1881 = vpop.permute.xlu0 %1880
    %v1882 = vsel %vm210, %v1851, %v1867
    %v1883 = vsel %vm210, %v1853, %v1869
    %v1884 = vsel %vm210, %v1855, %v1871
    %v1885 = vsel %vm210, %v1857, %v1873
    %v1886 = vsel %vm210, %v1859, %v1875
    %v1887 = vsel %vm210, %v1861, %v1877
    %v1888 = vsel %vm210, %v1863, %v1879
    %v1889 = vsel %vm210, %v1865, %v1881
    %v1890 = vsel %vm210, %v1867, %v1851
    %v1891 = vsel %vm210, %v1869, %v1853
    %v1892 = vsel %vm210, %v1871, %v1855
    %v1893 = vsel %vm210, %v1873, %v1857
    %v1894 = vsel %vm210, %v1875, %v1859
    %v1895 = vsel %vm210, %v1877, %v1861
    %v1896 = vsel %vm210, %v1879, %v1863
    %v1897 = vsel %vm210, %v1881, %v1865
    %s1898 = scalar_lea.vmem [#allocation6], 32
    %v1899 = vld [vmem:[%s1898] ss:$8 sm:$0x3]
    %v1901 = vlaneseq
    %v1902 = vshrl.u32 %v1901, 7
    %v1903 = vsub.s32 0, %v1902
    %v1904 = vrot.slane %v1899, %v1903
    %v1905 = vlaneseq
    %v1906 = vshrl.u32 %v1905, 7
    %v1907 = vsub.s32 1, %v1906
    %v1908 = vrot.slane %v1899, %v1907
    %v1911 = vmul.f32 %v1882, %v1904
    %v1912 = vmul.f32 %v1890, %v1908
    %v1913 = vmul.f32 %v1883, %v1904
    %v1914 = vmul.f32 %v1891, %v1908
    %v1915 = vmul.f32 %v1884, %v1904
    %v1916 = vmul.f32 %v1892, %v1908
    %v1917 = vmul.f32 %v1885, %v1904
    %v1918 = vmul.f32 %v1893, %v1908
    %v1919 = vmul.f32 %v1886, %v1904
    %v1920 = vmul.f32 %v1894, %v1908
    %v1921 = vmul.f32 %v1887, %v1904
    %v1922 = vmul.f32 %v1895, %v1908
    %v1923 = vmul.f32 %v1888, %v1904
    %v1924 = vmul.f32 %v1896, %v1908
    %v1925 = vmul.f32 %v1889, %v1904
    %v1926 = vmul.f32 %v1897, %v1908
    %v1927 = vadd.f32 %v1782, %v1911
    %v1928 = vadd.f32 %v1783, %v1912
    %v1929 = vadd.f32 %v1784, %v1913
    %v1930 = vadd.f32 %v1785, %v1914
    %v1931 = vadd.f32 %v1786, %v1915
    %v1932 = vadd.f32 %v1787, %v1916
    %v1933 = vadd.f32 %v1788, %v1917
    %v1934 = vadd.f32 %v1789, %v1918
    %v1935 = vadd.f32 %v1790, %v1919
    %v1936 = vadd.f32 %v1791, %v1920
    %v1937 = vadd.f32 %v1792, %v1921
    %v1938 = vadd.f32 %v1793, %v1922
    %v1939 = vadd.f32 %v1794, %v1923
    %v1940 = vadd.f32 %v1795, %v1924
    %v1941 = vadd.f32 %v1796, %v1925
    %v1942 = vadd.f32 %v1797, %v1926
    %1943 = vrot.lane.b32.xlu0 %v1808, 112
    %v1944 = vpop.permute.xlu0 %1943
    %1945 = vrot.lane.b32.xlu0 %v1813, 112
    %v1946 = vpop.permute.xlu0 %1945
    %1947 = vrot.lane.b32.xlu0 %v1817, 112
    %v1948 = vpop.permute.xlu0 %1947
    %1949 = vrot.lane.b32.xlu0 %v1816, 112
    %v1950 = vpop.permute.xlu0 %1949
    %1951 = vrot.lane.b32.xlu0 %v1822, 112
    %v1952 = vpop.permute.xlu0 %1951
    %1953 = vrot.lane.b32.xlu0 %v1827, 112
    %v1954 = vpop.permute.xlu0 %1953
    %1955 = vrot.lane.b32.xlu0 %v1831, 112
    %v1956 = vpop.permute.xlu0 %1955
    %1957 = vrot.lane.b32.xlu0 %v1830, 112
    %v1958 = vpop.permute.xlu0 %1957
    %1959 = vrot.lane.b32.xlu0 %v1811, 112
    %v1960 = vpop.permute.xlu0 %1959
    %1961 = vrot.lane.b32.xlu0 %v1815, 112
    %v1962 = vpop.permute.xlu0 %1961
    %1963 = vrot.lane.b32.xlu0 %v1819, 112
    %v1964 = vpop.permute.xlu0 %1963
    %1965 = vrot.lane.b32.xlu0 %v1818, 112
    %v1966 = vpop.permute.xlu0 %1965
    %1967 = vrot.lane.b32.xlu0 %v1825, 112
    %v1968 = vpop.permute.xlu0 %1967
    %1969 = vrot.lane.b32.xlu0 %v1829, 112
    %v1970 = vpop.permute.xlu0 %1969
    %1971 = vrot.lane.b32.xlu0 %v1833, 112
    %v1972 = vpop.permute.xlu0 %1971
    %1973 = vrot.lane.b32.xlu0 %v1832, 112
    %v1974 = vpop.permute.xlu0 %1973
    %v1975 = vsel %vm304, %v1944, %v1960
    %v1976 = vsel %vm304, %v1946, %v1962
    %v1977 = vsel %vm304, %v1948, %v1964
    %v1978 = vsel %vm304, %v1950, %v1966
    %v1979 = vsel %vm304, %v1952, %v1968
    %v1980 = vsel %vm304, %v1954, %v1970
    %v1981 = vsel %vm304, %v1956, %v1972
    %v1982 = vsel %vm304, %v1958, %v1974
    %v1983 = vsel %vm304, %v1960, %v1944
    %v1984 = vsel %vm304, %v1962, %v1946
    %v1985 = vsel %vm304, %v1964, %v1948
    %v1986 = vsel %vm304, %v1966, %v1950
    %v1987 = vsel %vm304, %v1968, %v1952
    %v1988 = vsel %vm304, %v1970, %v1954
    %v1989 = vsel %vm304, %v1972, %v1956
    %v1990 = vsel %vm304, %v1974, %v1958
    %s1991 = scalar_lea.vmem [#allocation6], 33
    %v1992 = vld [vmem:[%s1991] ss:$8 sm:$0x3]
    %v1994 = vlaneseq
    %v1995 = vshrl.u32 %v1994, 7
    %v1996 = vsub.s32 0, %v1995
    %v1997 = vrot.slane %v1992, %v1996
    %v1998 = vlaneseq
    %v1999 = vshrl.u32 %v1998, 7
    %v2000 = vsub.s32 1, %v1999
    %v2001 = vrot.slane %v1992, %v2000
    %v2004 = vmul.f32 %v1975, %v1997
    %v2005 = vmul.f32 %v1983, %v2001
    %v2006 = vmul.f32 %v1976, %v1997
    %v2007 = vmul.f32 %v1984, %v2001
    %v2008 = vmul.f32 %v1977, %v1997
    %v2009 = vmul.f32 %v1985, %v2001
    %v2010 = vmul.f32 %v1978, %v1997
    %v2011 = vmul.f32 %v1986, %v2001
    %v2012 = vmul.f32 %v1979, %v1997
    %v2013 = vmul.f32 %v1987, %v2001
    %v2014 = vmul.f32 %v1980, %v1997
    %v2015 = vmul.f32 %v1988, %v2001
    %v2016 = vmul.f32 %v1981, %v1997
    %v2017 = vmul.f32 %v1989, %v2001
    %v2018 = vmul.f32 %v1982, %v1997
    %v2019 = vmul.f32 %v1990, %v2001
    %v2020 = vadd.f32 %v1927, %v2004
    %v2021 = vadd.f32 %v1928, %v2005
    %v2022 = vadd.f32 %v1929, %v2006
    %v2023 = vadd.f32 %v1930, %v2007
    %v2024 = vadd.f32 %v1931, %v2008
    %v2025 = vadd.f32 %v1932, %v2009
    %v2026 = vadd.f32 %v1933, %v2010
    %v2027 = vadd.f32 %v1934, %v2011
    %v2028 = vadd.f32 %v1935, %v2012
    %v2029 = vadd.f32 %v1936, %v2013
    %v2030 = vadd.f32 %v1937, %v2014
    %v2031 = vadd.f32 %v1938, %v2015
    %v2032 = vadd.f32 %v1939, %v2016
    %v2033 = vadd.f32 %v1940, %v2017
    %v2034 = vadd.f32 %v1941, %v2018
    %v2035 = vadd.f32 %v1942, %v2019
    %s2036 = scalar_lea.vmem [#allocation3], 128
    %v2037 = vld [vmem:[%s2036] sm:$0xff]
    %v2038 = vld [vmem:[%s2036 + $0x8] sm:$0xff]
    %v2039 = vld [vmem:[%s2036 + $0x10] sm:$0xff]
    %v2040 = vld [vmem:[%s2036 + $0x18] sm:$0xff]
    %v2041 = vld [vmem:[%s2036 + $0x20] sm:$0xff]
    %v2042 = vld [vmem:[%s2036 + $0x28] sm:$0xff]
    %v2043 = vld [vmem:[%s2036 + $0x30] sm:$0x3f]
    %v2044 = vld [vmem:[%s2036 + $0x38] sm:$0x3f]
    %v2045 = vld [vmem:[%s2036 + $0xc0] sm:$0xff]
    %v2046 = vld [vmem:[%s2036 + $0xc8] sm:$0xff]
    %v2047 = vld [vmem:[%s2036 + $0xd0] sm:$0xff]
    %v2048 = vld [vmem:[%s2036 + $0xd8] sm:$0xff]
    %v2049 = vld [vmem:[%s2036 + $0xe0] sm:$0xff]
    %v2050 = vld [vmem:[%s2036 + $0xe8] sm:$0xff]
    %v2051 = vld [vmem:[%s2036 + $0xf0] sm:$0x3f]
    %v2052 = vld [vmem:[%s2036 + $0xf8] sm:$0x3f]
    %s2053 = scalar_lea.vmem [#allocation6], 34
    %v2054 = vld [vmem:[%s2053] ss:$8 sm:$0x3]
    %v2056 = vlaneseq
    %v2057 = vshrl.u32 %v2056, 7
    %v2058 = vsub.s32 0, %v2057
    %v2059 = vrot.slane %v2054, %v2058
    %v2060 = vlaneseq
    %v2061 = vshrl.u32 %v2060, 7
    %v2062 = vsub.s32 1, %v2061
    %v2063 = vrot.slane %v2054, %v2062
    %v2066 = vmul.f32 %v2037, %v2059
    %v2067 = vmul.f32 %v2038, %v2063
    %v2068 = vmul.f32 %v2039, %v2059
    %v2069 = vmul.f32 %v2040, %v2063
    %v2070 = vmul.f32 %v2041, %v2059
    %v2071 = vmul.f32 %v2042, %v2063
    %v2072 = vmul.f32 %v2043, %v2059
    %v2073 = vmul.f32 %v2044, %v2063
    %v2074 = vmul.f32 %v2045, %v2059
    %v2075 = vmul.f32 %v2046, %v2063
    %v2076 = vmul.f32 %v2047, %v2059
    %v2077 = vmul.f32 %v2048, %v2063
    %v2078 = vmul.f32 %v2049, %v2059
    %v2079 = vmul.f32 %v2050, %v2063
    %v2080 = vmul.f32 %v2051, %v2059
    %v2081 = vmul.f32 %v2052, %v2063
    %v2082 = vadd.f32 %v2020, %v2066
    %v2083 = vadd.f32 %v2021, %v2067
    %v2084 = vadd.f32 %v2022, %v2068
    %v2085 = vadd.f32 %v2023, %v2069
    %v2086 = vadd.f32 %v2024, %v2070
    %v2087 = vadd.f32 %v2025, %v2071
    %v2088 = vadd.f32 %v2026, %v2072
    %v2089 = vadd.f32 %v2027, %v2073
    %v2090 = vadd.f32 %v2028, %v2074
    %v2091 = vadd.f32 %v2029, %v2075
    %v2092 = vadd.f32 %v2030, %v2076
    %v2093 = vadd.f32 %v2031, %v2077
    %v2094 = vadd.f32 %v2032, %v2078
    %v2095 = vadd.f32 %v2033, %v2079
    %v2096 = vadd.f32 %v2034, %v2080
    %v2097 = vadd.f32 %v2035, %v2081
    %2098 = vrot.lane.b32.xlu0 %v2037, 120
    %v2099 = vpop.permute.xlu0 %2098
    %2100 = vrot.lane.b32.xlu0 %v2039, 120
    %v2101 = vpop.permute.xlu0 %2100
    %2102 = vrot.lane.b32.xlu0 %v2041, 120
    %v2103 = vpop.permute.xlu0 %2102
    %2104 = vrot.lane.b32.xlu0 %v2043, 120
    %v2105 = vpop.permute.xlu0 %2104
    %2106 = vrot.lane.b32.xlu0 %v2045, 120
    %v2107 = vpop.permute.xlu0 %2106
    %2108 = vrot.lane.b32.xlu0 %v2047, 120
    %v2109 = vpop.permute.xlu0 %2108
    %2110 = vrot.lane.b32.xlu0 %v2049, 120
    %v2111 = vpop.permute.xlu0 %2110
    %2112 = vrot.lane.b32.xlu0 %v2051, 120
    %v2113 = vpop.permute.xlu0 %2112
    %2114 = vrot.lane.b32.xlu0 %v2038, 120
    %v2115 = vpop.permute.xlu0 %2114
    %2116 = vrot.lane.b32.xlu0 %v2040, 120
    %v2117 = vpop.permute.xlu0 %2116
    %2118 = vrot.lane.b32.xlu0 %v2042, 120
    %v2119 = vpop.permute.xlu0 %2118
    %2120 = vrot.lane.b32.xlu0 %v2044, 120
    %v2121 = vpop.permute.xlu0 %2120
    %2122 = vrot.lane.b32.xlu0 %v2046, 120
    %v2123 = vpop.permute.xlu0 %2122
    %2124 = vrot.lane.b32.xlu0 %v2048, 120
    %v2125 = vpop.permute.xlu0 %2124
    %2126 = vrot.lane.b32.xlu0 %v2050, 120
    %v2127 = vpop.permute.xlu0 %2126
    %2128 = vrot.lane.b32.xlu0 %v2052, 120
    %v2129 = vpop.permute.xlu0 %2128
    %v2130 = vsel %vm210, %v2099, %v2115
    %v2131 = vsel %vm210, %v2101, %v2117
    %v2132 = vsel %vm210, %v2103, %v2119
    %v2133 = vsel %vm210, %v2105, %v2121
    %v2134 = vsel %vm210, %v2107, %v2123
    %v2135 = vsel %vm210, %v2109, %v2125
    %v2136 = vsel %vm210, %v2111, %v2127
    %v2137 = vsel %vm210, %v2113, %v2129
    %v2138 = vsel %vm210, %v2115, %v2099
    %v2139 = vsel %vm210, %v2117, %v2101
    %v2140 = vsel %vm210, %v2119, %v2103
    %v2141 = vsel %vm210, %v2121, %v2105
    %v2142 = vsel %vm210, %v2123, %v2107
    %v2143 = vsel %vm210, %v2125, %v2109
    %v2144 = vsel %vm210, %v2127, %v2111
    %v2145 = vsel %vm210, %v2129, %v2113
    %s2146 = scalar_lea.vmem [#allocation6], 35
    %v2147 = vld [vmem:[%s2146] ss:$8 sm:$0x3]
    %v2149 = vlaneseq
    %v2150 = vshrl.u32 %v2149, 7
    %v2151 = vsub.s32 0, %v2150
    %v2152 = vrot.slane %v2147, %v2151
    %v2153 = vlaneseq
    %v2154 = vshrl.u32 %v2153, 7
    %v2155 = vsub.s32 1, %v2154
    %v2156 = vrot.slane %v2147, %v2155
    %v2159 = vmul.f32 %v2130, %v2152
    %v2160 = vmul.f32 %v2138, %v2156
    %v2161 = vmul.f32 %v2131, %v2152
    %v2162 = vmul.f32 %v2139, %v2156
    %v2163 = vmul.f32 %v2132, %v2152
    %v2164 = vmul.f32 %v2140, %v2156
    %v2165 = vmul.f32 %v2133, %v2152
    %v2166 = vmul.f32 %v2141, %v2156
    %v2167 = vmul.f32 %v2134, %v2152
    %v2168 = vmul.f32 %v2142, %v2156
    %v2169 = vmul.f32 %v2135, %v2152
    %v2170 = vmul.f32 %v2143, %v2156
    %v2171 = vmul.f32 %v2136, %v2152
    %v2172 = vmul.f32 %v2144, %v2156
    %v2173 = vmul.f32 %v2137, %v2152
    %v2174 = vmul.f32 %v2145, %v2156
    %v2175 = vadd.f32 %v2082, %v2159
    %v2176 = vadd.f32 %v2083, %v2160
    %v2177 = vadd.f32 %v2084, %v2161
    %v2178 = vadd.f32 %v2085, %v2162
    %v2179 = vadd.f32 %v2086, %v2163
    %v2180 = vadd.f32 %v2087, %v2164
    %v2181 = vadd.f32 %v2088, %v2165
    %v2182 = vadd.f32 %v2089, %v2166
    %v2183 = vadd.f32 %v2090, %v2167
    %v2184 = vadd.f32 %v2091, %v2168
    %v2185 = vadd.f32 %v2092, %v2169
    %v2186 = vadd.f32 %v2093, %v2170
    %v2187 = vadd.f32 %v2094, %v2171
    %v2188 = vadd.f32 %v2095, %v2172
    %v2189 = vadd.f32 %v2096, %v2173
    %v2190 = vadd.f32 %v2097, %v2174
    %2191 = vrot.lane.b32.xlu0 %v2037, 112
    %v2192 = vpop.permute.xlu0 %2191
    %2193 = vrot.lane.b32.xlu0 %v2039, 112
    %v2194 = vpop.permute.xlu0 %2193
    %2195 = vrot.lane.b32.xlu0 %v2041, 112
    %v2196 = vpop.permute.xlu0 %2195
    %2197 = vrot.lane.b32.xlu0 %v2043, 112
    %v2198 = vpop.permute.xlu0 %2197
    %2199 = vrot.lane.b32.xlu0 %v2045, 112
    %v2200 = vpop.permute.xlu0 %2199
    %2201 = vrot.lane.b32.xlu0 %v2047, 112
    %v2202 = vpop.permute.xlu0 %2201
    %2203 = vrot.lane.b32.xlu0 %v2049, 112
    %v2204 = vpop.permute.xlu0 %2203
    %2205 = vrot.lane.b32.xlu0 %v2051, 112
    %v2206 = vpop.permute.xlu0 %2205
    %2207 = vrot.lane.b32.xlu0 %v2038, 112
    %v2208 = vpop.permute.xlu0 %2207
    %2209 = vrot.lane.b32.xlu0 %v2040, 112
    %v2210 = vpop.permute.xlu0 %2209
    %2211 = vrot.lane.b32.xlu0 %v2042, 112
    %v2212 = vpop.permute.xlu0 %2211
    %2213 = vrot.lane.b32.xlu0 %v2044, 112
    %v2214 = vpop.permute.xlu0 %2213
    %2215 = vrot.lane.b32.xlu0 %v2046, 112
    %v2216 = vpop.permute.xlu0 %2215
    %2217 = vrot.lane.b32.xlu0 %v2048, 112
    %v2218 = vpop.permute.xlu0 %2217
    %2219 = vrot.lane.b32.xlu0 %v2050, 112
    %v2220 = vpop.permute.xlu0 %2219
    %2221 = vrot.lane.b32.xlu0 %v2052, 112
    %v2222 = vpop.permute.xlu0 %2221
    %v2223 = vsel %vm304, %v2192, %v2208
    %v2224 = vsel %vm304, %v2194, %v2210
    %v2225 = vsel %vm304, %v2196, %v2212
    %v2226 = vsel %vm304, %v2198, %v2214
    %v2227 = vsel %vm304, %v2200, %v2216
    %v2228 = vsel %vm304, %v2202, %v2218
    %v2229 = vsel %vm304, %v2204, %v2220
    %v2230 = vsel %vm304, %v2206, %v2222
    %v2231 = vsel %vm304, %v2208, %v2192
    %v2232 = vsel %vm304, %v2210, %v2194
    %v2233 = vsel %vm304, %v2212, %v2196
    %v2234 = vsel %vm304, %v2214, %v2198
    %v2235 = vsel %vm304, %v2216, %v2200
    %v2236 = vsel %vm304, %v2218, %v2202
    %v2237 = vsel %vm304, %v2220, %v2204
    %v2238 = vsel %vm304, %v2222, %v2206
    %s2239 = scalar_lea.vmem [#allocation6], 36
    %v2240 = vld [vmem:[%s2239] ss:$8 sm:$0x3]
    %v2242 = vlaneseq
    %v2243 = vshrl.u32 %v2242, 7
    %v2244 = vsub.s32 0, %v2243
    %v2245 = vrot.slane %v2240, %v2244
    %v2246 = vlaneseq
    %v2247 = vshrl.u32 %v2246, 7
    %v2248 = vsub.s32 1, %v2247
    %v2249 = vrot.slane %v2240, %v2248
    %v2252 = vmul.f32 %v2223, %v2245
    %v2253 = vmul.f32 %v2231, %v2249
    %v2254 = vmul.f32 %v2224, %v2245
    %v2255 = vmul.f32 %v2232, %v2249
    %v2256 = vmul.f32 %v2225, %v2245
    %v2257 = vmul.f32 %v2233, %v2249
    %v2258 = vmul.f32 %v2226, %v2245
    %v2259 = vmul.f32 %v2234, %v2249
    %v2260 = vmul.f32 %v2227, %v2245
    %v2261 = vmul.f32 %v2235, %v2249
    %v2262 = vmul.f32 %v2228, %v2245
    %v2263 = vmul.f32 %v2236, %v2249
    %v2264 = vmul.f32 %v2229, %v2245
    %v2265 = vmul.f32 %v2237, %v2249
    %v2266 = vmul.f32 %v2230, %v2245
    %v2267 = vmul.f32 %v2238, %v2249
    %v2268 = vadd.f32 %v2175, %v2252
    %v2269 = vadd.f32 %v2176, %v2253
    %v2270 = vadd.f32 %v2177, %v2254
    %v2271 = vadd.f32 %v2178, %v2255
    %v2272 = vadd.f32 %v2179, %v2256
    %v2273 = vadd.f32 %v2180, %v2257
    %v2274 = vadd.f32 %v2181, %v2258
    %v2275 = vadd.f32 %v2182, %v2259
    %v2276 = vadd.f32 %v2183, %v2260
    %v2277 = vadd.f32 %v2184, %v2261
    %v2278 = vadd.f32 %v2185, %v2262
    %v2279 = vadd.f32 %v2186, %v2263
    %v2280 = vadd.f32 %v2187, %v2264
    %v2281 = vadd.f32 %v2188, %v2265
    %v2282 = vadd.f32 %v2189, %v2266
    %v2283 = vadd.f32 %v2190, %v2267
    %v2284 = vld [vmem:[%s2036] sm:$0xfe]
    %v2285 = vld [vmem:[%s2036 + $0x8] sm:$0xfe]
    %v2286 = vld [vmem:[%s2036 + $0x30] sm:$0x7f]
    %v2287 = vld [vmem:[%s2036 + $0x38] sm:$0x7f]
    %v2288 = vld [vmem:[%s2036 + $0xc0] sm:$0xfe]
    %v2289 = vld [vmem:[%s2036 + $0xc8] sm:$0xfe]
    %v2290 = vld [vmem:[%s2036 + $0xf0] sm:$0x7f]
    %v2291 = vld [vmem:[%s2036 + $0xf8] sm:$0x7f]
    %s2292 = scalar_lea.vmem [#allocation6], 37
    %v2293 = vld [vmem:[%s2292] ss:$8 sm:$0x3]
    %v2295 = vlaneseq
    %v2296 = vshrl.u32 %v2295, 7
    %v2297 = vsub.s32 0, %v2296
    %v2298 = vrot.slane %v2293, %v2297
    %v2299 = vlaneseq
    %v2300 = vshrl.u32 %v2299, 7
    %v2301 = vsub.s32 1, %v2300
    %v2302 = vrot.slane %v2293, %v2301
    %v2305 = vmul.f32 %v2284, %v2298
    %v2306 = vmul.f32 %v2285, %v2302
    %v2307 = vmul.f32 %v2039, %v2298
    %v2308 = vmul.f32 %v2040, %v2302
    %v2309 = vmul.f32 %v2041, %v2298
    %v2310 = vmul.f32 %v2042, %v2302
    %v2311 = vmul.f32 %v2286, %v2298
    %v2312 = vmul.f32 %v2287, %v2302
    %v2313 = vmul.f32 %v2288, %v2298
    %v2314 = vmul.f32 %v2289, %v2302
    %v2315 = vmul.f32 %v2047, %v2298
    %v2316 = vmul.f32 %v2048, %v2302
    %v2317 = vmul.f32 %v2049, %v2298
    %v2318 = vmul.f32 %v2050, %v2302
    %v2319 = vmul.f32 %v2290, %v2298
    %v2320 = vmul.f32 %v2291, %v2302
    %v2337 = vrot.slane %v2305, 1
    %v2338 = vrot.slane %v2307, 1
    %v2339 = vsel %vm419, %v2337, %v2338
    %v2340 = vrot.slane %v2306, 1
    %v2341 = vrot.slane %v2308, 1
    %v2342 = vsel %vm419, %v2340, %v2341
    %v2343 = vrot.slane %v2309, 1
    %v2344 = vsel %vm419, %v2338, %v2343
    %v2345 = vrot.slane %v2310, 1
    %v2346 = vsel %vm419, %v2341, %v2345
    %v2347 = vrot.slane %v2311, 1
    %v2348 = vsel %vm419, %v2343, %v2347
    %v2349 = vrot.slane %v2312, 1
    %v2350 = vsel %vm419, %v2345, %v2349
    %v2351 = vrot.slane %v2313, 1
    %v2352 = vrot.slane %v2315, 1
    %v2353 = vsel %vm419, %v2351, %v2352
    %v2354 = vrot.slane %v2314, 1
    %v2355 = vrot.slane %v2316, 1
    %v2356 = vsel %vm419, %v2354, %v2355
    %v2357 = vrot.slane %v2317, 1
    %v2358 = vsel %vm419, %v2352, %v2357
    %v2359 = vrot.slane %v2318, 1
    %v2360 = vsel %vm419, %v2355, %v2359
    %v2361 = vrot.slane %v2319, 1
    %v2362 = vsel %vm419, %v2357, %v2361
    %v2363 = vrot.slane %v2320, 1
    %v2364 = vsel %vm419, %v2359, %v2363
    %v2381 = vadd.f32 %v2268, %v2339
    %v2382 = vadd.f32 %v2269, %v2342
    %v2383 = vadd.f32 %v2270, %v2344
    %v2384 = vadd.f32 %v2271, %v2346
    %v2385 = vadd.f32 %v2272, %v2348
    %v2386 = vadd.f32 %v2273, %v2350
    %v2387 = vadd.f32 %v2274, %v2347
    %v2388 = vadd.f32 %v2275, %v2349
    %v2389 = vadd.f32 %v2276, %v2353
    %v2390 = vadd.f32 %v2277, %v2356
    %v2391 = vadd.f32 %v2278, %v2358
    %v2392 = vadd.f32 %v2279, %v2360
    %v2393 = vadd.f32 %v2280, %v2362
    %v2394 = vadd.f32 %v2281, %v2364
    %v2395 = vadd.f32 %v2282, %v2361
    %v2396 = vadd.f32 %v2283, %v2363
    %v2413 = vrot.slane %v2284, 1
    %v2414 = vrot.slane %v2039, 1
    %v2415 = vsel %vm419, %v2413, %v2414
    %v2416 = vrot.slane %v2285, 1
    %v2417 = vrot.slane %v2040, 1
    %v2418 = vsel %vm419, %v2416, %v2417
    %v2419 = vrot.slane %v2041, 1
    %v2420 = vsel %vm419, %v2414, %v2419
    %v2421 = vrot.slane %v2042, 1
    %v2422 = vsel %vm419, %v2417, %v2421
    %v2423 = vrot.slane %v2286, 1
    %v2424 = vsel %vm419, %v2419, %v2423
    %v2425 = vrot.slane %v2287, 1
    %v2426 = vsel %vm419, %v2421, %v2425
    %v2427 = vrot.slane %v2288, 1
    %v2428 = vrot.slane %v2047, 1
    %v2429 = vsel %vm419, %v2427, %v2428
    %v2430 = vrot.slane %v2289, 1
    %v2431 = vrot.slane %v2048, 1
    %v2432 = vsel %vm419, %v2430, %v2431
    %v2433 = vrot.slane %v2049, 1
    %v2434 = vsel %vm419, %v2428, %v2433
    %v2435 = vrot.slane %v2050, 1
    %v2436 = vsel %vm419, %v2431, %v2435
    %v2437 = vrot.slane %v2290, 1
    %v2438 = vsel %vm419, %v2433, %v2437
    %v2439 = vrot.slane %v2291, 1
    %v2440 = vsel %vm419, %v2435, %v2439
    %2457 = vrot.lane.b32.xlu0 %v2415, 120
    %v2458 = vpop.permute.xlu0 %2457
    %2459 = vrot.lane.b32.xlu0 %v2420, 120
    %v2460 = vpop.permute.xlu0 %2459
    %2461 = vrot.lane.b32.xlu0 %v2424, 120
    %v2462 = vpop.permute.xlu0 %2461
    %2463 = vrot.lane.b32.xlu0 %v2423, 120
    %v2464 = vpop.permute.xlu0 %2463
    %2465 = vrot.lane.b32.xlu0 %v2429, 120
    %v2466 = vpop.permute.xlu0 %2465
    %2467 = vrot.lane.b32.xlu0 %v2434, 120
    %v2468 = vpop.permute.xlu0 %2467
    %2469 = vrot.lane.b32.xlu0 %v2438, 120
    %v2470 = vpop.permute.xlu0 %2469
    %2471 = vrot.lane.b32.xlu0 %v2437, 120
    %v2472 = vpop.permute.xlu0 %2471
    %2473 = vrot.lane.b32.xlu0 %v2418, 120
    %v2474 = vpop.permute.xlu0 %2473
    %2475 = vrot.lane.b32.xlu0 %v2422, 120
    %v2476 = vpop.permute.xlu0 %2475
    %2477 = vrot.lane.b32.xlu0 %v2426, 120
    %v2478 = vpop.permute.xlu0 %2477
    %2479 = vrot.lane.b32.xlu0 %v2425, 120
    %v2480 = vpop.permute.xlu0 %2479
    %2481 = vrot.lane.b32.xlu0 %v2432, 120
    %v2482 = vpop.permute.xlu0 %2481
    %2483 = vrot.lane.b32.xlu0 %v2436, 120
    %v2484 = vpop.permute.xlu0 %2483
    %2485 = vrot.lane.b32.xlu0 %v2440, 120
    %v2486 = vpop.permute.xlu0 %2485
    %2487 = vrot.lane.b32.xlu0 %v2439, 120
    %v2488 = vpop.permute.xlu0 %2487
    %v2489 = vsel %vm210, %v2458, %v2474
    %v2490 = vsel %vm210, %v2460, %v2476
    %v2491 = vsel %vm210, %v2462, %v2478
    %v2492 = vsel %vm210, %v2464, %v2480
    %v2493 = vsel %vm210, %v2466, %v2482
    %v2494 = vsel %vm210, %v2468, %v2484
    %v2495 = vsel %vm210, %v2470, %v2486
    %v2496 = vsel %vm210, %v2472, %v2488
    %v2497 = vsel %vm210, %v2474, %v2458
    %v2498 = vsel %vm210, %v2476, %v2460
    %v2499 = vsel %vm210, %v2478, %v2462
    %v2500 = vsel %vm210, %v2480, %v2464
    %v2501 = vsel %vm210, %v2482, %v2466
    %v2502 = vsel %vm210, %v2484, %v2468
    %v2503 = vsel %vm210, %v2486, %v2470
    %v2504 = vsel %vm210, %v2488, %v2472
    %s2505 = scalar_lea.vmem [#allocation6], 38
    %v2506 = vld [vmem:[%s2505] ss:$8 sm:$0x3]
    %v2508 = vlaneseq
    %v2509 = vshrl.u32 %v2508, 7
    %v2510 = vsub.s32 0, %v2509
    %v2511 = vrot.slane %v2506, %v2510
    %v2512 = vlaneseq
    %v2513 = vshrl.u32 %v2512, 7
    %v2514 = vsub.s32 1, %v2513
    %v2515 = vrot.slane %v2506, %v2514
    %v2518 = vmul.f32 %v2489, %v2511
    %v2519 = vmul.f32 %v2497, %v2515
    %v2520 = vmul.f32 %v2490, %v2511
    %v2521 = vmul.f32 %v2498, %v2515
    %v2522 = vmul.f32 %v2491, %v2511
    %v2523 = vmul.f32 %v2499, %v2515
    %v2524 = vmul.f32 %v2492, %v2511
    %v2525 = vmul.f32 %v2500, %v2515
    %v2526 = vmul.f32 %v2493, %v2511
    %v2527 = vmul.f32 %v2501, %v2515
    %v2528 = vmul.f32 %v2494, %v2511
    %v2529 = vmul.f32 %v2502, %v2515
    %v2530 = vmul.f32 %v2495, %v2511
    %v2531 = vmul.f32 %v2503, %v2515
    %v2532 = vmul.f32 %v2496, %v2511
    %v2533 = vmul.f32 %v2504, %v2515
    %v2534 = vadd.f32 %v2381, %v2518
    %v2535 = vadd.f32 %v2382, %v2519
    %v2536 = vadd.f32 %v2383, %v2520
    %v2537 = vadd.f32 %v2384, %v2521
    %v2538 = vadd.f32 %v2385, %v2522
    %v2539 = vadd.f32 %v2386, %v2523
    %v2540 = vadd.f32 %v2387, %v2524
    %v2541 = vadd.f32 %v2388, %v2525
    %v2542 = vadd.f32 %v2389, %v2526
    %v2543 = vadd.f32 %v2390, %v2527
    %v2544 = vadd.f32 %v2391, %v2528
    %v2545 = vadd.f32 %v2392, %v2529
    %v2546 = vadd.f32 %v2393, %v2530
    %v2547 = vadd.f32 %v2394, %v2531
    %v2548 = vadd.f32 %v2395, %v2532
    %v2549 = vadd.f32 %v2396, %v2533
    %2550 = vrot.lane.b32.xlu0 %v2415, 112
    %v2551 = vpop.permute.xlu0 %2550
    %2552 = vrot.lane.b32.xlu0 %v2420, 112
    %v2553 = vpop.permute.xlu0 %2552
    %2554 = vrot.lane.b32.xlu0 %v2424, 112
    %v2555 = vpop.permute.xlu0 %2554
    %2556 = vrot.lane.b32.xlu0 %v2423, 112
    %v2557 = vpop.permute.xlu0 %2556
    %2558 = vrot.lane.b32.xlu0 %v2429, 112
    %v2559 = vpop.permute.xlu0 %2558
    %2560 = vrot.lane.b32.xlu0 %v2434, 112
    %v2561 = vpop.permute.xlu0 %2560
    %2562 = vrot.lane.b32.xlu0 %v2438, 112
    %v2563 = vpop.permute.xlu0 %2562
    %2564 = vrot.lane.b32.xlu0 %v2437, 112
    %v2565 = vpop.permute.xlu0 %2564
    %2566 = vrot.lane.b32.xlu0 %v2418, 112
    %v2567 = vpop.permute.xlu0 %2566
    %2568 = vrot.lane.b32.xlu0 %v2422, 112
    %v2569 = vpop.permute.xlu0 %2568
    %2570 = vrot.lane.b32.xlu0 %v2426, 112
    %v2571 = vpop.permute.xlu0 %2570
    %2572 = vrot.lane.b32.xlu0 %v2425, 112
    %v2573 = vpop.permute.xlu0 %2572
    %2574 = vrot.lane.b32.xlu0 %v2432, 112
    %v2575 = vpop.permute.xlu0 %2574
    %2576 = vrot.lane.b32.xlu0 %v2436, 112
    %v2577 = vpop.permute.xlu0 %2576
    %2578 = vrot.lane.b32.xlu0 %v2440, 112
    %v2579 = vpop.permute.xlu0 %2578
    %2580 = vrot.lane.b32.xlu0 %v2439, 112
    %v2581 = vpop.permute.xlu0 %2580
    %v2582 = vsel %vm304, %v2551, %v2567
    %v2583 = vsel %vm304, %v2553, %v2569
    %v2584 = vsel %vm304, %v2555, %v2571
    %v2585 = vsel %vm304, %v2557, %v2573
    %v2586 = vsel %vm304, %v2559, %v2575
    %v2587 = vsel %vm304, %v2561, %v2577
    %v2588 = vsel %vm304, %v2563, %v2579
    %v2589 = vsel %vm304, %v2565, %v2581
    %v2590 = vsel %vm304, %v2567, %v2551
    %v2591 = vsel %vm304, %v2569, %v2553
    %v2592 = vsel %vm304, %v2571, %v2555
    %v2593 = vsel %vm304, %v2573, %v2557
    %v2594 = vsel %vm304, %v2575, %v2559
    %v2595 = vsel %vm304, %v2577, %v2561
    %v2596 = vsel %vm304, %v2579, %v2563
    %v2597 = vsel %vm304, %v2581, %v2565
    %s2598 = scalar_lea.vmem [#allocation6], 39
    %v2599 = vld [vmem:[%s2598] ss:$8 sm:$0x3]
    %v2601 = vlaneseq
    %v2602 = vshrl.u32 %v2601, 7
    %v2603 = vsub.s32 0, %v2602
    %v2604 = vrot.slane %v2599, %v2603
    %v2605 = vlaneseq
    %v2606 = vshrl.u32 %v2605, 7
    %v2607 = vsub.s32 1, %v2606
    %v2608 = vrot.slane %v2599, %v2607
    %v2611 = vmul.f32 %v2582, %v2604
    %v2612 = vmul.f32 %v2590, %v2608
    %v2613 = vmul.f32 %v2583, %v2604
    %v2614 = vmul.f32 %v2591, %v2608
    %v2615 = vmul.f32 %v2584, %v2604
    %v2616 = vmul.f32 %v2592, %v2608
    %v2617 = vmul.f32 %v2585, %v2604
    %v2618 = vmul.f32 %v2593, %v2608
    %v2619 = vmul.f32 %v2586, %v2604
    %v2620 = vmul.f32 %v2594, %v2608
    %v2621 = vmul.f32 %v2587, %v2604
    %v2622 = vmul.f32 %v2595, %v2608
    %v2623 = vmul.f32 %v2588, %v2604
    %v2624 = vmul.f32 %v2596, %v2608
    %v2625 = vmul.f32 %v2589, %v2604
    %v2626 = vmul.f32 %v2597, %v2608
    %v2627 = vadd.f32 %v2534, %v2611
    %v2628 = vadd.f32 %v2535, %v2612
    %v2629 = vadd.f32 %v2536, %v2613
    %v2630 = vadd.f32 %v2537, %v2614
    %v2631 = vadd.f32 %v2538, %v2615
    %v2632 = vadd.f32 %v2539, %v2616
    %v2633 = vadd.f32 %v2540, %v2617
    %v2634 = vadd.f32 %v2541, %v2618
    %v2635 = vadd.f32 %v2542, %v2619
    %v2636 = vadd.f32 %v2543, %v2620
    %v2637 = vadd.f32 %v2544, %v2621
    %v2638 = vadd.f32 %v2545, %v2622
    %v2639 = vadd.f32 %v2546, %v2623
    %v2640 = vadd.f32 %v2547, %v2624
    %v2641 = vadd.f32 %v2548, %v2625
    %v2642 = vadd.f32 %v2549, %v2626
    %v2643 = vld [vmem:[%s2036] sm:$0xfc]
    %v2644 = vld [vmem:[%s2036 + $0x8] sm:$0xfc]
    %v2645 = vld [vmem:[%s2036 + $0x30] sm:$0xff]
    %v2646 = vld [vmem:[%s2036 + $0x38] sm:$0xff]
    %v2647 = vld [vmem:[%s2036 + $0xc0] sm:$0xfc]
    %v2648 = vld [vmem:[%s2036 + $0xc8] sm:$0xfc]
    %v2649 = vld [vmem:[%s2036 + $0xf0] sm:$0xff]
    %v2650 = vld [vmem:[%s2036 + $0xf8] sm:$0xff]
    %s2651 = scalar_lea.vmem [#allocation6], 48
    %v2652 = vld [vmem:[%s2651] ss:$8 sm:$0x3]
    %v2654 = vlaneseq
    %v2655 = vshrl.u32 %v2654, 7
    %v2656 = vsub.s32 0, %v2655
    %v2657 = vrot.slane %v2652, %v2656
    %v2658 = vlaneseq
    %v2659 = vshrl.u32 %v2658, 7
    %v2660 = vsub.s32 1, %v2659
    %v2661 = vrot.slane %v2652, %v2660
    %v2664 = vmul.f32 %v2643, %v2657
    %v2665 = vmul.f32 %v2644, %v2661
    %v2666 = vmul.f32 %v2039, %v2657
    %v2667 = vmul.f32 %v2040, %v2661
    %v2668 = vmul.f32 %v2041, %v2657
    %v2669 = vmul.f32 %v2042, %v2661
    %v2670 = vmul.f32 %v2645, %v2657
    %v2671 = vmul.f32 %v2646, %v2661
    %v2672 = vmul.f32 %v2647, %v2657
    %v2673 = vmul.f32 %v2648, %v2661
    %v2674 = vmul.f32 %v2047, %v2657
    %v2675 = vmul.f32 %v2048, %v2661
    %v2676 = vmul.f32 %v2049, %v2657
    %v2677 = vmul.f32 %v2050, %v2661
    %v2678 = vmul.f32 %v2649, %v2657
    %v2679 = vmul.f32 %v2650, %v2661
    %v2696 = vrot.slane %v2664, 2
    %v2697 = vrot.slane %v2666, 2
    %v2698 = vsel %vm779, %v2696, %v2697
    %v2699 = vrot.slane %v2665, 2
    %v2700 = vrot.slane %v2667, 2
    %v2701 = vsel %vm779, %v2699, %v2700
    %v2702 = vrot.slane %v2668, 2
    %v2703 = vsel %vm779, %v2697, %v2702
    %v2704 = vrot.slane %v2669, 2
    %v2705 = vsel %vm779, %v2700, %v2704
    %v2706 = vrot.slane %v2670, 2
    %v2707 = vsel %vm779, %v2702, %v2706
    %v2708 = vrot.slane %v2671, 2
    %v2709 = vsel %vm779, %v2704, %v2708
    %v2710 = vrot.slane %v2672, 2
    %v2711 = vrot.slane %v2674, 2
    %v2712 = vsel %vm779, %v2710, %v2711
    %v2713 = vrot.slane %v2673, 2
    %v2714 = vrot.slane %v2675, 2
    %v2715 = vsel %vm779, %v2713, %v2714
    %v2716 = vrot.slane %v2676, 2
    %v2717 = vsel %vm779, %v2711, %v2716
    %v2718 = vrot.slane %v2677, 2
    %v2719 = vsel %vm779, %v2714, %v2718
    %v2720 = vrot.slane %v2678, 2
    %v2721 = vsel %vm779, %v2716, %v2720
    %v2722 = vrot.slane %v2679, 2
    %v2723 = vsel %vm779, %v2718, %v2722
    %v2740 = vadd.f32 %v2627, %v2698
    %v2741 = vadd.f32 %v2628, %v2701
    %v2742 = vadd.f32 %v2629, %v2703
    %v2743 = vadd.f32 %v2630, %v2705
    %v2744 = vadd.f32 %v2631, %v2707
    %v2745 = vadd.f32 %v2632, %v2709
    %v2746 = vadd.f32 %v2633, %v2706
    %v2747 = vadd.f32 %v2634, %v2708
    %v2748 = vadd.f32 %v2635, %v2712
    %v2749 = vadd.f32 %v2636, %v2715
    %v2750 = vadd.f32 %v2637, %v2717
    %v2751 = vadd.f32 %v2638, %v2719
    %v2752 = vadd.f32 %v2639, %v2721
    %v2753 = vadd.f32 %v2640, %v2723
    %v2754 = vadd.f32 %v2641, %v2720
    %v2755 = vadd.f32 %v2642, %v2722
    %v2764 = vrot.slane %v2643, 2
    %v2765 = vrot.slane %v2039, 2
    %v2766 = vsel %vm779, %v2764, %v2765
    %v2767 = vrot.slane %v2644, 2
    %v2768 = vrot.slane %v2040, 2
    %v2769 = vsel %vm779, %v2767, %v2768
    %v2770 = vrot.slane %v2041, 2
    %v2771 = vsel %vm779, %v2765, %v2770
    %v2772 = vrot.slane %v2042, 2
    %v2773 = vsel %vm779, %v2768, %v2772
    %v2774 = vrot.slane %v2645, 2
    %v2775 = vsel %vm779, %v2770, %v2774
    %v2776 = vrot.slane %v2646, 2
    %v2777 = vsel %vm779, %v2772, %v2776
    %v2778 = vrot.slane %v2647, 2
    %v2779 = vrot.slane %v2047, 2
    %v2780 = vsel %vm779, %v2778, %v2779
    %v2781 = vrot.slane %v2648, 2
    %v2782 = vrot.slane %v2048, 2
    %v2783 = vsel %vm779, %v2781, %v2782
    %v2784 = vrot.slane %v2049, 2
    %v2785 = vsel %vm779, %v2779, %v2784
    %v2786 = vrot.slane %v2050, 2
    %v2787 = vsel %vm779, %v2782, %v2786
    %v2788 = vrot.slane %v2649, 2
    %v2789 = vsel %vm779, %v2784, %v2788
    %v2790 = vrot.slane %v2650, 2
    %v2791 = vsel %vm779, %v2786, %v2790
    %2808 = vrot.lane.b32.xlu0 %v2766, 120
    %v2809 = vpop.permute.xlu0 %2808
    %2810 = vrot.lane.b32.xlu0 %v2771, 120
    %v2811 = vpop.permute.xlu0 %2810
    %2812 = vrot.lane.b32.xlu0 %v2775, 120
    %v2813 = vpop.permute.xlu0 %2812
    %2814 = vrot.lane.b32.xlu0 %v2774, 120
    %v2815 = vpop.permute.xlu0 %2814
    %2816 = vrot.lane.b32.xlu0 %v2780, 120
    %v2817 = vpop.permute.xlu0 %2816
    %2818 = vrot.lane.b32.xlu0 %v2785, 120
    %v2819 = vpop.permute.xlu0 %2818
    %2820 = vrot.lane.b32.xlu0 %v2789, 120
    %v2821 = vpop.permute.xlu0 %2820
    %2822 = vrot.lane.b32.xlu0 %v2788, 120
    %v2823 = vpop.permute.xlu0 %2822
    %2824 = vrot.lane.b32.xlu0 %v2769, 120
    %v2825 = vpop.permute.xlu0 %2824
    %2826 = vrot.lane.b32.xlu0 %v2773, 120
    %v2827 = vpop.permute.xlu0 %2826
    %2828 = vrot.lane.b32.xlu0 %v2777, 120
    %v2829 = vpop.permute.xlu0 %2828
    %2830 = vrot.lane.b32.xlu0 %v2776, 120
    %v2831 = vpop.permute.xlu0 %2830
    %2832 = vrot.lane.b32.xlu0 %v2783, 120
    %v2833 = vpop.permute.xlu0 %2832
    %2834 = vrot.lane.b32.xlu0 %v2787, 120
    %v2835 = vpop.permute.xlu0 %2834
    %2836 = vrot.lane.b32.xlu0 %v2791, 120
    %v2837 = vpop.permute.xlu0 %2836
    %2838 = vrot.lane.b32.xlu0 %v2790, 120
    %v2839 = vpop.permute.xlu0 %2838
    %v2840 = vsel %vm210, %v2809, %v2825
    %v2841 = vsel %vm210, %v2811, %v2827
    %v2842 = vsel %vm210, %v2813, %v2829
    %v2843 = vsel %vm210, %v2815, %v2831
    %v2844 = vsel %vm210, %v2817, %v2833
    %v2845 = vsel %vm210, %v2819, %v2835
    %v2846 = vsel %vm210, %v2821, %v2837
    %v2847 = vsel %vm210, %v2823, %v2839
    %v2848 = vsel %vm210, %v2825, %v2809
    %v2849 = vsel %vm210, %v2827, %v2811
    %v2850 = vsel %vm210, %v2829, %v2813
    %v2851 = vsel %vm210, %v2831, %v2815
    %v2852 = vsel %vm210, %v2833, %v2817
    %v2853 = vsel %vm210, %v2835, %v2819
    %v2854 = vsel %vm210, %v2837, %v2821
    %v2855 = vsel %vm210, %v2839, %v2823
    %s2856 = scalar_lea.vmem [#allocation6], 49
    %v2857 = vld [vmem:[%s2856] ss:$8 sm:$0x3]
    %v2859 = vlaneseq
    %v2860 = vshrl.u32 %v2859, 7
    %v2861 = vsub.s32 0, %v2860
    %v2862 = vrot.slane %v2857, %v2861
    %v2863 = vlaneseq
    %v2864 = vshrl.u32 %v2863, 7
    %v2865 = vsub.s32 1, %v2864
    %v2866 = vrot.slane %v2857, %v2865
    %v2869 = vmul.f32 %v2840, %v2862
    %v2870 = vmul.f32 %v2848, %v2866
    %v2871 = vmul.f32 %v2841, %v2862
    %v2872 = vmul.f32 %v2849, %v2866
    %v2873 = vmul.f32 %v2842, %v2862
    %v2874 = vmul.f32 %v2850, %v2866
    %v2875 = vmul.f32 %v2843, %v2862
    %v2876 = vmul.f32 %v2851, %v2866
    %v2877 = vmul.f32 %v2844, %v2862
    %v2878 = vmul.f32 %v2852, %v2866
    %v2879 = vmul.f32 %v2845, %v2862
    %v2880 = vmul.f32 %v2853, %v2866
    %v2881 = vmul.f32 %v2846, %v2862
    %v2882 = vmul.f32 %v2854, %v2866
    %v2883 = vmul.f32 %v2847, %v2862
    %v2884 = vmul.f32 %v2855, %v2866
    %v2885 = vadd.f32 %v2740, %v2869
    %v2886 = vadd.f32 %v2741, %v2870
    %v2887 = vadd.f32 %v2742, %v2871
    %v2888 = vadd.f32 %v2743, %v2872
    %v2889 = vadd.f32 %v2744, %v2873
    %v2890 = vadd.f32 %v2745, %v2874
    %v2891 = vadd.f32 %v2746, %v2875
    %v2892 = vadd.f32 %v2747, %v2876
    %v2893 = vadd.f32 %v2748, %v2877
    %v2894 = vadd.f32 %v2749, %v2878
    %v2895 = vadd.f32 %v2750, %v2879
    %v2896 = vadd.f32 %v2751, %v2880
    %v2897 = vadd.f32 %v2752, %v2881
    %v2898 = vadd.f32 %v2753, %v2882
    %v2899 = vadd.f32 %v2754, %v2883
    %v2900 = vadd.f32 %v2755, %v2884
    %2901 = vrot.lane.b32.xlu0 %v2766, 112
    %v2902 = vpop.permute.xlu0 %2901
    %2903 = vrot.lane.b32.xlu0 %v2771, 112
    %v2904 = vpop.permute.xlu0 %2903
    %2905 = vrot.lane.b32.xlu0 %v2775, 112
    %v2906 = vpop.permute.xlu0 %2905
    %2907 = vrot.lane.b32.xlu0 %v2774, 112
    %v2908 = vpop.permute.xlu0 %2907
    %2909 = vrot.lane.b32.xlu0 %v2780, 112
    %v2910 = vpop.permute.xlu0 %2909
    %2911 = vrot.lane.b32.xlu0 %v2785, 112
    %v2912 = vpop.permute.xlu0 %2911
    %2913 = vrot.lane.b32.xlu0 %v2789, 112
    %v2914 = vpop.permute.xlu0 %2913
    %2915 = vrot.lane.b32.xlu0 %v2788, 112
    %v2916 = vpop.permute.xlu0 %2915
    %2917 = vrot.lane.b32.xlu0 %v2769, 112
    %v2918 = vpop.permute.xlu0 %2917
    %2919 = vrot.lane.b32.xlu0 %v2773, 112
    %v2920 = vpop.permute.xlu0 %2919
    %2921 = vrot.lane.b32.xlu0 %v2777, 112
    %v2922 = vpop.permute.xlu0 %2921
    %2923 = vrot.lane.b32.xlu0 %v2776, 112
    %v2924 = vpop.permute.xlu0 %2923
    %2925 = vrot.lane.b32.xlu0 %v2783, 112
    %v2926 = vpop.permute.xlu0 %2925
    %2927 = vrot.lane.b32.xlu0 %v2787, 112
    %v2928 = vpop.permute.xlu0 %2927
    %2929 = vrot.lane.b32.xlu0 %v2791, 112
    %v2930 = vpop.permute.xlu0 %2929
    %2931 = vrot.lane.b32.xlu0 %v2790, 112
    %v2932 = vpop.permute.xlu0 %2931
    %v2933 = vsel %vm304, %v2902, %v2918
    %v2934 = vsel %vm304, %v2904, %v2920
    %v2935 = vsel %vm304, %v2906, %v2922
    %v2936 = vsel %vm304, %v2908, %v2924
    %v2937 = vsel %vm304, %v2910, %v2926
    %v2938 = vsel %vm304, %v2912, %v2928
    %v2939 = vsel %vm304, %v2914, %v2930
    %v2940 = vsel %vm304, %v2916, %v2932
    %v2941 = vsel %vm304, %v2918, %v2902
    %v2942 = vsel %vm304, %v2920, %v2904
    %v2943 = vsel %vm304, %v2922, %v2906
    %v2944 = vsel %vm304, %v2924, %v2908
    %v2945 = vsel %vm304, %v2926, %v2910
    %v2946 = vsel %vm304, %v2928, %v2912
    %v2947 = vsel %vm304, %v2930, %v2914
    %v2948 = vsel %vm304, %v2932, %v2916
    %s2949 = scalar_lea.vmem [#allocation6], 50
    %v2950 = vld [vmem:[%s2949] ss:$8 sm:$0x3]
    %v2952 = vlaneseq
    %v2953 = vshrl.u32 %v2952, 7
    %v2954 = vsub.s32 0, %v2953
    %v2955 = vrot.slane %v2950, %v2954
    %v2956 = vlaneseq
    %v2957 = vshrl.u32 %v2956, 7
    %v2958 = vsub.s32 1, %v2957
    %v2959 = vrot.slane %v2950, %v2958
    %v2962 = vmul.f32 %v2933, %v2955
    %v2963 = vmul.f32 %v2941, %v2959
    %v2964 = vmul.f32 %v2934, %v2955
    %v2965 = vmul.f32 %v2942, %v2959
    %v2966 = vmul.f32 %v2935, %v2955
    %v2967 = vmul.f32 %v2943, %v2959
    %v2968 = vmul.f32 %v2936, %v2955
    %v2969 = vmul.f32 %v2944, %v2959
    %v2970 = vmul.f32 %v2937, %v2955
    %v2971 = vmul.f32 %v2945, %v2959
    %v2972 = vmul.f32 %v2938, %v2955
    %v2973 = vmul.f32 %v2946, %v2959
    %v2974 = vmul.f32 %v2939, %v2955
    %v2975 = vmul.f32 %v2947, %v2959
    %v2976 = vmul.f32 %v2940, %v2955
    %v2977 = vmul.f32 %v2948, %v2959
    %v2978 = vadd.f32 %v2885, %v2962
    %v2979 = vadd.f32 %v2886, %v2963
    %v2980 = vadd.f32 %v2887, %v2964
    %v2981 = vadd.f32 %v2888, %v2965
    %v2982 = vadd.f32 %v2889, %v2966
    %v2983 = vadd.f32 %v2890, %v2967
    %v2984 = vadd.f32 %v2891, %v2968
    %v2985 = vadd.f32 %v2892, %v2969
    %v2986 = vadd.f32 %v2893, %v2970
    %v2987 = vadd.f32 %v2894, %v2971
    %v2988 = vadd.f32 %v2895, %v2972
    %v2989 = vadd.f32 %v2896, %v2973
    %v2990 = vadd.f32 %v2897, %v2974
    %v2991 = vadd.f32 %v2898, %v2975
    %v2992 = vadd.f32 %v2899, %v2976
    %v2993 = vadd.f32 %v2900, %v2977
    %v2994 = vld [vmem:[#allocation8] sm:$0x3]
    %v2996 = vlaneseq
    %v2997 = vshrl.u32 %v2996, 7
    %v2998 = vsub.s32 0, %v2997
    %v2999 = vrot.slane %v2994, %v2998
    %v3000 = vlaneseq
    %v3001 = vshrl.u32 %v3000, 7
    %v3002 = vsub.s32 1, %v3001
    %v3003 = vrot.slane %v2994, %v3002
    %v3006 = vadd.f32 %v2978, %v2999
    %v3007 = vadd.f32 %v2979, %v3003
    %v3008 = vadd.f32 %v2980, %v2999
    %v3009 = vadd.f32 %v2981, %v3003
    %v3010 = vadd.f32 %v2982, %v2999
    %v3011 = vadd.f32 %v2983, %v3003
    %v3012 = vadd.f32 %v2984, %v2999
    %v3013 = vadd.f32 %v2985, %v3003
    %v3014 = vadd.f32 %v2986, %v2999
    %v3015 = vadd.f32 %v2987, %v3003
    %v3016 = vadd.f32 %v2988, %v2999
    %v3017 = vadd.f32 %v2989, %v3003
    %v3018 = vadd.f32 %v2990, %v2999
    %v3019 = vadd.f32 %v2991, %v3003
    %v3020 = vadd.f32 %v2992, %v2999
    %v3021 = vadd.f32 %v2993, %v3003
    %v3022 = vmax.f32 %v3006, 0.0
    %v3023 = vmax.f32 %v3007, 0.0
    %v3024 = vmax.f32 %v3008, 0.0
    %v3025 = vmax.f32 %v3009, 0.0
    %v3026 = vmax.f32 %v3010, 0.0
    %v3027 = vmax.f32 %v3011, 0.0
    %v3028 = vmax.f32 %v3012, 0.0
    %v3029 = vmax.f32 %v3013, 0.0
    %v3030 = vmax.f32 %v3014, 0.0
    %v3031 = vmax.f32 %v3015, 0.0
    %v3032 = vmax.f32 %v3016, 0.0
    %v3033 = vmax.f32 %v3017, 0.0
    %v3034 = vmax.f32 %v3018, 0.0
    %v3035 = vmax.f32 %v3019, 0.0
    %v3036 = vmax.f32 %v3020, 0.0
    %v3037 = vmax.f32 %v3021, 0.0
    %3038 = vst [vmem:[#allocation2] sm:$0xff] %v3022
    %3039 = vst [vmem:[#allocation2 + $0x8] sm:$0xff] %v3023
    %3040 = vst [vmem:[#allocation2 + $0x10] sm:$0xff] %v3024
    %3041 = vst [vmem:[#allocation2 + $0x18] sm:$0xff] %v3025
    %3042 = vst [vmem:[#allocation2 + $0x20] sm:$0xff] %v3026
    %3043 = vst [vmem:[#allocation2 + $0x28] sm:$0xff] %v3027
    %3044 = vst [vmem:[#allocation2 + $0x30] sm:$0x3f] %v3028
    %3045 = vst [vmem:[#allocation2 + $0x38] sm:$0x3f] %v3029
    %3046 = vst [vmem:[#allocation2 + $0x40] sm:$0xff] %v3030
    %3047 = vst [vmem:[#allocation2 + $0x48] sm:$0xff] %v3031
    %3048 = vst [vmem:[#allocation2 + $0x50] sm:$0xff] %v3032
    %3049 = vst [vmem:[#allocation2 + $0x58] sm:$0xff] %v3033
    %3050 = vst [vmem:[#allocation2 + $0x60] sm:$0xff] %v3034
    %3051 = vst [vmem:[#allocation2 + $0x68] sm:$0xff] %v3035
    %3052 = vst [vmem:[#allocation2 + $0x70] sm:$0x3f] %v3036
    %3053 = vst [vmem:[#allocation2 + $0x78] sm:$0x3f] %v3037
    %v3054 = vld [vmem:[#allocation2] ss:$8 sm:$0x3]
    %s3055 = scalar_lea.vmem [#allocation2], 64
    %v3056 = vld [vmem:[%s3055] ss:$8 sm:$0x3]
    %s3057 = scalar_lea.vmem [#allocation2], 1
    %v3058 = vld [vmem:[%s3057] ss:$8 sm:$0x3]
    %s3059 = scalar_lea.vmem [#allocation2], 65
    %v3060 = vld [vmem:[%s3059] ss:$8 sm:$0x3]
    %v3061 = vmax.f32 %v3054, %v3058
    %v3062 = vmax.f32 %v3056, %v3060
    %s3063 = scalar_lea.vmem [#allocation2], 2
    %v3064 = vld [vmem:[%s3063] ss:$8 sm:$0x3]
    %s3065 = scalar_lea.vmem [#allocation2], 66
    %v3066 = vld [vmem:[%s3065] ss:$8 sm:$0x3]
    %v3067 = vmax.f32 %v3061, %v3064
    %v3068 = vmax.f32 %v3062, %v3066
    %s3069 = scalar_lea.vmem [#allocation2], 3
    %v3070 = vld [vmem:[%s3069] ss:$8 sm:$0x3]
    %s3071 = scalar_lea.vmem [#allocation2], 67
    %v3072 = vld [vmem:[%s3071] ss:$8 sm:$0x3]
    %v3073 = vmax.f32 %v3067, %v3070
    %v3074 = vmax.f32 %v3068, %v3072
    %s3075 = scalar_lea.vmem [#allocation2], 4
    %v3076 = vld [vmem:[%s3075] ss:$8 sm:$0x3]
    %s3077 = scalar_lea.vmem [#allocation2], 68
    %v3078 = vld [vmem:[%s3077] ss:$8 sm:$0x3]
    %v3079 = vmax.f32 %v3073, %v3076
    %v3080 = vmax.f32 %v3074, %v3078
    %s3081 = scalar_lea.vmem [#allocation2], 5
    %v3082 = vld [vmem:[%s3081] ss:$8 sm:$0x3]
    %s3083 = scalar_lea.vmem [#allocation2], 69
    %v3084 = vld [vmem:[%s3083] ss:$8 sm:$0x3]
    %s3085 = scalar_lea.vmem [#allocation2], 6
    %v3086 = vld [vmem:[%s3085] ss:$8 sm:$0x3]
    %s3087 = scalar_lea.vmem [#allocation2], 70
    %v3088 = vld [vmem:[%s3087] ss:$8 sm:$0x3]
    %v3089 = vmax.f32 %v3082, %v3086
    %v3090 = vmax.f32 %v3084, %v3088
    %s3091 = scalar_lea.vmem [#allocation2], 7
    %v3092 = vld [vmem:[%s3091] ss:$8 sm:$0x3]
    %s3093 = scalar_lea.vmem [#allocation2], 71
    %v3094 = vld [vmem:[%s3093] ss:$8 sm:$0x3]
    %v3095 = vmax.f32 %v3089, %v3092
    %v3096 = vmax.f32 %v3090, %v3094
    %s3097 = scalar_lea.vmem [#allocation2], 16
    %v3098 = vld [vmem:[%s3097] ss:$8 sm:$0x3]
    %s3099 = scalar_lea.vmem [#allocation2], 80
    %v3100 = vld [vmem:[%s3099] ss:$8 sm:$0x3]
    %v3101 = vmax.f32 %v3095, %v3098
    %v3102 = vmax.f32 %v3096, %v3100
    %s3103 = scalar_lea.vmem [#allocation2], 17
    %v3104 = vld [vmem:[%s3103] ss:$8 sm:$0x3]
    %s3105 = scalar_lea.vmem [#allocation2], 81
    %v3106 = vld [vmem:[%s3105] ss:$8 sm:$0x3]
    %v3107 = vmax.f32 %v3101, %v3104
    %v3108 = vmax.f32 %v3102, %v3106
    %s3109 = scalar_lea.vmem [#allocation2], 18
    %v3110 = vld [vmem:[%s3109] ss:$8 sm:$0x3]
    %s3111 = scalar_lea.vmem [#allocation2], 82
    %v3112 = vld [vmem:[%s3111] ss:$8 sm:$0x3]
    %s3113 = scalar_lea.vmem [#allocation2], 19
    %v3114 = vld [vmem:[%s3113] ss:$8 sm:$0x3]
    %s3115 = scalar_lea.vmem [#allocation2], 83
    %v3116 = vld [vmem:[%s3115] ss:$8 sm:$0x3]
    %v3117 = vmax.f32 %v3110, %v3114
    %v3118 = vmax.f32 %v3112, %v3116
    %s3119 = scalar_lea.vmem [#allocation2], 20
    %v3120 = vld [vmem:[%s3119] ss:$8 sm:$0x3]
    %s3121 = scalar_lea.vmem [#allocation2], 84
    %v3122 = vld [vmem:[%s3121] ss:$8 sm:$0x3]
    %v3123 = vmax.f32 %v3117, %v3120
    %v3124 = vmax.f32 %v3118, %v3122
    %s3125 = scalar_lea.vmem [#allocation2], 21
    %v3126 = vld [vmem:[%s3125] ss:$8 sm:$0x3]
    %s3127 = scalar_lea.vmem [#allocation2], 85
    %v3128 = vld [vmem:[%s3127] ss:$8 sm:$0x3]
    %v3129 = vmax.f32 %v3123, %v3126
    %v3130 = vmax.f32 %v3124, %v3128
    %s3131 = scalar_lea.vmem [#allocation2], 22
    %v3132 = vld [vmem:[%s3131] ss:$8 sm:$0x3]
    %s3133 = scalar_lea.vmem [#allocation2], 86
    %v3134 = vld [vmem:[%s3133] ss:$8 sm:$0x3]
    %v3135 = vmax.f32 %v3129, %v3132
    %v3136 = vmax.f32 %v3130, %v3134
    %s3137 = scalar_lea.vmem [#allocation2], 23
    %v3138 = vld [vmem:[%s3137] ss:$8 sm:$0x3]
    %s3139 = scalar_lea.vmem [#allocation2], 87
    %v3140 = vld [vmem:[%s3139] ss:$8 sm:$0x3]
    %s3141 = scalar_lea.vmem [#allocation2], 32
    %v3142 = vld [vmem:[%s3141] ss:$8 sm:$0x3]
    %s3143 = scalar_lea.vmem [#allocation2], 96
    %v3144 = vld [vmem:[%s3143] ss:$8 sm:$0x3]
    %v3145 = vmax.f32 %v3138, %v3142
    %v3146 = vmax.f32 %v3140, %v3144
    %s3147 = scalar_lea.vmem [#allocation2], 33
    %v3148 = vld [vmem:[%s3147] ss:$8 sm:$0x3]
    %s3149 = scalar_lea.vmem [#allocation2], 97
    %v3150 = vld [vmem:[%s3149] ss:$8 sm:$0x3]
    %v3151 = vmax.f32 %v3145, %v3148
    %v3152 = vmax.f32 %v3146, %v3150
    %s3153 = scalar_lea.vmem [#allocation2], 34
    %v3154 = vld [vmem:[%s3153] ss:$8 sm:$0x3]
    %s3155 = scalar_lea.vmem [#allocation2], 98
    %v3156 = vld [vmem:[%s3155] ss:$8 sm:$0x3]
    %v3157 = vmax.f32 %v3151, %v3154
    %v3158 = vmax.f32 %v3152, %v3156
    %s3159 = scalar_lea.vmem [#allocation2], 35
    %v3160 = vld [vmem:[%s3159] ss:$8 sm:$0x3]
    %s3161 = scalar_lea.vmem [#allocation2], 99
    %v3162 = vld [vmem:[%s3161] ss:$8 sm:$0x3]
    %v3163 = vmax.f32 %v3157, %v3160
    %v3164 = vmax.f32 %v3158, %v3162
    %s3165 = scalar_lea.vmem [#allocation2], 36
    %v3166 = vld [vmem:[%s3165] ss:$8 sm:$0x3]
    %s3167 = scalar_lea.vmem [#allocation2], 100
    %v3168 = vld [vmem:[%s3167] ss:$8 sm:$0x3]
    %s3169 = scalar_lea.vmem [#allocation2], 37
    %v3170 = vld [vmem:[%s3169] ss:$8 sm:$0x3]
    %s3171 = scalar_lea.vmem [#allocation2], 101
    %v3172 = vld [vmem:[%s3171] ss:$8 sm:$0x3]
    %v3173 = vmax.f32 %v3166, %v3170
    %v3174 = vmax.f32 %v3168, %v3172
    %s3175 = scalar_lea.vmem [#allocation2], 38
    %v3176 = vld [vmem:[%s3175] ss:$8 sm:$0x3]
    %s3177 = scalar_lea.vmem [#allocation2], 102
    %v3178 = vld [vmem:[%s3177] ss:$8 sm:$0x3]
    %v3179 = vmax.f32 %v3173, %v3176
    %v3180 = vmax.f32 %v3174, %v3178
    %s3181 = scalar_lea.vmem [#allocation2], 39
    %v3182 = vld [vmem:[%s3181] ss:$8 sm:$0x3]
    %s3183 = scalar_lea.vmem [#allocation2], 103
    %v3184 = vld [vmem:[%s3183] ss:$8 sm:$0x3]
    %v3185 = vmax.f32 %v3179, %v3182
    %v3186 = vmax.f32 %v3180, %v3184
    %s3187 = scalar_lea.vmem [#allocation2], 48
    %v3188 = vld [vmem:[%s3187] ss:$8 sm:$0x3]
    %s3189 = scalar_lea.vmem [#allocation2], 112
    %v3190 = vld [vmem:[%s3189] ss:$8 sm:$0x3]
    %v3191 = vmax.f32 %v3185, %v3188
    %v3192 = vmax.f32 %v3186, %v3190
    %s3193 = scalar_lea.vmem [#allocation2], 49
    %v3194 = vld [vmem:[%s3193] ss:$8 sm:$0x3]
    %s3195 = scalar_lea.vmem [#allocation2], 113
    %v3196 = vld [vmem:[%s3195] ss:$8 sm:$0x3]
    %s3197 = scalar_lea.vmem [#allocation2], 50
    %v3198 = vld [vmem:[%s3197] ss:$8 sm:$0x3]
    %s3199 = scalar_lea.vmem [#allocation2], 114
    %v3200 = vld [vmem:[%s3199] ss:$8 sm:$0x3]
    %v3201 = vmax.f32 %v3194, %v3198
    %v3202 = vmax.f32 %v3196, %v3200
    %s3203 = scalar_lea.vmem [#allocation2], 51
    %v3204 = vld [vmem:[%s3203] ss:$8 sm:$0x3]
    %s3205 = scalar_lea.vmem [#allocation2], 115
    %v3206 = vld [vmem:[%s3205] ss:$8 sm:$0x3]
    %v3207 = vmax.f32 %v3201, %v3204
    %v3208 = vmax.f32 %v3202, %v3206
    %s3209 = scalar_lea.vmem [#allocation2], 52
    %v3210 = vld [vmem:[%s3209] ss:$8 sm:$0x3]
    %s3211 = scalar_lea.vmem [#allocation2], 116
    %v3212 = vld [vmem:[%s3211] ss:$8 sm:$0x3]
    %v3213 = vmax.f32 %v3207, %v3210
    %v3214 = vmax.f32 %v3208, %v3212
    %s3215 = scalar_lea.vmem [#allocation2], 53
    %v3216 = vld [vmem:[%s3215] ss:$8 sm:$0x3]
    %s3217 = scalar_lea.vmem [#allocation2], 117
    %v3218 = vld [vmem:[%s3217] ss:$8 sm:$0x3]
    %v3219 = vmax.f32 %v3213, %v3216
    %v3220 = vmax.f32 %v3214, %v3218
    %v3223 = vlaneseq
    %v3224 = vshrl.u32 %v3223, 7
    %v3225 = vsub.s32 0, %v3224
    %v3226 = vrot.slane %v3079, %v3225
    %v3227 = vlaneseq
    %v3228 = vshrl.u32 %v3227, 7
    %v3229 = vsub.s32 1, %v3228
    %v3230 = vrot.slane %v3079, %v3229
    %v3231 = vlaneseq
    %v3232 = vshrl.u32 %v3231, 7
    %v3233 = vsub.s32 0, %v3232
    %v3234 = vrot.slane %v3080, %v3233
    %v3235 = vlaneseq
    %v3236 = vshrl.u32 %v3235, 7
    %v3237 = vsub.s32 1, %v3236
    %v3238 = vrot.slane %v3080, %v3237
    %v3245 = vlaneseq
    %v3246 = vshrl.u32 %v3245, 7
    %v3247 = vsub.s32 0, %v3246
    %v3248 = vrot.slane %v3107, %v3247
    %v3249 = vlaneseq
    %v3250 = vshrl.u32 %v3249, 7
    %v3251 = vsub.s32 1, %v3250
    %v3252 = vrot.slane %v3107, %v3251
    %v3253 = vlaneseq
    %v3254 = vshrl.u32 %v3253, 7
    %v3255 = vsub.s32 0, %v3254
    %v3256 = vrot.slane %v3108, %v3255
    %v3257 = vlaneseq
    %v3258 = vshrl.u32 %v3257, 7
    %v3259 = vsub.s32 1, %v3258
    %v3260 = vrot.slane %v3108, %v3259
    %v3267 = vlaneseq
    %v3268 = vshrl.u32 %v3267, 7
    %v3269 = vsub.s32 0, %v3268
    %v3270 = vrot.slane %v3135, %v3269
    %v3271 = vlaneseq
    %v3272 = vshrl.u32 %v3271, 7
    %v3273 = vsub.s32 1, %v3272
    %v3274 = vrot.slane %v3135, %v3273
    %v3275 = vlaneseq
    %v3276 = vshrl.u32 %v3275, 7
    %v3277 = vsub.s32 0, %v3276
    %v3278 = vrot.slane %v3136, %v3277
    %v3279 = vlaneseq
    %v3280 = vshrl.u32 %v3279, 7
    %v3281 = vsub.s32 1, %v3280
    %v3282 = vrot.slane %v3136, %v3281
    %v3289 = vlaneseq
    %v3290 = vshrl.u32 %v3289, 7
    %v3291 = vsub.s32 0, %v3290
    %v3292 = vrot.slane %v3163, %v3291
    %v3293 = vlaneseq
    %v3294 = vshrl.u32 %v3293, 7
    %v3295 = vsub.s32 1, %v3294
    %v3296 = vrot.slane %v3163, %v3295
    %v3297 = vlaneseq
    %v3298 = vshrl.u32 %v3297, 7
    %v3299 = vsub.s32 0, %v3298
    %v3300 = vrot.slane %v3164, %v3299
    %v3301 = vlaneseq
    %v3302 = vshrl.u32 %v3301, 7
    %v3303 = vsub.s32 1, %v3302
    %v3304 = vrot.slane %v3164, %v3303
    %v3311 = vlaneseq
    %v3312 = vshrl.u32 %v3311, 7
    %v3313 = vsub.s32 0, %v3312
    %v3314 = vrot.slane %v3191, %v3313
    %v3315 = vlaneseq
    %v3316 = vshrl.u32 %v3315, 7
    %v3317 = vsub.s32 1, %v3316
    %v3318 = vrot.slane %v3191, %v3317
    %v3319 = vlaneseq
    %v3320 = vshrl.u32 %v3319, 7
    %v3321 = vsub.s32 0, %v3320
    %v3322 = vrot.slane %v3192, %v3321
    %v3323 = vlaneseq
    %v3324 = vshrl.u32 %v3323, 7
    %v3325 = vsub.s32 1, %v3324
    %v3326 = vrot.slane %v3192, %v3325
    %v3333 = vlaneseq
    %v3334 = vshrl.u32 %v3333, 7
    %v3335 = vsub.s32 0, %v3334
    %v3336 = vrot.slane %v3219, %v3335
    %v3337 = vlaneseq
    %v3338 = vshrl.u32 %v3337, 7
    %v3339 = vsub.s32 1, %v3338
    %v3340 = vrot.slane %v3219, %v3339
    %v3341 = vlaneseq
    %v3342 = vshrl.u32 %v3341, 7
    %v3343 = vsub.s32 0, %v3342
    %v3344 = vrot.slane %v3220, %v3343
    %v3345 = vlaneseq
    %v3346 = vshrl.u32 %v3345, 7
    %v3347 = vsub.s32 1, %v3346
    %v3348 = vrot.slane %v3220, %v3347
    %vm3353 = vcmask 1040384
    %v3354 = vsel %vm3353, %v3226, %v3248
    %v3355 = vsel %vm3353, %v3230, %v3252
    %v3356 = vsel %vm3353, %v3234, %v3256
    %v3357 = vsel %vm3353, %v3238, %v3260
    %vm3358 = vcmask 1041408
    %v3359 = vsel %vm3358, %v3354, %v3270
    %v3360 = vsel %vm3358, %v3355, %v3274
    %v3361 = vsel %vm3358, %v3356, %v3278
    %v3362 = vsel %vm3358, %v3357, %v3282
    %vm3363 = vcmask 1042432
    %v3364 = vsel %vm3363, %v3359, %v3292
    %v3365 = vsel %vm3363, %v3360, %v3296
    %v3366 = vsel %vm3363, %v3361, %v3300
    %v3367 = vsel %vm3363, %v3362, %v3304
    %vm3368 = vcmask 1043456
    %v3369 = vsel %vm3368, %v3364, %v3314
    %v3370 = vsel %vm3368, %v3365, %v3318
    %v3371 = vsel %vm3368, %v3366, %v3322
    %v3372 = vsel %vm3368, %v3367, %v3326
    %vm3373 = vcmask 1044480
    %v3374 = vsel %vm3373, %v3369, %v3336
    %v3375 = vsel %vm3373, %v3370, %v3340
    %v3376 = vsel %vm3373, %v3371, %v3344
    %v3377 = vsel %vm3373, %v3372, %v3348
    %3378 = vrot.lane.b32.xlu0 %v3374, 120
    %v3379 = vpop.permute.xlu0 %3378
    %3380 = vrot.lane.b32.xlu0 %v3376, 120
    %v3381 = vpop.permute.xlu0 %3380
    %3382 = vrot.lane.b32.xlu0 %v3375, 120
    %v3383 = vpop.permute.xlu0 %3382
    %3384 = vrot.lane.b32.xlu0 %v3377, 120
    %v3385 = vpop.permute.xlu0 %3384
    %v3386 = vsel %vm210, %v3379, %v3383
    %v3387 = vsel %vm210, %v3381, %v3385
    %v3388 = vsel %vm210, %v3383, %v3379
    %v3389 = vsel %vm210, %v3385, %v3381
    %v3390 = vmax.f32 %v3374, %v3386
    %v3391 = vmax.f32 %v3375, %v3388
    %v3392 = vmax.f32 %v3376, %v3387
    %v3393 = vmax.f32 %v3377, %v3389
    %3394 = vrot.lane.b32.xlu0 %v3374, 112
    %v3395 = vpop.permute.xlu0 %3394
    %3396 = vrot.lane.b32.xlu0 %v3376, 112
    %v3397 = vpop.permute.xlu0 %3396
    %3398 = vrot.lane.b32.xlu0 %v3375, 112
    %v3399 = vpop.permute.xlu0 %3398
    %3400 = vrot.lane.b32.xlu0 %v3377, 112
    %v3401 = vpop.permute.xlu0 %3400
    %v3402 = vsel %vm304, %v3395, %v3399
    %v3403 = vsel %vm304, %v3397, %v3401
    %v3404 = vsel %vm304, %v3399, %v3395
    %v3405 = vsel %vm304, %v3401, %v3397
    %v3406 = vmax.f32 %v3390, %v3402
    %v3407 = vmax.f32 %v3391, %v3404
    %v3408 = vmax.f32 %v3392, %v3403
    %v3409 = vmax.f32 %v3393, %v3405
    %3410 = vrot.lane.b32.xlu0 %v3374, 104
    %v3411 = vpop.permute.xlu0 %3410
    %3412 = vrot.lane.b32.xlu0 %v3376, 104
    %v3413 = vpop.permute.xlu0 %3412
    %3414 = vrot.lane.b32.xlu0 %v3375, 104
    %v3415 = vpop.permute.xlu0 %3414
    %3416 = vrot.lane.b32.xlu0 %v3377, 104
    %v3417 = vpop.permute.xlu0 %3416
    %vm3418 = vcmp.lt.s32.totalorder %v209, 104
    %v3419 = vsel %vm3418, %v3411, %v3415
    %v3420 = vsel %vm3418, %v3413, %v3417
    %v3421 = vsel %vm3418, %v3415, %v3411
    %v3422 = vsel %vm3418, %v3417, %v3413
    %v3423 = vmax.f32 %v3406, %v3419
    %v3424 = vmax.f32 %v3407, %v3421
    %v3425 = vmax.f32 %v3408, %v3420
    %v3426 = vmax.f32 %v3409, %v3422
    %3427 = vrot.lane.b32.xlu0 %v3374, 96
    %v3428 = vpop.permute.xlu0 %3427
    %3429 = vrot.lane.b32.xlu0 %v3376, 96
    %v3430 = vpop.permute.xlu0 %3429
    %3431 = vrot.lane.b32.xlu0 %v3375, 96
    %v3432 = vpop.permute.xlu0 %3431
    %3433 = vrot.lane.b32.xlu0 %v3377, 96
    %v3434 = vpop.permute.xlu0 %3433
    %vm3435 = vcmp.lt.s32.totalorder %v209, 96
    %v3436 = vsel %vm3435, %v3428, %v3432
    %v3437 = vsel %vm3435, %v3430, %v3434
    %v3438 = vsel %vm3435, %v3432, %v3428
    %v3439 = vsel %vm3435, %v3434, %v3430
    %v3440 = vmax.f32 %v3423, %v3436
    %v3441 = vmax.f32 %v3424, %v3438
    %v3442 = vmax.f32 %v3425, %v3437
    %v3443 = vmax.f32 %v3426, %v3439
    %3446 = vrot.lane.b32.xlu0 %v3440, 96
    %v3447 = vpop.permute.xlu0 %3446
    %3448 = vrot.lane.b32.xlu0 %v3442, 96
    %v3449 = vpop.permute.xlu0 %3448
    %3452 = vrot.lane.b32.xlu0 %v3440, 64
    %v3453 = vpop.permute.xlu0 %3452
    %3454 = vrot.lane.b32.xlu0 %v3442, 64
    %v3455 = vpop.permute.xlu0 %3454
    %3458 = vrot.lane.b32.xlu0 %v3440, 32
    %v3459 = vpop.permute.xlu0 %3458
    %3460 = vrot.lane.b32.xlu0 %v3442, 32
    %v3461 = vpop.permute.xlu0 %3460
    %3466 = vrot.lane.b32.xlu0 %v3441, 96
    %v3467 = vpop.permute.xlu0 %3466
    %3468 = vrot.lane.b32.xlu0 %v3443, 96
    %v3469 = vpop.permute.xlu0 %3468
    %vm3472 = vcmask 64512
    %v3473 = vsel %vm3472, %v3440, %v3447
    %v3474 = vsel %vm3472, %v3442, %v3449
    %vm3475 = vcmask 130048
    %v3476 = vsel %vm3475, %v3473, %v3453
    %v3477 = vsel %vm3475, %v3474, %v3455
    %vm3478 = vcmask 195584
    %v3479 = vsel %vm3478, %v3476, %v3459
    %v3480 = vsel %vm3478, %v3477, %v3461
    %vm3481 = vcmask 261120
    %v3482 = vsel %vm3481, %v3479, %v3441
    %v3483 = vsel %vm3481, %v3480, %v3443
    %vm3484 = vcmask 326656
    %v3485 = vsel %vm3484, %v3482, %v3467
    %v3486 = vsel %vm3484, %v3483, %v3469
    %vm3487 = vcmask 392192
    %v3488 = vsel %vm3487, %v3485, 0.0
    %v3489 = vsel %vm3487, %v3486, 0.0
    %v3492 = vrot.slane %v3489, 7
    %vm3493 = vcmask 1041409
    %v3494 = vsel %vm3493, %v3492, %v3488
    %v3496 = vrot.slane %v3488, 1
    %v3497 = vsel %vm3493, %v3489, %v3496
    %3498 = vrot.lane.b32.xlu0 %v3497, 64
    %v3499 = vpop.permute.xlu0 %3498
    %v3501 = vrot.slane %v3488, 2
    %v3502 = vrot.slane %v3489, 1
    %v3503 = vsel %vm3493, %v3502, %v3501
    %v3505 = vrot.slane %v3488, 3
    %v3506 = vrot.slane %v3489, 2
    %v3507 = vsel %vm3493, %v3506, %v3505
    %3508 = vrot.lane.b32.xlu0 %v3507, 64
    %v3509 = vpop.permute.xlu0 %3508
    %v3511 = vrot.slane %v3488, 4
    %v3512 = vrot.slane %v3489, 3
    %v3513 = vsel %vm3493, %v3512, %v3511
    %v3515 = vrot.slane %v3488, 5
    %v3516 = vrot.slane %v3489, 4
    %v3517 = vsel %vm3493, %v3516, %v3515
    %3518 = vrot.lane.b32.xlu0 %v3517, 64
    %v3519 = vpop.permute.xlu0 %3518
    %vm3521 = vcmask 523264
    %v3522 = vsel %vm3521, %v3494, %v3499
    %v3523 = vsel %vm3521, %v3503, %v3509
    %v3524 = vsel %vm3521, %v3513, %v3519
    %v3525 = vsel %vm3358, %v3522, 0.0
    %v3526 = vsel %vm3358, %v3523, 0.0
    %v3527 = vsel %vm3358, %v3524, 0.0
    %v3528 = vld [vmem:[#allocation9] sm:$0xff]
    %v3529 = vld [vmem:[#allocation9 + $0x8] sm:$0xff]
    %v3530 = vld [vmem:[#allocation9 + $0x10] sm:$0xff]
    %v3531 = vld [vmem:[#allocation9 + $0x18] sm:$0xff]
    %v3532 = vld [vmem:[#allocation9 + $0x20] sm:$0xff]
    %v3533 = vld [vmem:[#allocation9 + $0x28] sm:$0xff]
    %v3534 = vld [vmem:[#allocation9 + $0x30] sm:$0xff]
    %v3535 = vld [vmem:[#allocation9 + $0x38] sm:$0xff]
    %v3536 = vld [vmem:[#allocation9 + $0x40] sm:$0xff]
    %v3537 = vld [vmem:[#allocation9 + $0x48] sm:$0xff]
    %v3538 = vld [vmem:[#allocation9 + $0x50] sm:$0xff]
    %v3539 = vld [vmem:[#allocation9 + $0x58] sm:$0xff]
    %v3540 = vld [vmem:[#allocation9 + $0x60] sm:$0xff]
    %v3541 = vld [vmem:[#allocation9 + $0x68] sm:$0xff]
    %v3542 = vld [vmem:[#allocation9 + $0x70] sm:$0xff]
    %v3543 = vld [vmem:[#allocation9 + $0x78] sm:$0xff]
    %v3544 = vld [vmem:[#allocation9 + $0x80] sm:$0xff]
    %v3545 = vld [vmem:[#allocation9 + $0x88] sm:$0xff]
    %v3546 = vld [vmem:[#allocation9 + $0x90] sm:$0xff]
    %v3547 = vld [vmem:[#allocation9 + $0x98] sm:$0xff]
    %v3548 = vld [vmem:[#allocation9 + $0xa0] sm:$0xff]
    %v3549 = vld [vmem:[#allocation9 + $0xa8] sm:$0xff]
    %v3550 = vld [vmem:[#allocation9 + $0xb0] sm:$0xff]
    %v3551 = vld [vmem:[#allocation9 + $0xb8] sm:$0xff]
    %v3552 = vld [vmem:[#allocation9 + $0xc0] sm:$0xff]
    %v3553 = vld [vmem:[#allocation9 + $0xc8] sm:$0xff]
    %v3554 = vld [vmem:[#allocation9 + $0xd0] sm:$0xff]
    %v3555 = vld [vmem:[#allocation9 + $0xd8] sm:$0xff]
    %v3556 = vld [vmem:[#allocation9 + $0xe0] sm:$0xff]
    %v3557 = vld [vmem:[#allocation9 + $0xe8] sm:$0xff]
    %v3558 = vld [vmem:[#allocation9 + $0xf0] sm:$0xff]
    %v3559 = vld [vmem:[#allocation9 + $0xf8] sm:$0xff]
    %v3560 = vld [vmem:[#allocation9 + $0x100] sm:$0xff]
    %v3561 = vld [vmem:[#allocation9 + $0x108] sm:$0xff]
    %v3562 = vld [vmem:[#allocation9 + $0x110] sm:$0xff]
    %v3563 = vld [vmem:[#allocation9 + $0x118] sm:$0xff]
    %v3564 = vld [vmem:[#allocation9 + $0x120] sm:$0xff]
    %v3565 = vld [vmem:[#allocation9 + $0x128] sm:$0xff]
    %v3566 = vld [vmem:[#allocation9 + $0x130] sm:$0xff]
    %v3567 = vld [vmem:[#allocation9 + $0x138] sm:$0xff]
    %v3568 = vld [vmem:[#allocation9 + $0x140] sm:$0xff]
    %v3569 = vld [vmem:[#allocation9 + $0x148] sm:$0xff]
    %v3570 = vld [vmem:[#allocation9 + $0x150] sm:$0xff]
    %v3571 = vld [vmem:[#allocation9 + $0x158] sm:$0xff]
    %v3572 = vld [vmem:[#allocation9 + $0x160] sm:$0xff]
    %v3573 = vld [vmem:[#allocation9 + $0x168] sm:$0xff]
    %v3574 = vld [vmem:[#allocation9 + $0x170] sm:$0xff]
    %v3575 = vld [vmem:[#allocation9 + $0x178] sm:$0xff]
    %v3576 = vld [vmem:[#allocation9 + $0x180] sm:$0xff]
    %v3577 = vld [vmem:[#allocation9 + $0x188] sm:$0xff]
    %v3578 = vld [vmem:[#allocation9 + $0x190] sm:$0xff]
    %v3579 = vld [vmem:[#allocation9 + $0x198] sm:$0xff]
    %v3580 = vld [vmem:[#allocation9 + $0x1a0] sm:$0xff]
    %v3581 = vld [vmem:[#allocation9 + $0x1a8] sm:$0xff]
    %v3582 = vld [vmem:[#allocation9 + $0x1b0] sm:$0xff]
    %v3583 = vld [vmem:[#allocation9 + $0x1b8] sm:$0xff]
    %v3584 = vld [vmem:[#allocation9 + $0x1c0] sm:$0xff]
    %v3585 = vld [vmem:[#allocation9 + $0x1c8] sm:$0xff]
    %v3586 = vld [vmem:[#allocation9 + $0x1d0] sm:$0xff]
    %v3587 = vld [vmem:[#allocation9 + $0x1d8] sm:$0xff]
    %v3588 = vld [vmem:[#allocation9 + $0x1e0] sm:$0xff]
    %v3589 = vld [vmem:[#allocation9 + $0x1e8] sm:$0xff]
    %v3590 = vld [vmem:[#allocation9 + $0x1f0] sm:$0xff]
    %v3591 = vld [vmem:[#allocation9 + $0x1f8] sm:$0xff]
    %v3592 = vld [vmem:[#allocation9 + $0x200] sm:$0xff]
    %v3593 = vld [vmem:[#allocation9 + $0x208] sm:$0xff]
    %v3594 = vld [vmem:[#allocation9 + $0x210] sm:$0xff]
    %v3595 = vld [vmem:[#allocation9 + $0x218] sm:$0xff]
    %v3596 = vld [vmem:[#allocation9 + $0x220] sm:$0xff]
    %v3597 = vld [vmem:[#allocation9 + $0x228] sm:$0xff]
    %v3598 = vld [vmem:[#allocation9 + $0x230] sm:$0xff]
    %v3599 = vld [vmem:[#allocation9 + $0x238] sm:$0xff]
    %v3600 = vld [vmem:[#allocation9 + $0x240] sm:$0xff]
    %v3601 = vld [vmem:[#allocation9 + $0x248] sm:$0xff]
    %v3602 = vld [vmem:[#allocation9 + $0x250] sm:$0xff]
    %v3603 = vld [vmem:[#allocation9 + $0x258] sm:$0xff]
    %v3604 = vld [vmem:[#allocation9 + $0x260] sm:$0xff]
    %v3605 = vld [vmem:[#allocation9 + $0x268] sm:$0xff]
    %v3606 = vld [vmem:[#allocation9 + $0x270] sm:$0xff]
    %v3607 = vld [vmem:[#allocation9 + $0x278] sm:$0xff]
    %v3608 = vld [vmem:[#allocation9 + $0x280] sm:$0xff]
    %v3609 = vld [vmem:[#allocation9 + $0x288] sm:$0xff]
    %v3610 = vld [vmem:[#allocation9 + $0x290] sm:$0xff]
    %v3611 = vld [vmem:[#allocation9 + $0x298] sm:$0xff]
    %v3612 = vld [vmem:[#allocation9 + $0x2a0] sm:$0xff]
    %v3613 = vld [vmem:[#allocation9 + $0x2a8] sm:$0xff]
    %v3614 = vld [vmem:[#allocation9 + $0x2b0] sm:$0xff]
    %v3615 = vld [vmem:[#allocation9 + $0x2b8] sm:$0xff]
    %v3616 = vld [vmem:[#allocation9 + $0x2c0] sm:$0xff]
    %v3617 = vld [vmem:[#allocation9 + $0x2c8] sm:$0xff]
    %v3618 = vld [vmem:[#allocation9 + $0x2d0] sm:$0xff]
    %v3619 = vld [vmem:[#allocation9 + $0x2d8] sm:$0xff]
    %v3620 = vld [vmem:[#allocation9 + $0x2e0] sm:$0xff]
    %v3621 = vld [vmem:[#allocation9 + $0x2e8] sm:$0xff]
    %v3622 = vld [vmem:[#allocation9 + $0x2f0] sm:$0xff]
    %v3623 = vld [vmem:[#allocation9 + $0x2f8] sm:$0xff]
    %v3624 = vld [vmem:[#allocation9 + $0x300] sm:$0xff]
    %v3625 = vld [vmem:[#allocation9 + $0x308] sm:$0xff]
    %v3626 = vld [vmem:[#allocation9 + $0x310] sm:$0xff]
    %v3627 = vld [vmem:[#allocation9 + $0x318] sm:$0xff]
    %v3628 = vld [vmem:[#allocation9 + $0x320] sm:$0xff]
    %v3629 = vld [vmem:[#allocation9 + $0x328] sm:$0xff]
    %v3630 = vld [vmem:[#allocation9 + $0x330] sm:$0xff]
    %v3631 = vld [vmem:[#allocation9 + $0x338] sm:$0xff]
    %v3632 = vld [vmem:[#allocation9 + $0x340] sm:$0xff]
    %v3633 = vld [vmem:[#allocation9 + $0x348] sm:$0xff]
    %v3634 = vld [vmem:[#allocation9 + $0x350] sm:$0xff]
    %v3635 = vld [vmem:[#allocation9 + $0x358] sm:$0xff]
    %v3636 = vld [vmem:[#allocation9 + $0x360] sm:$0xff]
    %v3637 = vld [vmem:[#allocation9 + $0x368] sm:$0xff]
    %v3638 = vld [vmem:[#allocation9 + $0x370] sm:$0xff]
    %v3639 = vld [vmem:[#allocation9 + $0x378] sm:$0xff]
    %v3640 = vld [vmem:[#allocation9 + $0x380] sm:$0xff]
    %v3641 = vld [vmem:[#allocation9 + $0x388] sm:$0xff]
    %v3642 = vld [vmem:[#allocation9 + $0x390] sm:$0xff]
    %v3643 = vld [vmem:[#allocation9 + $0x398] sm:$0xff]
    %v3644 = vld [vmem:[#allocation9 + $0x3a0] sm:$0xff]
    %v3645 = vld [vmem:[#allocation9 + $0x3a8] sm:$0xff]
    %v3646 = vld [vmem:[#allocation9 + $0x3b0] sm:$0xff]
    %v3647 = vld [vmem:[#allocation9 + $0x3b8] sm:$0xff]
    %v3648 = vld [vmem:[#allocation9 + $0x3c0] sm:$0xff]
    %v3649 = vld [vmem:[#allocation9 + $0x3c8] sm:$0xff]
    %v3650 = vld [vmem:[#allocation9 + $0x3d0] sm:$0xff]
    %v3651 = vld [vmem:[#allocation9 + $0x3d8] sm:$0xff]
    %v3652 = vld [vmem:[#allocation9 + $0x3e0] sm:$0xff]
    %v3653 = vld [vmem:[#allocation9 + $0x3e8] sm:$0xff]
    %v3654 = vld [vmem:[#allocation9 + $0x3f0] sm:$0xff]
    %v3655 = vld [vmem:[#allocation9 + $0x3f8] sm:$0xff]
    %v3656 = vld [vmem:[#allocation9 + $0x400] sm:$0xff]
    %v3657 = vld [vmem:[#allocation9 + $0x408] sm:$0xff]
    %v3658 = vld [vmem:[#allocation9 + $0x410] sm:$0xff]
    %v3659 = vld [vmem:[#allocation9 + $0x418] sm:$0xff]
    %v3660 = vld [vmem:[#allocation9 + $0x420] sm:$0xff]
    %v3661 = vld [vmem:[#allocation9 + $0x428] sm:$0xff]
    %v3662 = vld [vmem:[#allocation9 + $0x430] sm:$0xff]
    %v3663 = vld [vmem:[#allocation9 + $0x438] sm:$0xff]
    %v3664 = vld [vmem:[#allocation9 + $0x440] sm:$0xff]
    %v3665 = vld [vmem:[#allocation9 + $0x448] sm:$0xff]
    %v3666 = vld [vmem:[#allocation9 + $0x450] sm:$0xff]
    %v3667 = vld [vmem:[#allocation9 + $0x458] sm:$0xff]
    %v3668 = vld [vmem:[#allocation9 + $0x460] sm:$0xff]
    %v3669 = vld [vmem:[#allocation9 + $0x468] sm:$0xff]
    %v3670 = vld [vmem:[#allocation9 + $0x470] sm:$0xff]
    %v3671 = vld [vmem:[#allocation9 + $0x478] sm:$0xff]
    %v3672 = vld [vmem:[#allocation9 + $0x480] sm:$0xff]
    %v3673 = vld [vmem:[#allocation9 + $0x488] sm:$0xff]
    %v3674 = vld [vmem:[#allocation9 + $0x490] sm:$0xff]
    %v3675 = vld [vmem:[#allocation9 + $0x498] sm:$0xff]
    %v3676 = vld [vmem:[#allocation9 + $0x4a0] sm:$0xff]
    %v3677 = vld [vmem:[#allocation9 + $0x4a8] sm:$0xff]
    %v3678 = vld [vmem:[#allocation9 + $0x4b0] sm:$0xff]
    %v3679 = vld [vmem:[#allocation9 + $0x4b8] sm:$0xff]
    %v3680 = vld [vmem:[#allocation9 + $0x4c0] sm:$0xff]
    %v3681 = vld [vmem:[#allocation9 + $0x4c8] sm:$0xff]
    %v3682 = vld [vmem:[#allocation9 + $0x4d0] sm:$0xff]
    %v3683 = vld [vmem:[#allocation9 + $0x4d8] sm:$0xff]
    %v3684 = vld [vmem:[#allocation9 + $0x4e0] sm:$0xff]
    %v3685 = vld [vmem:[#allocation9 + $0x4e8] sm:$0xff]
    %v3686 = vld [vmem:[#allocation9 + $0x4f0] sm:$0xff]
    %v3687 = vld [vmem:[#allocation9 + $0x4f8] sm:$0xff]
    %v3688 = vld [vmem:[#allocation9 + $0x500] sm:$0xff]
    %v3689 = vld [vmem:[#allocation9 + $0x508] sm:$0xff]
    %v3690 = vld [vmem:[#allocation9 + $0x510] sm:$0xff]
    %v3691 = vld [vmem:[#allocation9 + $0x518] sm:$0xff]
    %v3692 = vld [vmem:[#allocation9 + $0x520] sm:$0xff]
    %v3693 = vld [vmem:[#allocation9 + $0x528] sm:$0xff]
    %v3694 = vld [vmem:[#allocation9 + $0x530] sm:$0xff]
    %v3695 = vld [vmem:[#allocation9 + $0x538] sm:$0xff]
    %v3696 = vld [vmem:[#allocation9 + $0x540] sm:$0xff]
    %v3697 = vld [vmem:[#allocation9 + $0x548] sm:$0xff]
    %v3698 = vld [vmem:[#allocation9 + $0x550] sm:$0xff]
    %v3699 = vld [vmem:[#allocation9 + $0x558] sm:$0xff]
    %v3700 = vld [vmem:[#allocation9 + $0x560] sm:$0xff]
    %v3701 = vld [vmem:[#allocation9 + $0x568] sm:$0xff]
    %v3702 = vld [vmem:[#allocation9 + $0x570] sm:$0xff]
    %v3703 = vld [vmem:[#allocation9 + $0x578] sm:$0xff]
    %v3704 = vld [vmem:[#allocation9 + $0x580] sm:$0xff]
    %v3705 = vld [vmem:[#allocation9 + $0x588] sm:$0xff]
    %v3706 = vld [vmem:[#allocation9 + $0x590] sm:$0xff]
    %v3707 = vld [vmem:[#allocation9 + $0x598] sm:$0xff]
    %v3708 = vld [vmem:[#allocation9 + $0x5a0] sm:$0xff]
    %v3709 = vld [vmem:[#allocation9 + $0x5a8] sm:$0xff]
    %v3710 = vld [vmem:[#allocation9 + $0x5b0] sm:$0xff]
    %v3711 = vld [vmem:[#allocation9 + $0x5b8] sm:$0xff]
    %v3712 = vld [vmem:[#allocation9 + $0x5c0] sm:$0xff]
    %v3713 = vld [vmem:[#allocation9 + $0x5c8] sm:$0xff]
    %v3714 = vld [vmem:[#allocation9 + $0x5d0] sm:$0xff]
    %v3715 = vld [vmem:[#allocation9 + $0x5d8] sm:$0xff]
    %v3716 = vld [vmem:[#allocation9 + $0x5e0] sm:$0xff]
    %v3717 = vld [vmem:[#allocation9 + $0x5e8] sm:$0xff]
    %v3718 = vld [vmem:[#allocation9 + $0x5f0] sm:$0xff]
    %v3719 = vld [vmem:[#allocation9 + $0x5f8] sm:$0xff]
    %v3720 = vld [vmem:[#allocation9 + $0x600] sm:$0xff]
    %v3721 = vld [vmem:[#allocation9 + $0x608] sm:$0xff]
    %v3722 = vld [vmem:[#allocation9 + $0x610] sm:$0xff]
    %v3723 = vld [vmem:[#allocation9 + $0x618] sm:$0xff]
    %v3724 = vld [vmem:[#allocation9 + $0x620] sm:$0xff]
    %v3725 = vld [vmem:[#allocation9 + $0x628] sm:$0xff]
    %v3726 = vld [vmem:[#allocation9 + $0x630] sm:$0xff]
    %v3727 = vld [vmem:[#allocation9 + $0x638] sm:$0xff]
    %v3728 = vld [vmem:[#allocation9 + $0x640] sm:$0xff]
    %v3729 = vld [vmem:[#allocation9 + $0x648] sm:$0xff]
    %v3730 = vld [vmem:[#allocation9 + $0x650] sm:$0xff]
    %v3731 = vld [vmem:[#allocation9 + $0x658] sm:$0xff]
    %v3732 = vld [vmem:[#allocation9 + $0x660] sm:$0xff]
    %v3733 = vld [vmem:[#allocation9 + $0x668] sm:$0xff]
    %v3734 = vld [vmem:[#allocation9 + $0x670] sm:$0xff]
    %v3735 = vld [vmem:[#allocation9 + $0x678] sm:$0xff]
    %v3736 = vld [vmem:[#allocation9 + $0x680] sm:$0xff]
    %v3737 = vld [vmem:[#allocation9 + $0x688] sm:$0xff]
    %v3738 = vld [vmem:[#allocation9 + $0x690] sm:$0xff]
    %v3739 = vld [vmem:[#allocation9 + $0x698] sm:$0xff]
    %v3740 = vld [vmem:[#allocation9 + $0x6a0] sm:$0xff]
    %v3741 = vld [vmem:[#allocation9 + $0x6a8] sm:$0xff]
    %v3742 = vld [vmem:[#allocation9 + $0x6b0] sm:$0xff]
    %v3743 = vld [vmem:[#allocation9 + $0x6b8] sm:$0xff]
    %v3744 = vld [vmem:[#allocation9 + $0x6c0] sm:$0xff]
    %v3745 = vld [vmem:[#allocation9 + $0x6c8] sm:$0xff]
    %v3746 = vld [vmem:[#allocation9 + $0x6d0] sm:$0xff]
    %v3747 = vld [vmem:[#allocation9 + $0x6d8] sm:$0xff]
    %v3748 = vld [vmem:[#allocation9 + $0x6e0] sm:$0xff]
    %v3749 = vld [vmem:[#allocation9 + $0x6e8] sm:$0xff]
    %v3750 = vld [vmem:[#allocation9 + $0x6f0] sm:$0xff]
    %v3751 = vld [vmem:[#allocation9 + $0x6f8] sm:$0xff]
    %v3752 = vld [vmem:[#allocation9 + $0x700] sm:$0xff]
    %v3753 = vld [vmem:[#allocation9 + $0x708] sm:$0xff]
    %v3754 = vld [vmem:[#allocation9 + $0x710] sm:$0xff]
    %v3755 = vld [vmem:[#allocation9 + $0x718] sm:$0xff]
    %v3756 = vld [vmem:[#allocation9 + $0x720] sm:$0xff]
    %v3757 = vld [vmem:[#allocation9 + $0x728] sm:$0xff]
    %v3758 = vld [vmem:[#allocation9 + $0x730] sm:$0xff]
    %v3759 = vld [vmem:[#allocation9 + $0x738] sm:$0xff]
    %v3760 = vld [vmem:[#allocation9 + $0x740] sm:$0xff]
    %v3761 = vld [vmem:[#allocation9 + $0x748] sm:$0xff]
    %v3762 = vld [vmem:[#allocation9 + $0x750] sm:$0xff]
    %v3763 = vld [vmem:[#allocation9 + $0x758] sm:$0xff]
    %v3764 = vld [vmem:[#allocation9 + $0x760] sm:$0xff]
    %v3765 = vld [vmem:[#allocation9 + $0x768] sm:$0xff]
    %v3766 = vld [vmem:[#allocation9 + $0x770] sm:$0xff]
    %v3767 = vld [vmem:[#allocation9 + $0x778] sm:$0xff]
    %v3768 = vld [vmem:[#allocation9 + $0x780] sm:$0xff]
    %v3769 = vld [vmem:[#allocation9 + $0x788] sm:$0xff]
    %v3770 = vld [vmem:[#allocation9 + $0x790] sm:$0xff]
    %v3771 = vld [vmem:[#allocation9 + $0x798] sm:$0xff]
    %v3772 = vld [vmem:[#allocation9 + $0x7a0] sm:$0xff]
    %v3773 = vld [vmem:[#allocation9 + $0x7a8] sm:$0xff]
    %v3774 = vld [vmem:[#allocation9 + $0x7b0] sm:$0xff]
    %v3775 = vld [vmem:[#allocation9 + $0x7b8] sm:$0xff]
    %v3776 = vld [vmem:[#allocation9 + $0x7c0] sm:$0xff]
    %v3777 = vld [vmem:[#allocation9 + $0x7c8] sm:$0xff]
    %v3778 = vld [vmem:[#allocation9 + $0x7d0] sm:$0xff]
    %v3779 = vld [vmem:[#allocation9 + $0x7d8] sm:$0xff]
    %v3780 = vld [vmem:[#allocation9 + $0x7e0] sm:$0xff]
    %v3781 = vld [vmem:[#allocation9 + $0x7e8] sm:$0xff]
    %v3782 = vld [vmem:[#allocation9 + $0x7f0] sm:$0xff]
    %v3783 = vld [vmem:[#allocation9 + $0x7f8] sm:$0xff]
    %v3784 = vld [vmem:[#allocation9 + $0x800] sm:$0xff]
    %v3785 = vld [vmem:[#allocation9 + $0x808] sm:$0xff]
    %v3786 = vld [vmem:[#allocation9 + $0x810] sm:$0xff]
    %v3787 = vld [vmem:[#allocation9 + $0x818] sm:$0xff]
    %v3788 = vld [vmem:[#allocation9 + $0x820] sm:$0xff]
    %v3789 = vld [vmem:[#allocation9 + $0x828] sm:$0xff]
    %v3790 = vld [vmem:[#allocation9 + $0x830] sm:$0xff]
    %v3791 = vld [vmem:[#allocation9 + $0x838] sm:$0xff]
    %v3792 = vld [vmem:[#allocation9 + $0x840] sm:$0xff]
    %v3793 = vld [vmem:[#allocation9 + $0x848] sm:$0xff]
    %v3794 = vld [vmem:[#allocation9 + $0x850] sm:$0xff]
    %v3795 = vld [vmem:[#allocation9 + $0x858] sm:$0xff]
    %v3796 = vld [vmem:[#allocation9 + $0x860] sm:$0xff]
    %v3797 = vld [vmem:[#allocation9 + $0x868] sm:$0xff]
    %v3798 = vld [vmem:[#allocation9 + $0x870] sm:$0xff]
    %v3799 = vld [vmem:[#allocation9 + $0x878] sm:$0xff]
    %v3800 = vld [vmem:[#allocation9 + $0x880] sm:$0xff]
    %v3801 = vld [vmem:[#allocation9 + $0x888] sm:$0xff]
    %v3802 = vld [vmem:[#allocation9 + $0x890] sm:$0xff]
    %v3803 = vld [vmem:[#allocation9 + $0x898] sm:$0xff]
    %v3804 = vld [vmem:[#allocation9 + $0x8a0] sm:$0xff]
    %v3805 = vld [vmem:[#allocation9 + $0x8a8] sm:$0xff]
    %v3806 = vld [vmem:[#allocation9 + $0x8b0] sm:$0xff]
    %v3807 = vld [vmem:[#allocation9 + $0x8b8] sm:$0xff]
    %v3808 = vld [vmem:[#allocation9 + $0x8c0] sm:$0xff]
    %v3809 = vld [vmem:[#allocation9 + $0x8c8] sm:$0xff]
    %v3810 = vld [vmem:[#allocation9 + $0x8d0] sm:$0xff]
    %v3811 = vld [vmem:[#allocation9 + $0x8d8] sm:$0xff]
    %v3812 = vld [vmem:[#allocation9 + $0x8e0] sm:$0xff]
    %v3813 = vld [vmem:[#allocation9 + $0x8e8] sm:$0xff]
    %v3814 = vld [vmem:[#allocation9 + $0x8f0] sm:$0xff]
    %v3815 = vld [vmem:[#allocation9 + $0x8f8] sm:$0xff]
    %v3816 = vld [vmem:[#allocation9 + $0x900] sm:$0xff]
    %v3817 = vld [vmem:[#allocation9 + $0x908] sm:$0xff]
    %v3818 = vld [vmem:[#allocation9 + $0x910] sm:$0xff]
    %v3819 = vld [vmem:[#allocation9 + $0x918] sm:$0xff]
    %v3820 = vld [vmem:[#allocation9 + $0x920] sm:$0xff]
    %v3821 = vld [vmem:[#allocation9 + $0x928] sm:$0xff]
    %v3822 = vld [vmem:[#allocation9 + $0x930] sm:$0xff]
    %v3823 = vld [vmem:[#allocation9 + $0x938] sm:$0xff]
    %v3824 = vld [vmem:[#allocation9 + $0x940] sm:$0xff]
    %v3825 = vld [vmem:[#allocation9 + $0x948] sm:$0xff]
    %v3826 = vld [vmem:[#allocation9 + $0x950] sm:$0xff]
    %v3827 = vld [vmem:[#allocation9 + $0x958] sm:$0xff]
    %v3828 = vld [vmem:[#allocation9 + $0x960] sm:$0xff]
    %v3829 = vld [vmem:[#allocation9 + $0x968] sm:$0xff]
    %v3830 = vld [vmem:[#allocation9 + $0x970] sm:$0xff]
    %v3831 = vld [vmem:[#allocation9 + $0x978] sm:$0xff]
    %v3832 = vld [vmem:[#allocation9 + $0x980] sm:$0xff]
    %v3833 = vld [vmem:[#allocation9 + $0x988] sm:$0xff]
    %v3834 = vld [vmem:[#allocation9 + $0x990] sm:$0xff]
    %v3835 = vld [vmem:[#allocation9 + $0x998] sm:$0xff]
    %v3836 = vld [vmem:[#allocation9 + $0x9a0] sm:$0xff]
    %v3837 = vld [vmem:[#allocation9 + $0x9a8] sm:$0xff]
    %v3838 = vld [vmem:[#allocation9 + $0x9b0] sm:$0xff]
    %v3839 = vld [vmem:[#allocation9 + $0x9b8] sm:$0xff]
    %v3840 = vld [vmem:[#allocation9 + $0x9c0] sm:$0xff]
    %v3841 = vld [vmem:[#allocation9 + $0x9c8] sm:$0xff]
    %v3842 = vld [vmem:[#allocation9 + $0x9d0] sm:$0xff]
    %v3843 = vld [vmem:[#allocation9 + $0x9d8] sm:$0xff]
    %v3844 = vld [vmem:[#allocation9 + $0x9e0] sm:$0xff]
    %v3845 = vld [vmem:[#allocation9 + $0x9e8] sm:$0xff]
    %v3846 = vld [vmem:[#allocation9 + $0x9f0] sm:$0xff]
    %v3847 = vld [vmem:[#allocation9 + $0x9f8] sm:$0xff]
    %v3848 = vld [vmem:[#allocation9 + $0xa00] sm:$0xff]
    %v3849 = vld [vmem:[#allocation9 + $0xa08] sm:$0xff]
    %v3850 = vld [vmem:[#allocation9 + $0xa10] sm:$0xff]
    %v3851 = vld [vmem:[#allocation9 + $0xa18] sm:$0xff]
    %v3852 = vld [vmem:[#allocation9 + $0xa20] sm:$0xff]
    %v3853 = vld [vmem:[#allocation9 + $0xa28] sm:$0xff]
    %v3854 = vld [vmem:[#allocation9 + $0xa30] sm:$0xff]
    %v3855 = vld [vmem:[#allocation9 + $0xa38] sm:$0xff]
    %v3856 = vld [vmem:[#allocation9 + $0xa40] sm:$0xff]
    %v3857 = vld [vmem:[#allocation9 + $0xa48] sm:$0xff]
    %v3858 = vld [vmem:[#allocation9 + $0xa50] sm:$0xff]
    %v3859 = vld [vmem:[#allocation9 + $0xa58] sm:$0xff]
    %v3860 = vld [vmem:[#allocation9 + $0xa60] sm:$0xff]
    %v3861 = vld [vmem:[#allocation9 + $0xa68] sm:$0xff]
    %v3862 = vld [vmem:[#allocation9 + $0xa70] sm:$0xff]
    %v3863 = vld [vmem:[#allocation9 + $0xa78] sm:$0xff]
    %v3864 = vld [vmem:[#allocation9 + $0xa80] sm:$0xff]
    %v3865 = vld [vmem:[#allocation9 + $0xa88] sm:$0xff]
    %v3866 = vld [vmem:[#allocation9 + $0xa90] sm:$0xff]
    %v3867 = vld [vmem:[#allocation9 + $0xa98] sm:$0xff]
    %v3868 = vld [vmem:[#allocation9 + $0xaa0] sm:$0xff]
    %v3869 = vld [vmem:[#allocation9 + $0xaa8] sm:$0xff]
    %v3870 = vld [vmem:[#allocation9 + $0xab0] sm:$0xff]
    %v3871 = vld [vmem:[#allocation9 + $0xab8] sm:$0xff]
    %v3872 = vld [vmem:[#allocation9 + $0xac0] sm:$0xff]
    %v3873 = vld [vmem:[#allocation9 + $0xac8] sm:$0xff]
    %v3874 = vld [vmem:[#allocation9 + $0xad0] sm:$0xff]
    %v3875 = vld [vmem:[#allocation9 + $0xad8] sm:$0xff]
    %v3876 = vld [vmem:[#allocation9 + $0xae0] sm:$0xff]
    %v3877 = vld [vmem:[#allocation9 + $0xae8] sm:$0xff]
    %v3878 = vld [vmem:[#allocation9 + $0xaf0] sm:$0xff]
    %v3879 = vld [vmem:[#allocation9 + $0xaf8] sm:$0xff]
    %v3880 = vld [vmem:[#allocation9 + $0xb00] sm:$0xff]
    %v3881 = vld [vmem:[#allocation9 + $0xb08] sm:$0xff]
    %v3882 = vld [vmem:[#allocation9 + $0xb10] sm:$0xff]
    %v3883 = vld [vmem:[#allocation9 + $0xb18] sm:$0xff]
    %v3884 = vld [vmem:[#allocation9 + $0xb20] sm:$0xff]
    %v3885 = vld [vmem:[#allocation9 + $0xb28] sm:$0xff]
    %v3886 = vld [vmem:[#allocation9 + $0xb30] sm:$0xff]
    %v3887 = vld [vmem:[#allocation9 + $0xb38] sm:$0xff]
    %v3888 = vld [vmem:[#allocation9 + $0xb40] sm:$0xff]
    %v3889 = vld [vmem:[#allocation9 + $0xb48] sm:$0xff]
    %v3890 = vld [vmem:[#allocation9 + $0xb50] sm:$0xff]
    %v3891 = vld [vmem:[#allocation9 + $0xb58] sm:$0xff]
    %v3892 = vld [vmem:[#allocation9 + $0xb60] sm:$0xff]
    %v3893 = vld [vmem:[#allocation9 + $0xb68] sm:$0xff]
    %v3894 = vld [vmem:[#allocation9 + $0xb70] sm:$0xff]
    %v3895 = vld [vmem:[#allocation9 + $0xb78] sm:$0xff]
    %v3896 = vld [vmem:[#allocation9 + $0xb80] sm:$0xff]
    %v3897 = vld [vmem:[#allocation9 + $0xb88] sm:$0xff]
    %v3898 = vld [vmem:[#allocation9 + $0xb90] sm:$0xff]
    %v3899 = vld [vmem:[#allocation9 + $0xb98] sm:$0xff]
    %v3900 = vld [vmem:[#allocation9 + $0xba0] sm:$0xff]
    %v3901 = vld [vmem:[#allocation9 + $0xba8] sm:$0xff]
    %v3902 = vld [vmem:[#allocation9 + $0xbb0] sm:$0xff]
    %v3903 = vld [vmem:[#allocation9 + $0xbb8] sm:$0xff]
    %v3904 = vld [vmem:[#allocation9 + $0xbc0] sm:$0xff]
    %v3905 = vld [vmem:[#allocation9 + $0xbc8] sm:$0xff]
    %v3906 = vld [vmem:[#allocation9 + $0xbd0] sm:$0xff]
    %v3907 = vld [vmem:[#allocation9 + $0xbd8] sm:$0xff]
    %v3908 = vld [vmem:[#allocation9 + $0xbe0] sm:$0xff]
    %v3909 = vld [vmem:[#allocation9 + $0xbe8] sm:$0xff]
    %v3910 = vld [vmem:[#allocation9 + $0xbf0] sm:$0xff]
    %v3911 = vld [vmem:[#allocation9 + $0xbf8] sm:$0xff]
    %v3912 = vld [vmem:[#allocation11] sm:$0xff]
    %v3914 = vlaneseq
    %v3915 = vshrl.u32 %v3914, 7
    %v3916 = vsub.s32 0, %v3915
    %v3917 = vrot.slane %v3912, %v3916
    %v3918 = vlaneseq
    %v3919 = vshrl.u32 %v3918, 7
    %v3920 = vsub.s32 1, %v3919
    %v3921 = vrot.slane %v3912, %v3920
    %v3922 = vlaneseq
    %v3923 = vshrl.u32 %v3922, 7
    %v3924 = vsub.s32 2, %v3923
    %v3925 = vrot.slane %v3912, %v3924
    %v3926 = vlaneseq
    %v3927 = vshrl.u32 %v3926, 7
    %v3928 = vsub.s32 3, %v3927
    %v3929 = vrot.slane %v3912, %v3928
    %v3930 = vlaneseq
    %v3931 = vshrl.u32 %v3930, 7
    %v3932 = vsub.s32 4, %v3931
    %v3933 = vrot.slane %v3912, %v3932
    %v3934 = vlaneseq
    %v3935 = vshrl.u32 %v3934, 7
    %v3936 = vsub.s32 5, %v3935
    %v3937 = vrot.slane %v3912, %v3936
    %v3938 = vlaneseq
    %v3939 = vshrl.u32 %v3938, 7
    %v3940 = vsub.s32 6, %v3939
    %v3941 = vrot.slane %v3912, %v3940
    %v3942 = vlaneseq
    %v3943 = vshrl.u32 %v3942, 7
    %v3944 = vsub.s32 7, %v3943
    %v3945 = vrot.slane %v3912, %v3944
    %3954 = vmatprep.subr.mxu0 %v3529
    %3955 = vmatpush1.msra.mxu0 %v3528
    %3956 = vmatprep.subr.mxu0 %v3537
    %3957 = vmatpush1.msra.mxu0 %v3536
    %3958 = vmatprep.subr.mxu0 %v3545
    %3959 = vmatpush1.msra.mxu0 %v3544
    %3960 = vmatprep.subr.mxu0 %v3553
    %3961 = vmatpush1.msra.mxu0 %v3552
    %3962 = vmatprep.subr.mxu0 %v3561
    %3963 = vmatpush1.msra.mxu0 %v3560
    %3964 = vmatprep.subr.mxu0 %v3569
    %3965 = vmatpush1.msra.mxu0 %v3568
    %3966 = vmatprep.subr.mxu0 %v3577
    %3967 = vmatpush1.msra.mxu0 %v3576
    %3968 = vmatprep.subr.mxu0 %v3585
    %3969 = vmatpush1.msra.mxu0 %v3584
    %3970 = vmatprep.subr.mxu0 %v3593
    %3971 = vmatpush1.msra.mxu0 %v3592
    %3972 = vmatprep.subr.mxu0 %v3601
    %3973 = vmatpush1.msra.mxu0 %v3600
    %3974 = vmatprep.subr.mxu0 %v3609
    %3975 = vmatpush1.msra.mxu0 %v3608
    %3976 = vmatprep.subr.mxu0 %v3617
    %3977 = vmatpush1.msra.mxu0 %v3616
    %3978 = vmatprep.subr.mxu0 %v3625
    %3979 = vmatpush1.msra.mxu0 %v3624
    %3980 = vmatprep.subr.mxu0 %v3633
    %3981 = vmatpush1.msra.mxu0 %v3632
    %3982 = vmatprep.subr.mxu0 %v3641
    %3983 = vmatpush1.msra.mxu0 %v3640
    %3984 = vmatprep.subr.mxu0 %v3649
    %3985 = vmatpush1.msra.mxu0 %v3648
    %3986 = vmatprep.subr.mxu0 %v3657
    %3987 = vmatpush1.msra.mxu0 %v3656
    %3988 = vmatprep.subr.mxu0 %v3665
    %3989 = vmatpush1.msra.mxu0 %v3664
    %3990 = vmatprep.subr.mxu0 %v3673
    %3991 = vmatpush1.msra.mxu0 %v3672
    %3992 = vmatprep.subr.mxu0 %v3681
    %3993 = vmatpush1.msra.mxu0 %v3680
    %3994 = vmatprep.subr.mxu0 %v3689
    %3995 = vmatpush1.msra.mxu0 %v3688
    %3996 = vmatprep.subr.mxu0 %v3697
    %3997 = vmatpush1.msra.mxu0 %v3696
    %3998 = vmatprep.subr.mxu0 %v3705
    %3999 = vmatpush1.msra.mxu0 %v3704
    %4000 = vmatprep.subr.mxu0 %v3713
    %4001 = vmatpush1.msra.mxu0 %v3712
    %4002 = vmatprep.subr.mxu0 %v3721
    %4003 = vmatpush1.msra.mxu0 %v3720
    %4004 = vmatprep.subr.mxu0 %v3729
    %4005 = vmatpush1.msra.mxu0 %v3728
    %4006 = vmatprep.subr.mxu0 %v3737
    %4007 = vmatpush1.msra.mxu0 %v3736
    %4008 = vmatprep.subr.mxu0 %v3745
    %4009 = vmatpush1.msra.mxu0 %v3744
    %4010 = vmatprep.subr.mxu0 %v3753
    %4011 = vmatpush1.msra.mxu0 %v3752
    %4012 = vmatprep.subr.mxu0 %v3761
    %4013 = vmatpush1.msra.mxu0 %v3760
    %4014 = vmatprep.subr.mxu0 %v3769
    %4015 = vmatpush1.msra.mxu0 %v3768
    %4016 = vmatprep.subr.mxu0 %v3777
    %4017 = vmatpush1.msra.mxu0 %v3776
    %4018 = vmatprep.mubr.f32.mxu0 %v3526
    %4019 = vmatmul.mubr.f32.gmra.mrb[0].mxu0 %v3525
    %v4020 = vpop.f32.mrb[0].mxu0
    %v4021 = vadd.f32 %v3917, %v4020
    %v4022 = vpop.f32.mrb[0].mxu0
    %v4023 = vadd.f32 %v3921, %v4022
    %4024 = vdwg.mxu0
    %4025 = vmatprep.subr.mxu0 %v3785
    %4026 = vmatpush1.msra.mxu0 %v3784
    %4027 = vmatprep.subr.mxu0 %v3793
    %4028 = vmatpush1.msra.mxu0 %v3792
    %4029 = vmatprep.subr.mxu0 %v3801
    %4030 = vmatpush1.msra.mxu0 %v3800
    %4031 = vmatprep.subr.mxu0 %v3809
    %4032 = vmatpush1.msra.mxu0 %v3808
    %4033 = vmatprep.subr.mxu0 %v3817
    %4034 = vmatpush1.msra.mxu0 %v3816
    %4035 = vmatprep.subr.mxu0 %v3825
    %4036 = vmatpush1.msra.mxu0 %v3824
    %4037 = vmatprep.subr.mxu0 %v3833
    %4038 = vmatpush1.msra.mxu0 %v3832
    %4039 = vmatprep.subr.mxu0 %v3841
    %4040 = vmatpush1.msra.mxu0 %v3840
    %4041 = vmatprep.subr.mxu0 %v3849
    %4042 = vmatpush1.msra.mxu0 %v3848
    %4043 = vmatprep.subr.mxu0 %v3857
    %4044 = vmatpush1.msra.mxu0 %v3856
    %4045 = vmatprep.subr.mxu0 %v3865
    %4046 = vmatpush1.msra.mxu0 %v3864
    %4047 = vmatprep.subr.mxu0 %v3873
    %4048 = vmatpush1.msra.mxu0 %v3872
    %4049 = vmatprep.subr.mxu0 %v3881
    %4050 = vmatpush1.msra.mxu0 %v3880
    %4051 = vmatprep.subr.mxu0 %v3889
    %4052 = vmatpush1.msra.mxu0 %v3888
    %4053 = vmatprep.subr.mxu0 %v3897
    %4054 = vmatpush1.msra.mxu0 %v3896
    %4055 = vmatprep.subr.mxu0 %v3905
    %4056 = vmatpush1.msra.mxu0 %v3904
    %4057 = vmatprep.subr.mxu0 0.0
    %4058 = vmatpush1.msra.mxu0 0.0
    %4059 = vmatprep.subr.mxu0 0.0
    %4060 = vmatpush1.msra.mxu0 0.0
    %4061 = vmatprep.subr.mxu0 0.0
    %4062 = vmatpush1.msra.mxu0 0.0
    %4063 = vmatprep.subr.mxu0 0.0
    %4064 = vmatpush1.msra.mxu0 0.0
    %4065 = vmatprep.subr.mxu0 0.0
    %4066 = vmatpush1.msra.mxu0 0.0
    %4067 = vmatprep.subr.mxu0 0.0
    %4068 = vmatpush1.msra.mxu0 0.0
    %4069 = vmatprep.subr.mxu0 0.0
    %4070 = vmatpush1.msra.mxu0 0.0
    %4071 = vmatprep.subr.mxu0 0.0
    %4072 = vmatpush1.msra.mxu0 0.0
    %4073 = vmatprep.subr.mxu0 0.0
    %4074 = vmatpush1.msra.mxu0 0.0
    %4075 = vmatprep.subr.mxu0 0.0
    %4076 = vmatpush1.msra.mxu0 0.0
    %4077 = vmatprep.subr.mxu0 0.0
    %4078 = vmatpush1.msra.mxu0 0.0
    %4079 = vmatprep.subr.mxu0 0.0
    %4080 = vmatpush1.msra.mxu0 0.0
    %4081 = vmatprep.subr.mxu0 0.0
    %4082 = vmatpush1.msra.mxu0 0.0
    %4083 = vmatprep.subr.mxu0 0.0
    %4084 = vmatpush1.msra.mxu0 0.0
    %4085 = vmatprep.subr.mxu0 0.0
    %4086 = vmatpush1.msra.mxu0 0.0
    %4087 = vmatprep.subr.mxu0 0.0
    %4088 = vmatpush1.msra.mxu0 0.0
    %4089 = vmatprep.mubr.f32.mxu0 0.0
    %4090 = vmatmul.mubr.f32.gmra.mrb[0].mxu0 %v3527
    %v4091 = vpop.f32.mrb[0].mxu0
    %v4092 = vadd.f32 %v4021, %v4091
    %v4093 = vpop.f32.mrb[0].mxu0
    %v4094 = vadd.f32 %v4023, %v4093
    %4095 = vdwg.mxu0
    %4096 = vmatprep.subr.mxu0 %v3531
    %4097 = vmatpush1.msra.mxu0 %v3530
    %4098 = vmatprep.subr.mxu0 %v3539
    %4099 = vmatpush1.msra.mxu0 %v3538
    %4100 = vmatprep.subr.mxu0 %v3547
    %4101 = vmatpush1.msra.mxu0 %v3546
    %4102 = vmatprep.subr.mxu0 %v3555
    %4103 = vmatpush1.msra.mxu0 %v3554
    %4104 = vmatprep.subr.mxu0 %v3563
    %4105 = vmatpush1.msra.mxu0 %v3562
    %4106 = vmatprep.subr.mxu0 %v3571
    %4107 = vmatpush1.msra.mxu0 %v3570
    %4108 = vmatprep.subr.mxu0 %v3579
    %4109 = vmatpush1.msra.mxu0 %v3578
    %4110 = vmatprep.subr.mxu0 %v3587
    %4111 = vmatpush1.msra.mxu0 %v3586
    %4112 = vmatprep.subr.mxu0 %v3595
    %4113 = vmatpush1.msra.mxu0 %v3594
    %4114 = vmatprep.subr.mxu0 %v3603
    %4115 = vmatpush1.msra.mxu0 %v3602
    %4116 = vmatprep.subr.mxu0 %v3611
    %4117 = vmatpush1.msra.mxu0 %v3610
    %4118 = vmatprep.subr.mxu0 %v3619
    %4119 = vmatpush1.msra.mxu0 %v3618
    %4120 = vmatprep.subr.mxu0 %v3627
    %4121 = vmatpush1.msra.mxu0 %v3626
    %4122 = vmatprep.subr.mxu0 %v3635
    %4123 = vmatpush1.msra.mxu0 %v3634
    %4124 = vmatprep.subr.mxu0 %v3643
    %4125 = vmatpush1.msra.mxu0 %v3642
    %4126 = vmatprep.subr.mxu0 %v3651
    %4127 = vmatpush1.msra.mxu0 %v3650
    %4128 = vmatprep.subr.mxu0 %v3659
    %4129 = vmatpush1.msra.mxu0 %v3658
    %4130 = vmatprep.subr.mxu0 %v3667
    %4131 = vmatpush1.msra.mxu0 %v3666
    %4132 = vmatprep.subr.mxu0 %v3675
    %4133 = vmatpush1.msra.mxu0 %v3674
    %4134 = vmatprep.subr.mxu0 %v3683
    %4135 = vmatpush1.msra.mxu0 %v3682
    %4136 = vmatprep.subr.mxu0 %v3691
    %4137 = vmatpush1.msra.mxu0 %v3690
    %4138 = vmatprep.subr.mxu0 %v3699
    %4139 = vmatpush1.msra.mxu0 %v3698
    %4140 = vmatprep.subr.mxu0 %v3707
    %4141 = vmatpush1.msra.mxu0 %v3706
    %4142 = vmatprep.subr.mxu0 %v3715
    %4143 = vmatpush1.msra.mxu0 %v3714
    %4144 = vmatprep.subr.mxu0 %v3723
    %4145 = vmatpush1.msra.mxu0 %v3722
    %4146 = vmatprep.subr.mxu0 %v3731
    %4147 = vmatpush1.msra.mxu0 %v3730
    %4148 = vmatprep.subr.mxu0 %v3739
    %4149 = vmatpush1.msra.mxu0 %v3738
    %4150 = vmatprep.subr.mxu0 %v3747
    %4151 = vmatpush1.msra.mxu0 %v3746
    %4152 = vmatprep.subr.mxu0 %v3755
    %4153 = vmatpush1.msra.mxu0 %v3754
    %4154 = vmatprep.subr.mxu0 %v3763
    %4155 = vmatpush1.msra.mxu0 %v3762
    %4156 = vmatprep.subr.mxu0 %v3771
    %4157 = vmatpush1.msra.mxu0 %v3770
    %4158 = vmatprep.subr.mxu0 %v3779
    %4159 = vmatpush1.msra.mxu0 %v3778
    %4160 = vmatprep.mubr.f32.mxu0 %v3526
    %4161 = vmatmul.mubr.f32.gmra.mrb[0].mxu0 %v3525
    %v4162 = vpop.f32.mrb[0].mxu0
    %v4163 = vadd.f32 %v3925, %v4162
    %v4164 = vpop.f32.mrb[0].mxu0
    %v4165 = vadd.f32 %v3929, %v4164
    %4166 = vdwg.mxu0
    %4167 = vmatprep.subr.mxu0 %v3787
    %4168 = vmatpush1.msra.mxu0 %v3786
    %4169 = vmatprep.subr.mxu0 %v3795
    %4170 = vmatpush1.msra.mxu0 %v3794
    %4171 = vmatprep.subr.mxu0 %v3803
    %4172 = vmatpush1.msra.mxu0 %v3802
    %4173 = vmatprep.subr.mxu0 %v3811
    %4174 = vmatpush1.msra.mxu0 %v3810
    %4175 = vmatprep.subr.mxu0 %v3819
    %4176 = vmatpush1.msra.mxu0 %v3818
    %4177 = vmatprep.subr.mxu0 %v3827
    %4178 = vmatpush1.msra.mxu0 %v3826
    %4179 = vmatprep.subr.mxu0 %v3835
    %4180 = vmatpush1.msra.mxu0 %v3834
    %4181 = vmatprep.subr.mxu0 %v3843
    %4182 = vmatpush1.msra.mxu0 %v3842
    %4183 = vmatprep.subr.mxu0 %v3851
    %4184 = vmatpush1.msra.mxu0 %v3850
    %4185 = vmatprep.subr.mxu0 %v3859
    %4186 = vmatpush1.msra.mxu0 %v3858
    %4187 = vmatprep.subr.mxu0 %v3867
    %4188 = vmatpush1.msra.mxu0 %v3866
    %4189 = vmatprep.subr.mxu0 %v3875
    %4190 = vmatpush1.msra.mxu0 %v3874
    %4191 = vmatprep.subr.mxu0 %v3883
    %4192 = vmatpush1.msra.mxu0 %v3882
    %4193 = vmatprep.subr.mxu0 %v3891
    %4194 = vmatpush1.msra.mxu0 %v3890
    %4195 = vmatprep.subr.mxu0 %v3899
    %4196 = vmatpush1.msra.mxu0 %v3898
    %4197 = vmatprep.subr.mxu0 %v3907
    %4198 = vmatpush1.msra.mxu0 %v3906
    %4199 = vmatprep.subr.mxu0 0.0
    %4200 = vmatpush1.msra.mxu0 0.0
    %4201 = vmatprep.subr.mxu0 0.0
    %4202 = vmatpush1.msra.mxu0 0.0
    %4203 = vmatprep.subr.mxu0 0.0
    %4204 = vmatpush1.msra.mxu0 0.0
    %4205 = vmatprep.subr.mxu0 0.0
    %4206 = vmatpush1.msra.mxu0 0.0
    %4207 = vmatprep.subr.mxu0 0.0
    %4208 = vmatpush1.msra.mxu0 0.0
    %4209 = vmatprep.subr.mxu0 0.0
    %4210 = vmatpush1.msra.mxu0 0.0
    %4211 = vmatprep.subr.mxu0 0.0
    %4212 = vmatpush1.msra.mxu0 0.0
    %4213 = vmatprep.subr.mxu0 0.0
    %4214 = vmatpush1.msra.mxu0 0.0
    %4215 = vmatprep.subr.mxu0 0.0
    %4216 = vmatpush1.msra.mxu0 0.0
    %4217 = vmatprep.subr.mxu0 0.0
    %4218 = vmatpush1.msra.mxu0 0.0
    %4219 = vmatprep.subr.mxu0 0.0
    %4220 = vmatpush1.msra.mxu0 0.0
    %4221 = vmatprep.subr.mxu0 0.0
    %4222 = vmatpush1.msra.mxu0 0.0
    %4223 = vmatprep.subr.mxu0 0.0
    %4224 = vmatpush1.msra.mxu0 0.0
    %4225 = vmatprep.subr.mxu0 0.0
    %4226 = vmatpush1.msra.mxu0 0.0
    %4227 = vmatprep.subr.mxu0 0.0
    %4228 = vmatpush1.msra.mxu0 0.0
    %4229 = vmatprep.subr.mxu0 0.0
    %4230 = vmatpush1.msra.mxu0 0.0
    %4231 = vmatprep.mubr.f32.mxu0 0.0
    %4232 = vmatmul.mubr.f32.gmra.mrb[0].mxu0 %v3527
    %v4233 = vpop.f32.mrb[0].mxu0
    %v4234 = vadd.f32 %v4163, %v4233
    %v4235 = vpop.f32.mrb[0].mxu0
    %v4236 = vadd.f32 %v4165, %v4235
    %4237 = vdwg.mxu0
    %4238 = vmatprep.subr.mxu0 %v3533
    %4239 = vmatpush1.msra.mxu0 %v3532
    %4240 = vmatprep.subr.mxu0 %v3541
    %4241 = vmatpush1.msra.mxu0 %v3540
    %4242 = vmatprep.subr.mxu0 %v3549
    %4243 = vmatpush1.msra.mxu0 %v3548
    %4244 = vmatprep.subr.mxu0 %v3557
    %4245 = vmatpush1.msra.mxu0 %v3556
    %4246 = vmatprep.subr.mxu0 %v3565
    %4247 = vmatpush1.msra.mxu0 %v3564
    %4248 = vmatprep.subr.mxu0 %v3573
    %4249 = vmatpush1.msra.mxu0 %v3572
    %4250 = vmatprep.subr.mxu0 %v3581
    %4251 = vmatpush1.msra.mxu0 %v3580
    %4252 = vmatprep.subr.mxu0 %v3589
    %4253 = vmatpush1.msra.mxu0 %v3588
    %4254 = vmatprep.subr.mxu0 %v3597
    %4255 = vmatpush1.msra.mxu0 %v3596
    %4256 = vmatprep.subr.mxu0 %v3605
    %4257 = vmatpush1.msra.mxu0 %v3604
    %4258 = vmatprep.subr.mxu0 %v3613
    %4259 = vmatpush1.msra.mxu0 %v3612
    %4260 = vmatprep.subr.mxu0 %v3621
    %4261 = vmatpush1.msra.mxu0 %v3620
    %4262 = vmatprep.subr.mxu0 %v3629
    %4263 = vmatpush1.msra.mxu0 %v3628
    %4264 = vmatprep.subr.mxu0 %v3637
    %4265 = vmatpush1.msra.mxu0 %v3636
    %4266 = vmatprep.subr.mxu0 %v3645
    %4267 = vmatpush1.msra.mxu0 %v3644
    %4268 = vmatprep.subr.mxu0 %v3653
    %4269 = vmatpush1.msra.mxu0 %v3652
    %4270 = vmatprep.subr.mxu0 %v3661
    %4271 = vmatpush1.msra.mxu0 %v3660
    %4272 = vmatprep.subr.mxu0 %v3669
    %4273 = vmatpush1.msra.mxu0 %v3668
    %4274 = vmatprep.subr.mxu0 %v3677
    %4275 = vmatpush1.msra.mxu0 %v3676
    %4276 = vmatprep.subr.mxu0 %v3685
    %4277 = vmatpush1.msra.mxu0 %v3684
    %4278 = vmatprep.subr.mxu0 %v3693
    %4279 = vmatpush1.msra.mxu0 %v3692
    %4280 = vmatprep.subr.mxu0 %v3701
    %4281 = vmatpush1.msra.mxu0 %v3700
    %4282 = vmatprep.subr.mxu0 %v3709
    %4283 = vmatpush1.msra.mxu0 %v3708
    %4284 = vmatprep.subr.mxu0 %v3717
    %4285 = vmatpush1.msra.mxu0 %v3716
    %4286 = vmatprep.subr.mxu0 %v3725
    %4287 = vmatpush1.msra.mxu0 %v3724
    %4288 = vmatprep.subr.mxu0 %v3733
    %4289 = vmatpush1.msra.mxu0 %v3732
    %4290 = vmatprep.subr.mxu0 %v3741
    %4291 = vmatpush1.msra.mxu0 %v3740
    %4292 = vmatprep.subr.mxu0 %v3749
    %4293 = vmatpush1.msra.mxu0 %v3748
    %4294 = vmatprep.subr.mxu0 %v3757
    %4295 = vmatpush1.msra.mxu0 %v3756
    %4296 = vmatprep.subr.mxu0 %v3765
    %4297 = vmatpush1.msra.mxu0 %v3764
    %4298 = vmatprep.subr.mxu0 %v3773
    %4299 = vmatpush1.msra.mxu0 %v3772
    %4300 = vmatprep.subr.mxu0 %v3781
    %4301 = vmatpush1.msra.mxu0 %v3780
    %4302 = vmatprep.mubr.f32.mxu0 %v3526
    %4303 = vmatmul.mubr.f32.gmra.mrb[0].mxu0 %v3525
    %v4304 = vpop.f32.mrb[0].mxu0
    %v4305 = vadd.f32 %v3933, %v4304
    %v4306 = vpop.f32.mrb[0].mxu0
    %v4307 = vadd.f32 %v3937, %v4306
    %4308 = vdwg.mxu0
    %4309 = vmatprep.subr.mxu0 %v3789
    %4310 = vmatpush1.msra.mxu0 %v3788
    %4311 = vmatprep.subr.mxu0 %v3797
    %4312 = vmatpush1.msra.mxu0 %v3796
    %4313 = vmatprep.subr.mxu0 %v3805
    %4314 = vmatpush1.msra.mxu0 %v3804
    %4315 = vmatprep.subr.mxu0 %v3813
    %4316 = vmatpush1.msra.mxu0 %v3812
    %4317 = vmatprep.subr.mxu0 %v3821
    %4318 = vmatpush1.msra.mxu0 %v3820
    %4319 = vmatprep.subr.mxu0 %v3829
    %4320 = vmatpush1.msra.mxu0 %v3828
    %4321 = vmatprep.subr.mxu0 %v3837
    %4322 = vmatpush1.msra.mxu0 %v3836
    %4323 = vmatprep.subr.mxu0 %v3845
    %4324 = vmatpush1.msra.mxu0 %v3844
    %4325 = vmatprep.subr.mxu0 %v3853
    %4326 = vmatpush1.msra.mxu0 %v3852
    %4327 = vmatprep.subr.mxu0 %v3861
    %4328 = vmatpush1.msra.mxu0 %v3860
    %4329 = vmatprep.subr.mxu0 %v3869
    %4330 = vmatpush1.msra.mxu0 %v3868
    %4331 = vmatprep.subr.mxu0 %v3877
    %4332 = vmatpush1.msra.mxu0 %v3876
    %4333 = vmatprep.subr.mxu0 %v3885
    %4334 = vmatpush1.msra.mxu0 %v3884
    %4335 = vmatprep.subr.mxu0 %v3893
    %4336 = vmatpush1.msra.mxu0 %v3892
    %4337 = vmatprep.subr.mxu0 %v3901
    %4338 = vmatpush1.msra.mxu0 %v3900
    %4339 = vmatprep.subr.mxu0 %v3909
    %4340 = vmatpush1.msra.mxu0 %v3908
    %4341 = vmatprep.subr.mxu0 0.0
    %4342 = vmatpush1.msra.mxu0 0.0
    %4343 = vmatprep.subr.mxu0 0.0
    %4344 = vmatpush1.msra.mxu0 0.0
    %4345 = vmatprep.subr.mxu0 0.0
    %4346 = vmatpush1.msra.mxu0 0.0
    %4347 = vmatprep.subr.mxu0 0.0
    %4348 = vmatpush1.msra.mxu0 0.0
    %4349 = vmatprep.subr.mxu0 0.0
    %4350 = vmatpush1.msra.mxu0 0.0
    %4351 = vmatprep.subr.mxu0 0.0
    %4352 = vmatpush1.msra.mxu0 0.0
    %4353 = vmatprep.subr.mxu0 0.0
    %4354 = vmatpush1.msra.mxu0 0.0
    %4355 = vmatprep.subr.mxu0 0.0
    %4356 = vmatpush1.msra.mxu0 0.0
    %4357 = vmatprep.subr.mxu0 0.0
    %4358 = vmatpush1.msra.mxu0 0.0
    %4359 = vmatprep.subr.mxu0 0.0
    %4360 = vmatpush1.msra.mxu0 0.0
    %4361 = vmatprep.subr.mxu0 0.0
    %4362 = vmatpush1.msra.mxu0 0.0
    %4363 = vmatprep.subr.mxu0 0.0
    %4364 = vmatpush1.msra.mxu0 0.0
    %4365 = vmatprep.subr.mxu0 0.0
    %4366 = vmatpush1.msra.mxu0 0.0
    %4367 = vmatprep.subr.mxu0 0.0
    %4368 = vmatpush1.msra.mxu0 0.0
    %4369 = vmatprep.subr.mxu0 0.0
    %4370 = vmatpush1.msra.mxu0 0.0
    %4371 = vmatprep.subr.mxu0 0.0
    %4372 = vmatpush1.msra.mxu0 0.0
    %4373 = vmatprep.mubr.f32.mxu0 0.0
    %4374 = vmatmul.mubr.f32.gmra.mrb[0].mxu0 %v3527
    %v4375 = vpop.f32.mrb[0].mxu0
    %v4376 = vadd.f32 %v4305, %v4375
    %v4377 = vpop.f32.mrb[0].mxu0
    %v4378 = vadd.f32 %v4307, %v4377
    %4379 = vdwg.mxu0
    %4380 = vmatprep.subr.mxu0 %v3535
    %4381 = vmatpush1.msra.mxu0 %v3534
    %4382 = vmatprep.subr.mxu0 %v3543
    %4383 = vmatpush1.msra.mxu0 %v3542
    %4384 = vmatprep.subr.mxu0 %v3551
    %4385 = vmatpush1.msra.mxu0 %v3550
    %4386 = vmatprep.subr.mxu0 %v3559
    %4387 = vmatpush1.msra.mxu0 %v3558
    %4388 = vmatprep.subr.mxu0 %v3567
    %4389 = vmatpush1.msra.mxu0 %v3566
    %4390 = vmatprep.subr.mxu0 %v3575
    %4391 = vmatpush1.msra.mxu0 %v3574
    %4392 = vmatprep.subr.mxu0 %v3583
    %4393 = vmatpush1.msra.mxu0 %v3582
    %4394 = vmatprep.subr.mxu0 %v3591
    %4395 = vmatpush1.msra.mxu0 %v3590
    %4396 = vmatprep.subr.mxu0 %v3599
    %4397 = vmatpush1.msra.mxu0 %v3598
    %4398 = vmatprep.subr.mxu0 %v3607
    %4399 = vmatpush1.msra.mxu0 %v3606
    %4400 = vmatprep.subr.mxu0 %v3615
    %4401 = vmatpush1.msra.mxu0 %v3614
    %4402 = vmatprep.subr.mxu0 %v3623
    %4403 = vmatpush1.msra.mxu0 %v3622
    %4404 = vmatprep.subr.mxu0 %v3631
    %4405 = vmatpush1.msra.mxu0 %v3630
    %4406 = vmatprep.subr.mxu0 %v3639
    %4407 = vmatpush1.msra.mxu0 %v3638
    %4408 = vmatprep.subr.mxu0 %v3647
    %4409 = vmatpush1.msra.mxu0 %v3646
    %4410 = vmatprep.subr.mxu0 %v3655
    %4411 = vmatpush1.msra.mxu0 %v3654
    %4412 = vmatprep.subr.mxu0 %v3663
    %4413 = vmatpush1.msra.mxu0 %v3662
    %4414 = vmatprep.subr.mxu0 %v3671
    %4415 = vmatpush1.msra.mxu0 %v3670
    %4416 = vmatprep.subr.mxu0 %v3679
    %4417 = vmatpush1.msra.mxu0 %v3678
    %4418 = vmatprep.subr.mxu0 %v3687
    %4419 = vmatpush1.msra.mxu0 %v3686
    %4420 = vmatprep.subr.mxu0 %v3695
    %4421 = vmatpush1.msra.mxu0 %v3694
    %4422 = vmatprep.subr.mxu0 %v3703
    %4423 = vmatpush1.msra.mxu0 %v3702
    %4424 = vmatprep.subr.mxu0 %v3711
    %4425 = vmatpush1.msra.mxu0 %v3710
    %4426 = vmatprep.subr.mxu0 %v3719
    %4427 = vmatpush1.msra.mxu0 %v3718
    %4428 = vmatprep.subr.mxu0 %v3727
    %4429 = vmatpush1.msra.mxu0 %v3726
    %4430 = vmatprep.subr.mxu0 %v3735
    %4431 = vmatpush1.msra.mxu0 %v3734
    %4432 = vmatprep.subr.mxu0 %v3743
    %4433 = vmatpush1.msra.mxu0 %v3742
    %4434 = vmatprep.subr.mxu0 %v3751
    %4435 = vmatpush1.msra.mxu0 %v3750
    %4436 = vmatprep.subr.mxu0 %v3759
    %4437 = vmatpush1.msra.mxu0 %v3758
    %4438 = vmatprep.subr.mxu0 %v3767
    %4439 = vmatpush1.msra.mxu0 %v3766
    %4440 = vmatprep.subr.mxu0 %v3775
    %4441 = vmatpush1.msra.mxu0 %v3774
    %4442 = vmatprep.subr.mxu0 %v3783
    %4443 = vmatpush1.msra.mxu0 %v3782
    %4444 = vmatprep.mubr.f32.mxu0 %v3526
    %4445 = vmatmul.mubr.f32.gmra.mrb[0].mxu0 %v3525
    %v4446 = vpop.f32.mrb[0].mxu0
    %v4447 = vadd.f32 %v3941, %v4446
    %v4448 = vpop.f32.mrb[0].mxu0
    %v4449 = vadd.f32 %v3945, %v4448
    %4450 = vdwg.mxu0
    %4451 = vmatprep.subr.mxu0 %v3791
    %4452 = vmatpush1.msra.mxu0 %v3790
    %4453 = vmatprep.subr.mxu0 %v3799
    %4454 = vmatpush1.msra.mxu0 %v3798
    %4455 = vmatprep.subr.mxu0 %v3807
    %4456 = vmatpush1.msra.mxu0 %v3806
    %4457 = vmatprep.subr.mxu0 %v3815
    %4458 = vmatpush1.msra.mxu0 %v3814
    %4459 = vmatprep.subr.mxu0 %v3823
    %4460 = vmatpush1.msra.mxu0 %v3822
    %4461 = vmatprep.subr.mxu0 %v3831
    %4462 = vmatpush1.msra.mxu0 %v3830
    %4463 = vmatprep.subr.mxu0 %v3839
    %4464 = vmatpush1.msra.mxu0 %v3838
    %4465 = vmatprep.subr.mxu0 %v3847
    %4466 = vmatpush1.msra.mxu0 %v3846
    %4467 = vmatprep.subr.mxu0 %v3855
    %4468 = vmatpush1.msra.mxu0 %v3854
    %4469 = vmatprep.subr.mxu0 %v3863
    %4470 = vmatpush1.msra.mxu0 %v3862
    %4471 = vmatprep.subr.mxu0 %v3871
    %4472 = vmatpush1.msra.mxu0 %v3870
    %4473 = vmatprep.subr.mxu0 %v3879
    %4474 = vmatpush1.msra.mxu0 %v3878
    %4475 = vmatprep.subr.mxu0 %v3887
    %4476 = vmatpush1.msra.mxu0 %v3886
    %4477 = vmatprep.subr.mxu0 %v3895
    %4478 = vmatpush1.msra.mxu0 %v3894
    %4479 = vmatprep.subr.mxu0 %v3903
    %4480 = vmatpush1.msra.mxu0 %v3902
    %4481 = vmatprep.subr.mxu0 %v3911
    %4482 = vmatpush1.msra.mxu0 %v3910
    %4483 = vmatprep.subr.mxu0 0.0
    %4484 = vmatpush1.msra.mxu0 0.0
    %4485 = vmatprep.subr.mxu0 0.0
    %4486 = vmatpush1.msra.mxu0 0.0
    %4487 = vmatprep.subr.mxu0 0.0
    %4488 = vmatpush1.msra.mxu0 0.0
    %4489 = vmatprep.subr.mxu0 0.0
    %4490 = vmatpush1.msra.mxu0 0.0
    %4491 = vmatprep.subr.mxu0 0.0
    %4492 = vmatpush1.msra.mxu0 0.0
    %4493 = vmatprep.subr.mxu0 0.0
    %4494 = vmatpush1.msra.mxu0 0.0
    %4495 = vmatprep.subr.mxu0 0.0
    %4496 = vmatpush1.msra.mxu0 0.0
    %4497 = vmatprep.subr.mxu0 0.0
    %4498 = vmatpush1.msra.mxu0 0.0
    %4499 = vmatprep.subr.mxu0 0.0
    %4500 = vmatpush1.msra.mxu0 0.0
    %4501 = vmatprep.subr.mxu0 0.0
    %4502 = vmatpush1.msra.mxu0 0.0
    %4503 = vmatprep.subr.mxu0 0.0
    %4504 = vmatpush1.msra.mxu0 0.0
    %4505 = vmatprep.subr.mxu0 0.0
    %4506 = vmatpush1.msra.mxu0 0.0
    %4507 = vmatprep.subr.mxu0 0.0
    %4508 = vmatpush1.msra.mxu0 0.0
    %4509 = vmatprep.subr.mxu0 0.0
    %4510 = vmatpush1.msra.mxu0 0.0
    %4511 = vmatprep.subr.mxu0 0.0
    %4512 = vmatpush1.msra.mxu0 0.0
    %4513 = vmatprep.subr.mxu0 0.0
    %4514 = vmatpush1.msra.mxu0 0.0
    %4515 = vmatprep.mubr.f32.mxu0 0.0
    %4516 = vmatmul.mubr.f32.gmra.mrb[0].mxu0 %v3527
    %v4517 = vpop.f32.mrb[0].mxu0
    %v4518 = vadd.f32 %v4447, %v4517
    %v4519 = vpop.f32.mrb[0].mxu0
    %v4520 = vadd.f32 %v4449, %v4519
    %4521 = vdwg.mxu0
    %v4522 = vmax.f32 %v4092, 0.0
    %v4523 = vmax.f32 %v4094, 0.0
    %v4524 = vmax.f32 %v4234, 0.0
    %v4525 = vmax.f32 %v4236, 0.0
    %v4526 = vmax.f32 %v4376, 0.0
    %v4527 = vmax.f32 %v4378, 0.0
    %v4528 = vmax.f32 %v4518, 0.0
    %v4529 = vmax.f32 %v4520, 0.0
    %v4530 = vld [vmem:[#allocation12] sm:$0xff]
    %v4531 = vld [vmem:[#allocation12 + $0x8] sm:$0xff]
    %v4532 = vld [vmem:[#allocation12 + $0x10] sm:$0xff]
    %v4533 = vld [vmem:[#allocation12 + $0x18] sm:$0xff]
    %v4534 = vld [vmem:[#allocation12 + $0x20] sm:$0xff]
    %v4535 = vld [vmem:[#allocation12 + $0x28] sm:$0xff]
    %v4536 = vld [vmem:[#allocation12 + $0x30] sm:$0xff]
    %v4537 = vld [vmem:[#allocation12 + $0x38] sm:$0xff]
    %v4538 = vld [vmem:[#allocation12 + $0x40] sm:$0xff]
    %v4539 = vld [vmem:[#allocation12 + $0x48] sm:$0xff]
    %v4540 = vld [vmem:[#allocation12 + $0x50] sm:$0xff]
    %v4541 = vld [vmem:[#allocation12 + $0x58] sm:$0xff]
    %v4542 = vld [vmem:[#allocation12 + $0x60] sm:$0xff]
    %v4543 = vld [vmem:[#allocation12 + $0x68] sm:$0xff]
    %v4544 = vld [vmem:[#allocation12 + $0x70] sm:$0xff]
    %v4545 = vld [vmem:[#allocation12 + $0x78] sm:$0xff]
    %v4546 = vld [vmem:[#allocation12 + $0x80] sm:$0xff]
    %v4547 = vld [vmem:[#allocation12 + $0x88] sm:$0xff]
    %v4548 = vld [vmem:[#allocation12 + $0x90] sm:$0xff]
    %v4549 = vld [vmem:[#allocation12 + $0x98] sm:$0xff]
    %v4550 = vld [vmem:[#allocation12 + $0xa0] sm:$0xff]
    %v4551 = vld [vmem:[#allocation12 + $0xa8] sm:$0xff]
    %v4552 = vld [vmem:[#allocation12 + $0xb0] sm:$0xff]
    %v4553 = vld [vmem:[#allocation12 + $0xb8] sm:$0xff]
    %v4554 = vld [vmem:[#allocation12 + $0xc0] sm:$0xff]
    %v4555 = vld [vmem:[#allocation12 + $0xc8] sm:$0xff]
    %v4556 = vld [vmem:[#allocation12 + $0xd0] sm:$0xff]
    %v4557 = vld [vmem:[#allocation12 + $0xd8] sm:$0xff]
    %v4558 = vld [vmem:[#allocation12 + $0xe0] sm:$0xff]
    %v4559 = vld [vmem:[#allocation12 + $0xe8] sm:$0xff]
    %v4560 = vld [vmem:[#allocation12 + $0xf0] sm:$0xff]
    %v4561 = vld [vmem:[#allocation12 + $0xf8] sm:$0xff]
    %v4562 = vld [vmem:[#allocation12 + $0x100] sm:$0xff]
    %v4563 = vld [vmem:[#allocation12 + $0x108] sm:$0xff]
    %v4564 = vld [vmem:[#allocation12 + $0x110] sm:$0xff]
    %v4565 = vld [vmem:[#allocation12 + $0x118] sm:$0xff]
    %v4566 = vld [vmem:[#allocation12 + $0x120] sm:$0xff]
    %v4567 = vld [vmem:[#allocation12 + $0x128] sm:$0xff]
    %v4568 = vld [vmem:[#allocation12 + $0x130] sm:$0xff]
    %v4569 = vld [vmem:[#allocation12 + $0x138] sm:$0xff]
    %v4570 = vld [vmem:[#allocation12 + $0x140] sm:$0xff]
    %v4571 = vld [vmem:[#allocation12 + $0x148] sm:$0xff]
    %v4572 = vld [vmem:[#allocation12 + $0x150] sm:$0xff]
    %v4573 = vld [vmem:[#allocation12 + $0x158] sm:$0xff]
    %v4574 = vld [vmem:[#allocation12 + $0x160] sm:$0xff]
    %v4575 = vld [vmem:[#allocation12 + $0x168] sm:$0xff]
    %v4576 = vld [vmem:[#allocation12 + $0x170] sm:$0xff]
    %v4577 = vld [vmem:[#allocation12 + $0x178] sm:$0xff]
    %v4578 = vld [vmem:[#allocation12 + $0x180] sm:$0xff]
    %v4579 = vld [vmem:[#allocation12 + $0x188] sm:$0xff]
    %v4580 = vld [vmem:[#allocation12 + $0x190] sm:$0xff]
    %v4581 = vld [vmem:[#allocation12 + $0x198] sm:$0xff]
    %v4582 = vld [vmem:[#allocation12 + $0x1a0] sm:$0xff]
    %v4583 = vld [vmem:[#allocation12 + $0x1a8] sm:$0xff]
    %v4584 = vld [vmem:[#allocation12 + $0x1b0] sm:$0xff]
    %v4585 = vld [vmem:[#allocation12 + $0x1b8] sm:$0xff]
    %v4586 = vld [vmem:[#allocation12 + $0x1c0] sm:$0xff]
    %v4587 = vld [vmem:[#allocation12 + $0x1c8] sm:$0xff]
    %v4588 = vld [vmem:[#allocation12 + $0x1d0] sm:$0xff]
    %v4589 = vld [vmem:[#allocation12 + $0x1d8] sm:$0xff]
    %v4590 = vld [vmem:[#allocation12 + $0x1e0] sm:$0xff]
    %v4591 = vld [vmem:[#allocation12 + $0x1e8] sm:$0xff]
    %v4592 = vld [vmem:[#allocation12 + $0x1f0] sm:$0xff]
    %v4593 = vld [vmem:[#allocation12 + $0x1f8] sm:$0xff]
    %v4594 = vld [vmem:[#allocation12 + $0x200] sm:$0xff]
    %v4595 = vld [vmem:[#allocation12 + $0x208] sm:$0xff]
    %v4596 = vld [vmem:[#allocation12 + $0x210] sm:$0xff]
    %v4597 = vld [vmem:[#allocation12 + $0x218] sm:$0xff]
    %v4598 = vld [vmem:[#allocation12 + $0x220] sm:$0xff]
    %v4599 = vld [vmem:[#allocation12 + $0x228] sm:$0xff]
    %v4600 = vld [vmem:[#allocation12 + $0x230] sm:$0xff]
    %v4601 = vld [vmem:[#allocation12 + $0x238] sm:$0xff]
    %v4602 = vld [vmem:[#allocation12 + $0x240] sm:$0xff]
    %v4603 = vld [vmem:[#allocation12 + $0x248] sm:$0xff]
    %v4604 = vld [vmem:[#allocation12 + $0x250] sm:$0xff]
    %v4605 = vld [vmem:[#allocation12 + $0x258] sm:$0xff]
    %v4606 = vld [vmem:[#allocation12 + $0x260] sm:$0xff]
    %v4607 = vld [vmem:[#allocation12 + $0x268] sm:$0xff]
    %v4608 = vld [vmem:[#allocation12 + $0x270] sm:$0xff]
    %v4609 = vld [vmem:[#allocation12 + $0x278] sm:$0xff]
    %v4610 = vld [vmem:[#allocation12 + $0x280] sm:$0xff]
    %v4611 = vld [vmem:[#allocation12 + $0x288] sm:$0xff]
    %v4612 = vld [vmem:[#allocation12 + $0x290] sm:$0xff]
    %v4613 = vld [vmem:[#allocation12 + $0x298] sm:$0xff]
    %v4614 = vld [vmem:[#allocation12 + $0x2a0] sm:$0xff]
    %v4615 = vld [vmem:[#allocation12 + $0x2a8] sm:$0xff]
    %v4616 = vld [vmem:[#allocation12 + $0x2b0] sm:$0xff]
    %v4617 = vld [vmem:[#allocation12 + $0x2b8] sm:$0xff]
    %v4618 = vld [vmem:[#allocation12 + $0x2c0] sm:$0xff]
    %v4619 = vld [vmem:[#allocation12 + $0x2c8] sm:$0xff]
    %v4620 = vld [vmem:[#allocation12 + $0x2d0] sm:$0xff]
    %v4621 = vld [vmem:[#allocation12 + $0x2d8] sm:$0xff]
    %v4622 = vld [vmem:[#allocation12 + $0x2e0] sm:$0xff]
    %v4623 = vld [vmem:[#allocation12 + $0x2e8] sm:$0xff]
    %v4624 = vld [vmem:[#allocation12 + $0x2f0] sm:$0xff]
    %v4625 = vld [vmem:[#allocation12 + $0x2f8] sm:$0xff]
    %v4626 = vld [vmem:[#allocation12 + $0x300] sm:$0xff]
    %v4627 = vld [vmem:[#allocation12 + $0x308] sm:$0xff]
    %v4628 = vld [vmem:[#allocation12 + $0x310] sm:$0xff]
    %v4629 = vld [vmem:[#allocation12 + $0x318] sm:$0xff]
    %v4630 = vld [vmem:[#allocation12 + $0x320] sm:$0xff]
    %v4631 = vld [vmem:[#allocation12 + $0x328] sm:$0xff]
    %v4632 = vld [vmem:[#allocation12 + $0x330] sm:$0xff]
    %v4633 = vld [vmem:[#allocation12 + $0x338] sm:$0xff]
    %v4634 = vld [vmem:[#allocation12 + $0x340] sm:$0xff]
    %v4635 = vld [vmem:[#allocation12 + $0x348] sm:$0xff]
    %v4636 = vld [vmem:[#allocation12 + $0x350] sm:$0xff]
    %v4637 = vld [vmem:[#allocation12 + $0x358] sm:$0xff]
    %v4638 = vld [vmem:[#allocation12 + $0x360] sm:$0xff]
    %v4639 = vld [vmem:[#allocation12 + $0x368] sm:$0xff]
    %v4640 = vld [vmem:[#allocation12 + $0x370] sm:$0xff]
    %v4641 = vld [vmem:[#allocation12 + $0x378] sm:$0xff]
    %v4642 = vld [vmem:[#allocation12 + $0x380] sm:$0xff]
    %v4643 = vld [vmem:[#allocation12 + $0x388] sm:$0xff]
    %v4644 = vld [vmem:[#allocation12 + $0x390] sm:$0xff]
    %v4645 = vld [vmem:[#allocation12 + $0x398] sm:$0xff]
    %v4646 = vld [vmem:[#allocation12 + $0x3a0] sm:$0xff]
    %v4647 = vld [vmem:[#allocation12 + $0x3a8] sm:$0xff]
    %v4648 = vld [vmem:[#allocation12 + $0x3b0] sm:$0xff]
    %v4649 = vld [vmem:[#allocation12 + $0x3b8] sm:$0xff]
    %v4650 = vld [vmem:[#allocation12 + $0x3c0] sm:$0xff]
    %v4651 = vld [vmem:[#allocation12 + $0x3c8] sm:$0xff]
    %v4652 = vld [vmem:[#allocation12 + $0x3d0] sm:$0xff]
    %v4653 = vld [vmem:[#allocation12 + $0x3d8] sm:$0xff]
    %v4654 = vld [vmem:[#allocation12 + $0x3e0] sm:$0xff]
    %v4655 = vld [vmem:[#allocation12 + $0x3e8] sm:$0xff]
    %v4656 = vld [vmem:[#allocation12 + $0x3f0] sm:$0xff]
    %v4657 = vld [vmem:[#allocation12 + $0x3f8] sm:$0xff]
    %v4658 = vld [vmem:[#allocation14] sm:$0x1]
    %v4660 = vlaneseq
    %v4661 = vshrl.u32 %v4660, 7
    %v4662 = vsub.s32 0, %v4661
    %v4663 = vrot.slane %v4658, %v4662
    %4665 = vmatprep.subr.mxu0 0.0
    %4666 = vmatpush1.msra.mxu0 %v4530
    %4667 = vmatprep.subr.mxu0 0.0
    %4668 = vmatpush1.msra.mxu0 %v4531
    %4669 = vmatprep.subr.mxu0 0.0
    %4670 = vmatpush1.msra.mxu0 %v4532
    %4671 = vmatprep.subr.mxu0 0.0
    %4672 = vmatpush1.msra.mxu0 %v4533
    %4673 = vmatprep.subr.mxu0 0.0
    %4674 = vmatpush1.msra.mxu0 %v4534
    %4675 = vmatprep.subr.mxu0 0.0
    %4676 = vmatpush1.msra.mxu0 %v4535
    %4677 = vmatprep.subr.mxu0 0.0
    %4678 = vmatpush1.msra.mxu0 %v4536
    %4679 = vmatprep.subr.mxu0 0.0
    %4680 = vmatpush1.msra.mxu0 %v4537
    %4681 = vmatprep.subr.mxu0 0.0
    %4682 = vmatpush1.msra.mxu0 %v4538
    %4683 = vmatprep.subr.mxu0 0.0
    %4684 = vmatpush1.msra.mxu0 %v4539
    %4685 = vmatprep.subr.mxu0 0.0
    %4686 = vmatpush1.msra.mxu0 %v4540
    %4687 = vmatprep.subr.mxu0 0.0
    %4688 = vmatpush1.msra.mxu0 %v4541
    %4689 = vmatprep.subr.mxu0 0.0
    %4690 = vmatpush1.msra.mxu0 %v4542
    %4691 = vmatprep.subr.mxu0 0.0
    %4692 = vmatpush1.msra.mxu0 %v4543
    %4693 = vmatprep.subr.mxu0 0.0
    %4694 = vmatpush1.msra.mxu0 %v4544
    %4695 = vmatprep.subr.mxu0 0.0
    %4696 = vmatpush1.msra.mxu0 %v4545
    %4697 = vmatprep.subr.mxu0 0.0
    %4698 = vmatpush1.msra.mxu0 %v4546
    %4699 = vmatprep.subr.mxu0 0.0
    %4700 = vmatpush1.msra.mxu0 %v4547
    %4701 = vmatprep.subr.mxu0 0.0
    %4702 = vmatpush1.msra.mxu0 %v4548
    %4703 = vmatprep.subr.mxu0 0.0
    %4704 = vmatpush1.msra.mxu0 %v4549
    %4705 = vmatprep.subr.mxu0 0.0
    %4706 = vmatpush1.msra.mxu0 %v4550
    %4707 = vmatprep.subr.mxu0 0.0
    %4708 = vmatpush1.msra.mxu0 %v4551
    %4709 = vmatprep.subr.mxu0 0.0
    %4710 = vmatpush1.msra.mxu0 %v4552
    %4711 = vmatprep.subr.mxu0 0.0
    %4712 = vmatpush1.msra.mxu0 %v4553
    %4713 = vmatprep.subr.mxu0 0.0
    %4714 = vmatpush1.msra.mxu0 %v4554
    %4715 = vmatprep.subr.mxu0 0.0
    %4716 = vmatpush1.msra.mxu0 %v4555
    %4717 = vmatprep.subr.mxu0 0.0
    %4718 = vmatpush1.msra.mxu0 %v4556
    %4719 = vmatprep.subr.mxu0 0.0
    %4720 = vmatpush1.msra.mxu0 %v4557
    %4721 = vmatprep.subr.mxu0 0.0
    %4722 = vmatpush1.msra.mxu0 %v4558
    %4723 = vmatprep.subr.mxu0 0.0
    %4724 = vmatpush1.msra.mxu0 %v4559
    %4725 = vmatprep.subr.mxu0 0.0
    %4726 = vmatpush1.msra.mxu0 %v4560
    %4727 = vmatprep.subr.mxu0 0.0
    %4728 = vmatpush1.msra.mxu0 %v4561
    %4729 = vmatprep.mubr.f32.mxu0 %v4523
    %4730 = vmatmul.mubr.f32.gmra.mrb[0].mxu0 %v4522
    %v4731 = vpop.f32.mrb[0].mxu0
    %v4732 = vadd.f32 %v4663, %v4731
    %v4733 = vpop.f32.mrb[0].mxu0
    %4734 = vdwg.mxu0
    %4735 = vmatprep.subr.mxu0 0.0
    %4736 = vmatpush1.msra.mxu0 %v4562
    %4737 = vmatprep.subr.mxu0 0.0
    %4738 = vmatpush1.msra.mxu0 %v4563
    %4739 = vmatprep.subr.mxu0 0.0
    %4740 = vmatpush1.msra.mxu0 %v4564
    %4741 = vmatprep.subr.mxu0 0.0
    %4742 = vmatpush1.msra.mxu0 %v4565
    %4743 = vmatprep.subr.mxu0 0.0
    %4744 = vmatpush1.msra.mxu0 %v4566
    %4745 = vmatprep.subr.mxu0 0.0
    %4746 = vmatpush1.msra.mxu0 %v4567
    %4747 = vmatprep.subr.mxu0 0.0
    %4748 = vmatpush1.msra.mxu0 %v4568
    %4749 = vmatprep.subr.mxu0 0.0
    %4750 = vmatpush1.msra.mxu0 %v4569
    %4751 = vmatprep.subr.mxu0 0.0
    %4752 = vmatpush1.msra.mxu0 %v4570
    %4753 = vmatprep.subr.mxu0 0.0
    %4754 = vmatpush1.msra.mxu0 %v4571
    %4755 = vmatprep.subr.mxu0 0.0
    %4756 = vmatpush1.msra.mxu0 %v4572
    %4757 = vmatprep.subr.mxu0 0.0
    %4758 = vmatpush1.msra.mxu0 %v4573
    %4759 = vmatprep.subr.mxu0 0.0
    %4760 = vmatpush1.msra.mxu0 %v4574
    %4761 = vmatprep.subr.mxu0 0.0
    %4762 = vmatpush1.msra.mxu0 %v4575
    %4763 = vmatprep.subr.mxu0 0.0
    %4764 = vmatpush1.msra.mxu0 %v4576
    %4765 = vmatprep.subr.mxu0 0.0
    %4766 = vmatpush1.msra.mxu0 %v4577
    %4767 = vmatprep.subr.mxu0 0.0
    %4768 = vmatpush1.msra.mxu0 %v4578
    %4769 = vmatprep.subr.mxu0 0.0
    %4770 = vmatpush1.msra.mxu0 %v4579
    %4771 = vmatprep.subr.mxu0 0.0
    %4772 = vmatpush1.msra.mxu0 %v4580
    %4773 = vmatprep.subr.mxu0 0.0
    %4774 = vmatpush1.msra.mxu0 %v4581
    %4775 = vmatprep.subr.mxu0 0.0
    %4776 = vmatpush1.msra.mxu0 %v4582
    %4777 = vmatprep.subr.mxu0 0.0
    %4778 = vmatpush1.msra.mxu0 %v4583
    %4779 = vmatprep.subr.mxu0 0.0
    %4780 = vmatpush1.msra.mxu0 %v4584
    %4781 = vmatprep.subr.mxu0 0.0
    %4782 = vmatpush1.msra.mxu0 %v4585
    %4783 = vmatprep.subr.mxu0 0.0
    %4784 = vmatpush1.msra.mxu0 %v4586
    %4785 = vmatprep.subr.mxu0 0.0
    %4786 = vmatpush1.msra.mxu0 %v4587
    %4787 = vmatprep.subr.mxu0 0.0
    %4788 = vmatpush1.msra.mxu0 %v4588
    %4789 = vmatprep.subr.mxu0 0.0
    %4790 = vmatpush1.msra.mxu0 %v4589
    %4791 = vmatprep.subr.mxu0 0.0
    %4792 = vmatpush1.msra.mxu0 %v4590
    %4793 = vmatprep.subr.mxu0 0.0
    %4794 = vmatpush1.msra.mxu0 %v4591
    %4795 = vmatprep.subr.mxu0 0.0
    %4796 = vmatpush1.msra.mxu0 %v4592
    %4797 = vmatprep.subr.mxu0 0.0
    %4798 = vmatpush1.msra.mxu0 %v4593
    %4799 = vmatprep.mubr.f32.mxu0 %v4525
    %4800 = vmatmul.mubr.f32.gmra.mrb[0].mxu0 %v4524
    %v4801 = vpop.f32.mrb[0].mxu0
    %v4802 = vadd.f32 %v4732, %v4801
    %v4803 = vpop.f32.mrb[0].mxu0
    %4804 = vdwg.mxu0
    %4805 = vmatprep.subr.mxu0 0.0
    %4806 = vmatpush1.msra.mxu0 %v4594
    %4807 = vmatprep.subr.mxu0 0.0
    %4808 = vmatpush1.msra.mxu0 %v4595
    %4809 = vmatprep.subr.mxu0 0.0
    %4810 = vmatpush1.msra.mxu0 %v4596
    %4811 = vmatprep.subr.mxu0 0.0
    %4812 = vmatpush1.msra.mxu0 %v4597
    %4813 = vmatprep.subr.mxu0 0.0
    %4814 = vmatpush1.msra.mxu0 %v4598
    %4815 = vmatprep.subr.mxu0 0.0
    %4816 = vmatpush1.msra.mxu0 %v4599
    %4817 = vmatprep.subr.mxu0 0.0
    %4818 = vmatpush1.msra.mxu0 %v4600
    %4819 = vmatprep.subr.mxu0 0.0
    %4820 = vmatpush1.msra.mxu0 %v4601
    %4821 = vmatprep.subr.mxu0 0.0
    %4822 = vmatpush1.msra.mxu0 %v4602
    %4823 = vmatprep.subr.mxu0 0.0
    %4824 = vmatpush1.msra.mxu0 %v4603
    %4825 = vmatprep.subr.mxu0 0.0
    %4826 = vmatpush1.msra.mxu0 %v4604
    %4827 = vmatprep.subr.mxu0 0.0
    %4828 = vmatpush1.msra.mxu0 %v4605
    %4829 = vmatprep.subr.mxu0 0.0
    %4830 = vmatpush1.msra.mxu0 %v4606
    %4831 = vmatprep.subr.mxu0 0.0
    %4832 = vmatpush1.msra.mxu0 %v4607
    %4833 = vmatprep.subr.mxu0 0.0
    %4834 = vmatpush1.msra.mxu0 %v4608
    %4835 = vmatprep.subr.mxu0 0.0
    %4836 = vmatpush1.msra.mxu0 %v4609
    %4837 = vmatprep.subr.mxu0 0.0
    %4838 = vmatpush1.msra.mxu0 %v4610
    %4839 = vmatprep.subr.mxu0 0.0
    %4840 = vmatpush1.msra.mxu0 %v4611
    %4841 = vmatprep.subr.mxu0 0.0
    %4842 = vmatpush1.msra.mxu0 %v4612
    %4843 = vmatprep.subr.mxu0 0.0
    %4844 = vmatpush1.msra.mxu0 %v4613
    %4845 = vmatprep.subr.mxu0 0.0
    %4846 = vmatpush1.msra.mxu0 %v4614
    %4847 = vmatprep.subr.mxu0 0.0
    %4848 = vmatpush1.msra.mxu0 %v4615
    %4849 = vmatprep.subr.mxu0 0.0
    %4850 = vmatpush1.msra.mxu0 %v4616
    %4851 = vmatprep.subr.mxu0 0.0
    %4852 = vmatpush1.msra.mxu0 %v4617
    %4853 = vmatprep.subr.mxu0 0.0
    %4854 = vmatpush1.msra.mxu0 %v4618
    %4855 = vmatprep.subr.mxu0 0.0
    %4856 = vmatpush1.msra.mxu0 %v4619
    %4857 = vmatprep.subr.mxu0 0.0
    %4858 = vmatpush1.msra.mxu0 %v4620
    %4859 = vmatprep.subr.mxu0 0.0
    %4860 = vmatpush1.msra.mxu0 %v4621
    %4861 = vmatprep.subr.mxu0 0.0
    %4862 = vmatpush1.msra.mxu0 %v4622
    %4863 = vmatprep.subr.mxu0 0.0
    %4864 = vmatpush1.msra.mxu0 %v4623
    %4865 = vmatprep.subr.mxu0 0.0
    %4866 = vmatpush1.msra.mxu0 %v4624
    %4867 = vmatprep.subr.mxu0 0.0
    %4868 = vmatpush1.msra.mxu0 %v4625
    %4869 = vmatprep.mubr.f32.mxu0 %v4527
    %4870 = vmatmul.mubr.f32.gmra.mrb[0].mxu0 %v4526
    %v4871 = vpop.f32.mrb[0].mxu0
    %v4872 = vadd.f32 %v4802, %v4871
    %v4873 = vpop.f32.mrb[0].mxu0
    %4874 = vdwg.mxu0
    %4875 = vmatprep.subr.mxu0 0.0
    %4876 = vmatpush1.msra.mxu0 %v4626
    %4877 = vmatprep.subr.mxu0 0.0
    %4878 = vmatpush1.msra.mxu0 %v4627
    %4879 = vmatprep.subr.mxu0 0.0
    %4880 = vmatpush1.msra.mxu0 %v4628
    %4881 = vmatprep.subr.mxu0 0.0
    %4882 = vmatpush1.msra.mxu0 %v4629
    %4883 = vmatprep.subr.mxu0 0.0
    %4884 = vmatpush1.msra.mxu0 %v4630
    %4885 = vmatprep.subr.mxu0 0.0
    %4886 = vmatpush1.msra.mxu0 %v4631
    %4887 = vmatprep.subr.mxu0 0.0
    %4888 = vmatpush1.msra.mxu0 %v4632
    %4889 = vmatprep.subr.mxu0 0.0
    %4890 = vmatpush1.msra.mxu0 %v4633
    %4891 = vmatprep.subr.mxu0 0.0
    %4892 = vmatpush1.msra.mxu0 %v4634
    %4893 = vmatprep.subr.mxu0 0.0
    %4894 = vmatpush1.msra.mxu0 %v4635
    %4895 = vmatprep.subr.mxu0 0.0
    %4896 = vmatpush1.msra.mxu0 %v4636
    %4897 = vmatprep.subr.mxu0 0.0
    %4898 = vmatpush1.msra.mxu0 %v4637
    %4899 = vmatprep.subr.mxu0 0.0
    %4900 = vmatpush1.msra.mxu0 %v4638
    %4901 = vmatprep.subr.mxu0 0.0
    %4902 = vmatpush1.msra.mxu0 %v4639
    %4903 = vmatprep.subr.mxu0 0.0
    %4904 = vmatpush1.msra.mxu0 %v4640
    %4905 = vmatprep.subr.mxu0 0.0
    %4906 = vmatpush1.msra.mxu0 %v4641
    %4907 = vmatprep.subr.mxu0 0.0
    %4908 = vmatpush1.msra.mxu0 %v4642
    %4909 = vmatprep.subr.mxu0 0.0
    %4910 = vmatpush1.msra.mxu0 %v4643
    %4911 = vmatprep.subr.mxu0 0.0
    %4912 = vmatpush1.msra.mxu0 %v4644
    %4913 = vmatprep.subr.mxu0 0.0
    %4914 = vmatpush1.msra.mxu0 %v4645
    %4915 = vmatprep.subr.mxu0 0.0
    %4916 = vmatpush1.msra.mxu0 %v4646
    %4917 = vmatprep.subr.mxu0 0.0
    %4918 = vmatpush1.msra.mxu0 %v4647
    %4919 = vmatprep.subr.mxu0 0.0
    %4920 = vmatpush1.msra.mxu0 %v4648
    %4921 = vmatprep.subr.mxu0 0.0
    %4922 = vmatpush1.msra.mxu0 %v4649
    %4923 = vmatprep.subr.mxu0 0.0
    %4924 = vmatpush1.msra.mxu0 %v4650
    %4925 = vmatprep.subr.mxu0 0.0
    %4926 = vmatpush1.msra.mxu0 %v4651
    %4927 = vmatprep.subr.mxu0 0.0
    %4928 = vmatpush1.msra.mxu0 %v4652
    %4929 = vmatprep.subr.mxu0 0.0
    %4930 = vmatpush1.msra.mxu0 %v4653
    %4931 = vmatprep.subr.mxu0 0.0
    %4932 = vmatpush1.msra.mxu0 %v4654
    %4933 = vmatprep.subr.mxu0 0.0
    %4934 = vmatpush1.msra.mxu0 %v4655
    %4935 = vmatprep.subr.mxu0 0.0
    %4936 = vmatpush1.msra.mxu0 %v4656
    %4937 = vmatprep.subr.mxu0 0.0
    %4938 = vmatpush1.msra.mxu0 %v4657
    %4939 = vmatprep.mubr.f32.mxu0 %v4529
    %4940 = vmatmul.mubr.f32.gmra.mrb[0].mxu0 %v4528
    %v4941 = vpop.f32.mrb[0].mxu0
    %v4942 = vadd.f32 %v4872, %v4941
    %v4943 = vpop.f32.mrb[0].mxu0
    %4944 = vdwg.mxu0
    %4945 = vst [vmem:[#allocation15] sm:$0xff] %v4942
    // Predicated region
    $region58: #{tpu_custom_call.1} parent=1 // pred_check
      _
    $region59: #{tpu_custom_call.1} parent=1 // pred_check_branch
      %4947 = sbr.rel (0) target = $region61
    $region60: #{tpu_custom_call.1} parent=1 // pred_region
      %s4949 = ssub.s32 128, 128
      %4950 = vsyncadd [#allocation5], %s4949
      %s4952 = sshll.u32 [#allocation15], 4
      %s4953 = int_to_ptr.vmem [resolvable:$true] %s4952
      %4955 = dma.vmem_to_hbm [thread:$0]  %s4953, 128, %s7, [#allocation5]
    $region61: #{tpu_custom_call.1} parent=1 // pred_fallthru
      _
    // Predicated region
    $region62: #{tpu_custom_call.1} parent=1 // pred_check
      _
    $region63: #{tpu_custom_call.1} parent=1 // pred_check_branch
      %4957 = sbr.rel (0) target = $region65
    $region64: #{tpu_custom_call.1} parent=1 // pred_region
      %4958 = dma.done [#allocation5], 128
    $region65: #{tpu_custom_call.1} parent=1 // pred_fallthru
      _
    %4959 = vsyncpa [#allocation4], 1
    %4960 = vsyncpa [#allocation7], 1
    %4961 = vsyncpa [#allocation10], 1
    %4962 = vsyncpa [#allocation13], 1
    %4963 = vsyncpa [#allocation5], 1

</llo_original>
